<compile_context>
chip_gen: v7x
topology: tpu7x:2x2x1
jax: 0.10.0
libtpu: 0.0.40
codegen_flags: <defaults>
</compile_context>

<pallas_src>
import numpy as np
import jax
import jax.numpy as jnp
from jax.experimental import pallas as pl
from jax.experimental.pallas import tpu as pltpu

LANE = 128
PATCH = 7
NPIX = PATCH * PATCH

# Extended-layout row counts: garbage columns are kept (never compacted) so every conv
# tap is one static row-shifted slice with row stride 7.
L2 = 33   # conv2 extended rows (covers the valid 5x5 grid at stride-7 indexing)
L3 = 17   # conv3 extended rows (covers the valid 3x3 grid)
TAP_OFF = tuple(di * PATCH + dj for di in range(3) for dj in range(3))

# Packed parameter-row layout (vec array, [NVEC, 128]).
V_W1, V_B1, V_A1 = 0, 1, 2          # conv1 weight/bias/alpha, replicated x9 lane groups
V_B2, V_A2 = 3, 4                   # conv2 bias/alpha, replicated x8
V_B3, V_A3 = 5, 6                   # conv3 bias/alpha, replicated x4
V_BN = 7                            # 7..18: (bn scale, bn shift, prelu alpha) x L4..L7
V_BOUT = 19                         # output bias
V_M8 = 20                           # 20..28: conv2 tap lane masks (9 groups of C1)
V_M16 = 29                          # 29..36: conv3 tap lane masks (8 groups of C2)
V_MP = 37                           # 37..40: pooled-slab placement masks (4 groups of C3)
NVEC = 48


# ----------------------------------------------------------------------------
# Kernel
# ----------------------------------------------------------------------------
def _make_kernel(bt):
    def kernel(x_img_ref, x_skip_ref, w_ref, vec_ref, o_ref):
        f32 = jnp.float32

        def vrow(i):                        # one packed parameter row -> [1, 128]
            return vec_ref[i:i + 1, :]

        def prelu(v, alpha):
            return jnp.where(v >= 0.0, v, alpha * v)

        # --- Conv1 (1x1, 1->C1) + PReLU; MaxPool(k=1,s=1) is identity.
        #     Channels are replicated across 9 lane groups (w1/b1/alpha1 rows are tiled),
        #     so conv2's im2col below needs no lane shuffles.
        px = x_img_ref[...]                                          # [49*bt, 1]
        a1 = prelu(px * vrow(V_W1) + vrow(V_B1), vrow(V_A1))         # [49*bt, 128]

        # --- Conv2 (3x3, C1->C2) + PReLU: lane-packed im2col from 9 static row-shifted
        #     slices masked into disjoint lane groups -> ONE matmul.
        packed2 = a1[0:L2 * bt, :] * vrow(V_M8)
        for t in range(1, 9):
            off = TAP_OFF[t]
            packed2 = packed2 + a1[off * bt:(off + L2) * bt, :] * vrow(V_M8 + t)
        a2 = prelu(jnp.dot(packed2, w_ref[0, :, :], preferred_element_type=f32)
                   + vrow(V_B2), vrow(V_A2))                         # [33*bt,128] (ch x8)

        # --- Conv3 (3x3, C2->C3) + PReLU: taps 0..7 lane-packed (one matmul),
        #     tap 8 via a second small matmul.
        packed3 = a2[0:L3 * bt, :] * vrow(V_M16)
        for t in range(1, 8):
            off = TAP_OFF[t]
            packed3 = packed3 + a2[off * bt:(off + L3) * bt, :] * vrow(V_M16 + t)
        off8 = TAP_OFF[8]
        acc3 = (jnp.dot(packed3, w_ref[1, :, :], preferred_element_type=f32)
                + jnp.dot(a2[off8 * bt:(off8 + L3) * bt, :], w_ref[2, :, :],
                          preferred_element_type=f32))
        a3 = prelu(acc3 + vrow(V_B3), vrow(V_A3))                    # [17*bt,128] (ch x4)

        # --- MaxPool 2x2/s1 (static Bt-row slices) fused with Flatten + skip concat:
        #     the 4 pooled slabs are masked into disjoint lane groups; skip features
        #     arrive pre-placed at lanes [4*C3, 4*C3+skip) in x_skip.
        act4 = x_skip_ref[...]                                       # [bt, 128]
        for s, (ip, jp) in enumerate(((0, 0), (0, 1), (1, 0), (1, 1))):
            m = None
            for di in range(2):
                for dj in range(2):
                    e = (ip + di) * PATCH + (jp + dj)
                    sl = a3[e * bt:(e + 1) * bt, :]
                    m = sl if m is None else jnp.maximum(m, sl)
            act4 = act4 + m * vrow(V_MP + s)

        # --- DenseL4 (no bias) -> folded BatchNorm -> PReLU, then L5..L7, then output.
        y = jnp.dot(act4, w_ref[3, :, :], preferred_element_type=f32)
        y = prelu(y * vrow(V_BN) + vrow(V_BN + 1), vrow(V_BN + 2))
        for li in range(1, 4):                                       # L5, L6, L7
            y = jnp.dot(y, w_ref[3 + li, :, :], preferred_element_type=f32)
            y = prelu(y * vrow(V_BN + 3 * li) + vrow(V_BN + 3 * li + 1),
                      vrow(V_BN + 3 * li + 2))
        # Output: lane-dense [bt, 128] slab, lanes 0..1 meaningful.
        o_ref[...] = jnp.dot(y, w_ref[7, :, :], preferred_element_type=f32) + vrow(V_BOUT)

    return kernel


# ----------------------------------------------------------------------------
# Host-side parameter packing (batch-independent)
# ----------------------------------------------------------------------------
def pack_params(p, sizes, skip):
    C1, C2, C3, H4, H5, H6, H7 = sizes
    assert 9 * C1 <= LANE, "conv2 im2col (9*C1) must fit in 128 lanes"
    assert 8 * C2 <= LANE, "conv3 im2col groups (8*C2) must fit in 128 lanes"
    assert 4 * C3 + skip <= LANE, "DenseL4 input (4*C3+skip) must fit in 128 lanes"
    assert max(H4, H5, H6, H7) <= LANE

    w = np.zeros((8, LANE, LANE), np.float32)
    # W2: rows t*C1+c1 -> cols u*C2+c2 (output channels replicated x8 so conv3's
    # im2col needs no lane movement);  t = di*3 + dj.
    for di in range(3):
        for dj in range(3):
            t = di * 3 + dj
            blk = p['w2'][:, :, di, dj].T                # [C1, C2]
            for u in range(8):
                w[0, t * C1:(t + 1) * C1, u * C2:(u + 1) * C2] = blk
    # W3a (taps 0..7): rows t*C2+c2 -> cols s*C3+c3 (output replicated x4 for pooling/L4).
    for t in range(8):
        di, dj = t // 3, t % 3
        blk = p['w3'][:, :, di, dj].T                    # [C2, C3]
        for s in range(4):
            w[1, t * C2:(t + 1) * C2, s * C3:(s + 1) * C3] = blk
    # W3b (tap 8 = (2,2)): rows c2 -> cols s*C3+c3.
    blk = p['w3'][:, :, 2, 2].T
    for s in range(4):
        w[2, :C2, s * C3:(s + 1) * C3] = blk
    # W4 (fused Flatten+concat+DenseL4): torch flatten of [B,C3,2,2] -> col c3*4 + s.
    W4t = p['W4'].T                                      # [4*C3 + skip, H4]
    for s in range(4):
        w[3, s * C3:(s + 1) * C3, :H4] = W4t[np.arange(C3) * 4 + s, :]
    w[3, 4 * C3:4 * C3 + skip, :H4] = W4t[4 * C3:, :]
    w[4, :H4, :H5] = p['W5'].T
    w[5, :H5, :H6] = p['W6'].T
    w[6, :H6, :H7] = p['W7'].T
    w[7, :H7, :2] = p['Wout'].T

    vec = np.zeros((NVEC, LANE), np.float32)

    def rep(vals, groups):
        r = np.zeros((LANE,), np.float32)
        v = np.asarray(vals, np.float32)
        n = v.shape[0]
        for g in range(groups):
            r[g * n:(g + 1) * n] = v
        return r

    def row(vals):
        r = np.zeros((LANE,), np.float32)
        v = np.atleast_1d(np.asarray(vals, np.float32))
        r[:v.shape[0]] = v
        return r

    def fold_bn(bn, bias=None, eps=1e-5):
        scale = bn['gamma'] / np.sqrt(bn['var'] + eps)
        shift = bn['beta'] - bn['mean'] * scale
        if bias is not None:
            shift = shift + bias * scale
        return scale, shift

    vec[V_W1] = rep(p['w1'], 9)
    vec[V_B1] = rep(p['b1'], 9)
    vec[V_A1] = rep(p['alpha1'], 9)
    vec[V_B2] = rep(p['b2'], 8)
    vec[V_A2] = rep(p['alpha2'], 8)
    vec[V_B3] = rep(p['b3'], 4)
    vec[V_A3] = rep(p['alpha3'], 4)

    s4, sh4 = fold_bn(p['bn4'])
    s5, sh5 = fold_bn(p['bn5'], p['b5'])
    s6, sh6 = fold_bn(p['bn6'], p['b6'])
    s7, sh7 = fold_bn(p['bn7'], p['b7'])
    for li, (sc, sh, al, h) in enumerate(((s4, sh4, p['alpha4'], H4),
                                          (s5, sh5, p['alpha5'], H5),
                                          (s6, sh6, p['alpha6'], H6),
                                          (s7, sh7, p['alpha7'], H7))):
        vec[V_BN + 3 * li] = row(sc)
        vec[V_BN + 3 * li + 1] = row(sh)
        vec[V_BN + 3 * li + 2] = row(np.full((h,), al, np.float32))
    vec[V_BOUT] = row(p['bout'])

    for t in range(9):
        vec[V_M8 + t, t * C1:(t + 1) * C1] = 1.0
    for t in range(8):
        vec[V_M16 + t, t * C2:(t + 1) * C2] = 1.0
    for s in range(4):
        vec[V_MP + s, s * C3:(s + 1) * C3] = 1.0

    return dict(w=jnp.asarray(w), vec=jnp.asarray(vec), sizes=sizes, skip=skip)


# ----------------------------------------------------------------------------
# Wrapper
# ----------------------------------------------------------------------------
def cnn_v7_forward(x, packed, block_batch=8):
    """x: [B, 49 + LinearInputSkipSize] float32. Returns [B, 2] float32."""
    sizes, skip = packed['sizes'], packed['skip']
    C3 = sizes[2]
    B = x.shape[0]
    bt = block_batch
    assert bt % 8 == 0
    bpad = ((B + bt - 1) // bt) * bt
    nt = bpad // bt

    x = x.astype(jnp.float32)
    xpad = jnp.zeros((bpad, x.shape[1]), jnp.float32).at[:B].set(x)

    # torch image rearrangement: img2d[b, r, c] = x[b, c*7 + r]; kernel wants
    # spatial-major rows (s = r*7 + c) with batch fastest inside each batch tile.
    img = jnp.transpose(xpad[:, :NPIX].reshape(bpad, PATCH, PATCH),
                        (0, 2, 1)).reshape(bpad, NPIX)
    x_img = jnp.transpose(img.reshape(nt, bt, NPIX), (0, 2, 1)).reshape(nt * NPIX * bt, 1)

    # skip features pre-placed at lanes [4*C3, 4*C3+skip) of a lane-dense slab.
    x_skip = jnp.zeros((bpad, LANE), jnp.float32)
    x_skip = x_skip.at[:, 4 * C3:4 * C3 + skip].set(xpad[:, NPIX:])

    w, vec = packed['w'], packed['vec']

    def mm(m):
        return 2 * m * LANE * LANE
    flops = nt * (mm(L2 * bt) + 2 * mm(L3 * bt) + 5 * mm(bt))
    bytes_accessed = 4 * (int(w.size) + int(vec.size) + int(x_img.size)
                          + int(x_skip.size) + bpad * LANE)

    grid_spec = pltpu.PrefetchScalarGridSpec(
        num_scalar_prefetch=0,
        grid=(nt,),
        in_specs=[
            pl.BlockSpec((NPIX * bt, 1), lambda i: (i, 0)),       # per-tile image
            pl.BlockSpec((bt, LANE), lambda i: (i, 0)),           # per-tile skip features
            pl.BlockSpec((8, LANE, LANE), lambda i: (0, 0, 0)),   # resident weight tiles
            pl.BlockSpec((NVEC, LANE), lambda i: (0, 0)),         # resident rows/masks
        ],
        out_specs=pl.BlockSpec((bt, LANE), lambda i: (i, 0)),
    )

    out = pl.pallas_call(
        _make_kernel(bt),
        out_shape=jax.ShapeDtypeStruct((bpad, LANE), jnp.float32),
        grid_spec=grid_spec,
        compiler_params=pltpu.CompilerParams(dimension_semantics=("parallel",)),
        cost_estimate=pl.CostEstimate(flops=int(flops), transcendentals=0,
                                      bytes_accessed=int(bytes_accessed)),
    )(x_img, x_skip, w, vec)
    return out[:B, :2]


# ----------------------------------------------------------------------------
# Deterministic torch-shaped parameter construction + numpy reference
# ----------------------------------------------------------------------------
def init_params(key, sizes, skip):
    C1, C2, C3, H4, H5, H6, H7 = sizes
    keys = iter(jax.random.split(key, 40))

    def u(shape, fan_in):
        b = 1.0 / np.sqrt(fan_in)
        return np.asarray(jax.random.uniform(next(keys), shape, jnp.float32, -b, b))

    def alpha_vec(n):
        return np.asarray(jax.random.uniform(next(keys), (n,), jnp.float32, 0.1, 0.4))

    def bn(n):
        return dict(
            gamma=np.asarray(jax.random.uniform(next(keys), (n,), jnp.float32, 0.5, 1.5)),
            beta=np.asarray(jax.random.uniform(next(keys), (n,), jnp.float32, -0.2, 0.2)),
            mean=np.asarray(jax.random.uniform(next(keys), (n,), jnp.float32, -0.2, 0.2)),
            var=np.asarray(jax.random.uniform(next(keys), (n,), jnp.float32, 0.5, 1.5)),
        )

    lin_in = 4 * C3 + skip
    p = {}
    p['w1'] = u((C1,), 1); p['b1'] = u((C1,), 1); p['alpha1'] = alpha_vec(C1)
    p['w2'] = u((C2, C1, 3, 3), C1 * 9); p['b2'] = u((C2,), C1 * 9); p['alpha2'] = alpha_vec(C2)
    p['w3'] = u((C3, C2, 3, 3), C2 * 9); p['b3'] = u((C3,), C2 * 9); p['alpha3'] = alpha_vec(C3)
    p['W4'] = u((H4, lin_in), lin_in); p['bn4'] = bn(H4); p['alpha4'] = np.float32(0.25)
    p['W5'] = u((H5, H4), H4); p['b5'] = u((H5,), H4); p['bn5'] = bn(H5); p['alpha5'] = np.float32(0.22)
    p['W6'] = u((H6, H5), H5); p['b6'] = u((H6,), H5); p['bn6'] = bn(H6); p['alpha6'] = np.float32(0.28)
    p['W7'] = u((H7, H6), H6); p['b7'] = u((H7,), H6); p['bn7'] = bn(H7); p['alpha7'] = np.float32(0.25)
    p['Wout'] = u((2, H7), H7); p['bout'] = u((2,), H7)
    return p


def reference_forward_np(x, p, sizes):
    x = np.asarray(x, np.float32)
    C1, C2, C3, H4, H5, H6, H7 = sizes
    batch = x.shape[0]

    def prelu(v, a):
        return np.where(v >= 0, v, a * v)

    def conv2d(v, w, b):
        bs, cin, h, wd_ = v.shape
        cout, _, k, _ = w.shape
        ho, wo = h - k + 1, wd_ - k + 1
        out = np.zeros((bs, cout, ho, wo), np.float32)
        for di in range(k):
            for dj in range(k):
                out += np.einsum('bchw,oc->bohw', v[:, :, di:di + ho, dj:dj + wo],
                                 w[:, :, di, dj])
        return out + b.reshape(1, cout, 1, 1)

    def maxpool(v, k):
        bs, c, h, wd_ = v.shape
        ho, wo = h - k + 1, wd_ - k + 1
        out = np.full((bs, c, ho, wo), -np.inf, np.float32)
        for di in range(k):
            for dj in range(k):
                out = np.maximum(out, v[:, :, di:di + ho, dj:dj + wo])
        return out

    def bnorm(v, b):
        return (v - b['mean']) / np.sqrt(b['var'] + 1e-5) * b['gamma'] + b['beta']

    # torch: img2Dinput[b, 0, r, c] = x[b, c*7 + r]
    img = np.transpose(x[:, :NPIX].reshape(batch, PATCH, PATCH), (0, 2, 1))[:, None]
    ctx = x[:, NPIX:]

    a = img * p['w1'].reshape(1, C1, 1, 1) + p['b1'].reshape(1, C1, 1, 1)
    a = prelu(a, p['alpha1'].reshape(1, C1, 1, 1))                    # pool k=1 identity
    a = prelu(conv2d(a, p['w2'], p['b2']), p['alpha2'].reshape(1, C2, 1, 1))
    a = prelu(conv2d(a, p['w3'], p['b3']), p['alpha3'].reshape(1, C3, 1, 1))
    a = maxpool(a, 2)

    v = np.concatenate([a.reshape(batch, -1), ctx], axis=1)
    y = v @ p['W4'].T
    y = prelu(bnorm(y, p['bn4']), p['alpha4'])
    y = y @ p['W5'].T + p['b5']; y = prelu(bnorm(y, p['bn5']), p['alpha5'])
    y = y @ p['W6'].T + p['b6']; y = prelu(bnorm(y, p['bn6']), p['alpha6'])
    y = y @ p['W7'].T + p['b7']; y = prelu(bnorm(y, p['bn7']), p['alpha7'])
    return y @ p['Wout'].T + p['bout']


# ----------------------------------------------------------------------------
if __name__ == "__main__":
    # Module config: patchSize=7, kernelSizes=[1,3,3], poolkernelSizes=[1,1,2],
    # outChannelsSizes = 3 conv channel counts + 4 dense widths, LinearInputSkipSize=7.
    sizes = (8, 16, 16, 32, 32, 32, 32)
    skip = 7
    batch = 12          # exercises batch padding (-> 16) and a 2-step grid with bt=8

    key = jax.random.PRNGKey(0)
    kparams, kx = jax.random.split(key)
    params = init_params(kparams, sizes, skip)
    x = jax.random.uniform(kx, (batch, NPIX + skip), jnp.float32, -1.0, 1.0)

    packed = pack_params(params, sizes, skip)
    out = cnn_v7_forward(x, packed, block_batch=8)
    out = jax.block_until_ready(out)

    ref = reference_forward_np(np.asarray(x), params, sizes)
    np.testing.assert_allclose(np.asarray(out), ref, rtol=5e-3, atol=5e-3)

    print("KERNEL_OK")
</pallas_src>

<mosaic_0001>
module attributes {stable_mosaic.version = 11 : i64} {
  func.func @kernel(%arg0: i32, %arg1: memref<392x1xf32, #tpu.memory_space<vmem>>, %arg2: memref<8x128xf32, #tpu.memory_space<vmem>>, %arg3: memref<8x128x128xf32, #tpu.memory_space<vmem>>, %arg4: memref<48x128xf32, #tpu.memory_space<vmem>>, %arg5: memref<8x128xf32, #tpu.memory_space<vmem>>) attributes {dimension_semantics = [#tpu.dimension_semantics<parallel>], iteration_bounds = array<i64: 2>, scalar_prefetch = 0 : i64, scratch_operands = 0 : i64, tpu.core_type = #tpu.core_type<tc>, window_params = [{transform_indices = @transform_0, window_bounds = array<i64: 392, 1>}, {transform_indices = @transform_1, window_bounds = array<i64: 8, 128>}, {pipeline_mode = #tpu.pipeline_mode<synchronous>, transform_indices = @transform_2, window_bounds = array<i64: 8, 128, 128>}, {pipeline_mode = #tpu.pipeline_mode<synchronous>, transform_indices = @transform_3, window_bounds = array<i64: 48, 128>}, {transform_indices = @transform_4, window_bounds = array<i64: 8, 128>}]} {
    %c0 = arith.constant 0 : index
    %c0_0 = arith.constant 0 : index
    %0 = vector.load %arg1[%c0, %c0_0] : memref<392x1xf32, #tpu.memory_space<vmem>>, vector<392x1xf32>
    %c0_1 = arith.constant 0 : index
    %c0_2 = arith.constant 0 : index
    %1 = vector.load %arg4[%c0_1, %c0_2] : memref<48x128xf32, #tpu.memory_space<vmem>>, vector<1x128xf32>
    %2 = vector.broadcast %0 : vector<392x1xf32> to vector<392x128xf32>
    %3 = vector.broadcast %1 : vector<1x128xf32> to vector<392x128xf32>
    %4 = arith.mulf %2, %3 : vector<392x128xf32>
    %c1 = arith.constant 1 : index
    %c0_3 = arith.constant 0 : index
    %5 = vector.load %arg4[%c1, %c0_3] : memref<48x128xf32, #tpu.memory_space<vmem>>, vector<1x128xf32>
    %6 = vector.broadcast %5 : vector<1x128xf32> to vector<392x128xf32>
    %7 = arith.addf %4, %6 : vector<392x128xf32>
    %c2 = arith.constant 2 : index
    %c0_4 = arith.constant 0 : index
    %8 = vector.load %arg4[%c2, %c0_4] : memref<48x128xf32, #tpu.memory_space<vmem>>, vector<1x128xf32>
    %cst = arith.constant 0.000000e+00 : f32
    %9 = vector.broadcast %cst : f32 to vector<392x128xf32>
    %10 = arith.cmpf oge, %7, %9 : vector<392x128xf32>
    %11 = vector.broadcast %8 : vector<1x128xf32> to vector<392x128xf32>
    %12 = arith.mulf %11, %7 : vector<392x128xf32>
    %13 = arith.select %10, %7, %12 : vector<392x128xi1>, vector<392x128xf32>
    %14 = vector.extract_strided_slice %13 {offsets = [0, 0], sizes = [264, 128], strides = [1, 1]} : vector<392x128xf32> to vector<264x128xf32>
    %c20 = arith.constant 20 : index
    %c0_5 = arith.constant 0 : index
    %15 = vector.load %arg4[%c20, %c0_5] : memref<48x128xf32, #tpu.memory_space<vmem>>, vector<1x128xf32>
    %16 = vector.broadcast %15 : vector<1x128xf32> to vector<264x128xf32>
    %17 = arith.mulf %14, %16 : vector<264x128xf32>
    %18 = vector.extract_strided_slice %13 {offsets = [8, 0], sizes = [264, 128], strides = [1, 1]} : vector<392x128xf32> to vector<264x128xf32>
    %c21 = arith.constant 21 : index
    %c0_6 = arith.constant 0 : index
    %19 = vector.load %arg4[%c21, %c0_6] : memref<48x128xf32, #tpu.memory_space<vmem>>, vector<1x128xf32>
    %20 = vector.broadcast %19 : vector<1x128xf32> to vector<264x128xf32>
    %21 = arith.mulf %18, %20 : vector<264x128xf32>
    %22 = arith.addf %17, %21 : vector<264x128xf32>
    %23 = vector.extract_strided_slice %13 {offsets = [16, 0], sizes = [264, 128], strides = [1, 1]} : vector<392x128xf32> to vector<264x128xf32>
    %c22 = arith.constant 22 : index
    %c0_7 = arith.constant 0 : index
    %24 = vector.load %arg4[%c22, %c0_7] : memref<48x128xf32, #tpu.memory_space<vmem>>, vector<1x128xf32>
    %25 = vector.broadcast %24 : vector<1x128xf32> to vector<264x128xf32>
    %26 = arith.mulf %23, %25 : vector<264x128xf32>
    %27 = arith.addf %22, %26 : vector<264x128xf32>
    %28 = vector.extract_strided_slice %13 {offsets = [56, 0], sizes = [264, 128], strides = [1, 1]} : vector<392x128xf32> to vector<264x128xf32>
    %c23 = arith.constant 23 : index
    %c0_8 = arith.constant 0 : index
    %29 = vector.load %arg4[%c23, %c0_8] : memref<48x128xf32, #tpu.memory_space<vmem>>, vector<1x128xf32>
    %30 = vector.broadcast %29 : vector<1x128xf32> to vector<264x128xf32>
    %31 = arith.mulf %28, %30 : vector<264x128xf32>
    %32 = arith.addf %27, %31 : vector<264x128xf32>
    %33 = vector.extract_strided_slice %13 {offsets = [64, 0], sizes = [264, 128], strides = [1, 1]} : vector<392x128xf32> to vector<264x128xf32>
    %c24 = arith.constant 24 : index
    %c0_9 = arith.constant 0 : index
    %34 = vector.load %arg4[%c24, %c0_9] : memref<48x128xf32, #tpu.memory_space<vmem>>, vector<1x128xf32>
    %35 = vector.broadcast %34 : vector<1x128xf32> to vector<264x128xf32>
    %36 = arith.mulf %33, %35 : vector<264x128xf32>
    %37 = arith.addf %32, %36 : vector<264x128xf32>
    %38 = vector.extract_strided_slice %13 {offsets = [72, 0], sizes = [264, 128], strides = [1, 1]} : vector<392x128xf32> to vector<264x128xf32>
    %c25 = arith.constant 25 : index
    %c0_10 = arith.constant 0 : index
    %39 = vector.load %arg4[%c25, %c0_10] : memref<48x128xf32, #tpu.memory_space<vmem>>, vector<1x128xf32>
    %40 = vector.broadcast %39 : vector<1x128xf32> to vector<264x128xf32>
    %41 = arith.mulf %38, %40 : vector<264x128xf32>
    %42 = arith.addf %37, %41 : vector<264x128xf32>
    %43 = vector.extract_strided_slice %13 {offsets = [112, 0], sizes = [264, 128], strides = [1, 1]} : vector<392x128xf32> to vector<264x128xf32>
    %c26 = arith.constant 26 : index
    %c0_11 = arith.constant 0 : index
    %44 = vector.load %arg4[%c26, %c0_11] : memref<48x128xf32, #tpu.memory_space<vmem>>, vector<1x128xf32>
    %45 = vector.broadcast %44 : vector<1x128xf32> to vector<264x128xf32>
    %46 = arith.mulf %43, %45 : vector<264x128xf32>
    %47 = arith.addf %42, %46 : vector<264x128xf32>
    %48 = vector.extract_strided_slice %13 {offsets = [120, 0], sizes = [264, 128], strides = [1, 1]} : vector<392x128xf32> to vector<264x128xf32>
    %c27 = arith.constant 27 : index
    %c0_12 = arith.constant 0 : index
    %49 = vector.load %arg4[%c27, %c0_12] : memref<48x128xf32, #tpu.memory_space<vmem>>, vector<1x128xf32>
    %50 = vector.broadcast %49 : vector<1x128xf32> to vector<264x128xf32>
    %51 = arith.mulf %48, %50 : vector<264x128xf32>
    %52 = arith.addf %47, %51 : vector<264x128xf32>
    %53 = vector.extract_strided_slice %13 {offsets = [128, 0], sizes = [264, 128], strides = [1, 1]} : vector<392x128xf32> to vector<264x128xf32>
    %c28 = arith.constant 28 : index
    %c0_13 = arith.constant 0 : index
    %54 = vector.load %arg4[%c28, %c0_13] : memref<48x128xf32, #tpu.memory_space<vmem>>, vector<1x128xf32>
    %55 = vector.broadcast %54 : vector<1x128xf32> to vector<264x128xf32>
    %56 = arith.mulf %53, %55 : vector<264x128xf32>
    %57 = arith.addf %52, %56 : vector<264x128xf32>
    %c0_14 = arith.constant 0 : index
    %c0_15 = arith.constant 0 : index
    %c0_16 = arith.constant 0 : index
    %58 = vector.load %arg3[%c0_14, %c0_15, %c0_16] : memref<8x128x128xf32, #tpu.memory_space<vmem>>, vector<1x128x128xf32>
    %59 = vector.shape_cast %58 : vector<1x128x128xf32> to vector<128x128xf32>
    %cst_17 = arith.constant dense<0.000000e+00> : vector<264x128xf32>
    %60 = tpu.matmul %57, %59, %cst_17 {dimension_numbers = #tpu.dot_dimension_numbers<[1], [0], [0], [1], [0, 0, 1, 1], [], []>} : vector<264x128xf32>, vector<128x128xf32>, vector<264x128xf32> -> vector<264x128xf32>
    %c3 = arith.constant 3 : index
    %c0_18 = arith.constant 0 : index
    %61 = vector.load %arg4[%c3, %c0_18] : memref<48x128xf32, #tpu.memory_space<vmem>>, vector<1x128xf32>
    %62 = vector.broadcast %61 : vector<1x128xf32> to vector<264x128xf32>
    %63 = arith.addf %60, %62 : vector<264x128xf32>
    %c4 = arith.constant 4 : index
    %c0_19 = arith.constant 0 : index
    %64 = vector.load %arg4[%c4, %c0_19] : memref<48x128xf32, #tpu.memory_space<vmem>>, vector<1x128xf32>
    %cst_20 = arith.constant 0.000000e+00 : f32
    %65 = vector.broadcast %cst_20 : f32 to vector<264x128xf32>
    %66 = arith.cmpf oge, %63, %65 : vector<264x128xf32>
    %67 = vector.broadcast %64 : vector<1x128xf32> to vector<264x128xf32>
    %68 = arith.mulf %67, %63 : vector<264x128xf32>
    %69 = arith.select %66, %63, %68 : vector<264x128xi1>, vector<264x128xf32>
    %70 = vector.extract_strided_slice %69 {offsets = [0, 0], sizes = [136, 128], strides = [1, 1]} : vector<264x128xf32> to vector<136x128xf32>
    %c29 = arith.constant 29 : index
    %c0_21 = arith.constant 0 : index
    %71 = vector.load %arg4[%c29, %c0_21] : memref<48x128xf32, #tpu.memory_space<vmem>>, vector<1x128xf32>
    %72 = vector.broadcast %71 : vector<1x128xf32> to vector<136x128xf32>
    %73 = arith.mulf %70, %72 : vector<136x128xf32>
    %74 = vector.extract_strided_slice %69 {offsets = [8, 0], sizes = [136, 128], strides = [1, 1]} : vector<264x128xf32> to vector<136x128xf32>
    %c30 = arith.constant 30 : index
    %c0_22 = arith.constant 0 : index
    %75 = vector.load %arg4[%c30, %c0_22] : memref<48x128xf32, #tpu.memory_space<vmem>>, vector<1x128xf32>
    %76 = vector.broadcast %75 : vector<1x128xf32> to vector<136x128xf32>
    %77 = arith.mulf %74, %76 : vector<136x128xf32>
    %78 = arith.addf %73, %77 : vector<136x128xf32>
    %79 = vector.extract_strided_slice %69 {offsets = [16, 0], sizes = [136, 128], strides = [1, 1]} : vector<264x128xf32> to vector<136x128xf32>
    %c31 = arith.constant 31 : index
    %c0_23 = arith.constant 0 : index
    %80 = vector.load %arg4[%c31, %c0_23] : memref<48x128xf32, #tpu.memory_space<vmem>>, vector<1x128xf32>
    %81 = vector.broadcast %80 : vector<1x128xf32> to vector<136x128xf32>
    %82 = arith.mulf %79, %81 : vector<136x128xf32>
    %83 = arith.addf %78, %82 : vector<136x128xf32>
    %84 = vector.extract_strided_slice %69 {offsets = [56, 0], sizes = [136, 128], strides = [1, 1]} : vector<264x128xf32> to vector<136x128xf32>
    %c32 = arith.constant 32 : index
    %c0_24 = arith.constant 0 : index
    %85 = vector.load %arg4[%c32, %c0_24] : memref<48x128xf32, #tpu.memory_space<vmem>>, vector<1x128xf32>
    %86 = vector.broadcast %85 : vector<1x128xf32> to vector<136x128xf32>
    %87 = arith.mulf %84, %86 : vector<136x128xf32>
    %88 = arith.addf %83, %87 : vector<136x128xf32>
    %89 = vector.extract_strided_slice %69 {offsets = [64, 0], sizes = [136, 128], strides = [1, 1]} : vector<264x128xf32> to vector<136x128xf32>
    %c33 = arith.constant 33 : index
    %c0_25 = arith.constant 0 : index
    %90 = vector.load %arg4[%c33, %c0_25] : memref<48x128xf32, #tpu.memory_space<vmem>>, vector<1x128xf32>
    %91 = vector.broadcast %90 : vector<1x128xf32> to vector<136x128xf32>
    %92 = arith.mulf %89, %91 : vector<136x128xf32>
    %93 = arith.addf %88, %92 : vector<136x128xf32>
    %94 = vector.extract_strided_slice %69 {offsets = [72, 0], sizes = [136, 128], strides = [1, 1]} : vector<264x128xf32> to vector<136x128xf32>
    %c34 = arith.constant 34 : index
    %c0_26 = arith.constant 0 : index
    %95 = vector.load %arg4[%c34, %c0_26] : memref<48x128xf32, #tpu.memory_space<vmem>>, vector<1x128xf32>
    %96 = vector.broadcast %95 : vector<1x128xf32> to vector<136x128xf32>
    %97 = arith.mulf %94, %96 : vector<136x128xf32>
    %98 = arith.addf %93, %97 : vector<136x128xf32>
    %99 = vector.extract_strided_slice %69 {offsets = [112, 0], sizes = [136, 128], strides = [1, 1]} : vector<264x128xf32> to vector<136x128xf32>
    %c35 = arith.constant 35 : index
    %c0_27 = arith.constant 0 : index
    %100 = vector.load %arg4[%c35, %c0_27] : memref<48x128xf32, #tpu.memory_space<vmem>>, vector<1x128xf32>
    %101 = vector.broadcast %100 : vector<1x128xf32> to vector<136x128xf32>
    %102 = arith.mulf %99, %101 : vector<136x128xf32>
    %103 = arith.addf %98, %102 : vector<136x128xf32>
    %104 = vector.extract_strided_slice %69 {offsets = [120, 0], sizes = [136, 128], strides = [1, 1]} : vector<264x128xf32> to vector<136x128xf32>
    %c36 = arith.constant 36 : index
    %c0_28 = arith.constant 0 : index
    %105 = vector.load %arg4[%c36, %c0_28] : memref<48x128xf32, #tpu.memory_space<vmem>>, vector<1x128xf32>
    %106 = vector.broadcast %105 : vector<1x128xf32> to vector<136x128xf32>
    %107 = arith.mulf %104, %106 : vector<136x128xf32>
    %108 = arith.addf %103, %107 : vector<136x128xf32>
    %c1_29 = arith.constant 1 : index
    %c0_30 = arith.constant 0 : index
    %c0_31 = arith.constant 0 : index
    %109 = vector.load %arg3[%c1_29, %c0_30, %c0_31] : memref<8x128x128xf32, #tpu.memory_space<vmem>>, vector<1x128x128xf32>
    %110 = vector.shape_cast %109 : vector<1x128x128xf32> to vector<128x128xf32>
    %cst_32 = arith.constant dense<0.000000e+00> : vector<136x128xf32>
    %111 = tpu.matmul %108, %110, %cst_32 {dimension_numbers = #tpu.dot_dimension_numbers<[1], [0], [0], [1], [0, 0, 1, 1], [], []>} : vector<136x128xf32>, vector<128x128xf32>, vector<136x128xf32> -> vector<136x128xf32>
    %112 = vector.extract_strided_slice %69 {offsets = [128, 0], sizes = [136, 128], strides = [1, 1]} : vector<264x128xf32> to vector<136x128xf32>
    %c2_33 = arith.constant 2 : index
    %c0_34 = arith.constant 0 : index
    %c0_35 = arith.constant 0 : index
    %113 = vector.load %arg3[%c2_33, %c0_34, %c0_35] : memref<8x128x128xf32, #tpu.memory_space<vmem>>, vector<1x128x128xf32>
    %114 = vector.shape_cast %113 : vector<1x128x128xf32> to vector<128x128xf32>
    %cst_36 = arith.constant dense<0.000000e+00> : vector<136x128xf32>
    %115 = tpu.matmul %112, %114, %cst_36 {dimension_numbers = #tpu.dot_dimension_numbers<[1], [0], [0], [1], [0, 0, 1, 1], [], []>} : vector<136x128xf32>, vector<128x128xf32>, vector<136x128xf32> -> vector<136x128xf32>
    %116 = arith.addf %111, %115 : vector<136x128xf32>
    %c5 = arith.constant 5 : index
    %c0_37 = arith.constant 0 : index
    %117 = vector.load %arg4[%c5, %c0_37] : memref<48x128xf32, #tpu.memory_space<vmem>>, vector<1x128xf32>
    %118 = vector.broadcast %117 : vector<1x128xf32> to vector<136x128xf32>
    %119 = arith.addf %116, %118 : vector<136x128xf32>
    %c6 = arith.constant 6 : index
    %c0_38 = arith.constant 0 : index
    %120 = vector.load %arg4[%c6, %c0_38] : memref<48x128xf32, #tpu.memory_space<vmem>>, vector<1x128xf32>
    %cst_39 = arith.constant 0.000000e+00 : f32
    %121 = vector.broadcast %cst_39 : f32 to vector<136x128xf32>
    %122 = arith.cmpf oge, %119, %121 : vector<136x128xf32>
    %123 = vector.broadcast %120 : vector<1x128xf32> to vector<136x128xf32>
    %124 = arith.mulf %123, %119 : vector<136x128xf32>
    %125 = arith.select %122, %119, %124 : vector<136x128xi1>, vector<136x128xf32>
    %c0_40 = arith.constant 0 : index
    %c0_41 = arith.constant 0 : index
    %126 = vector.load %arg2[%c0_40, %c0_41] : memref<8x128xf32, #tpu.memory_space<vmem>>, vector<8x128xf32>
    %127 = vector.extract_strided_slice %125 {offsets = [0, 0], sizes = [8, 128], strides = [1, 1]} : vector<136x128xf32> to vector<8x128xf32>
    %128 = vector.extract_strided_slice %125 {offsets = [8, 0], sizes = [8, 128], strides = [1, 1]} : vector<136x128xf32> to vector<8x128xf32>
    %129 = arith.maximumf %127, %128 : vector<8x128xf32>
    %130 = vector.extract_strided_slice %125 {offsets = [56, 0], sizes = [8, 128], strides = [1, 1]} : vector<136x128xf32> to vector<8x128xf32>
    %131 = arith.maximumf %129, %130 : vector<8x128xf32>
    %132 = vector.extract_strided_slice %125 {offsets = [64, 0], sizes = [8, 128], strides = [1, 1]} : vector<136x128xf32> to vector<8x128xf32>
    %133 = arith.maximumf %131, %132 : vector<8x128xf32>
    %c37 = arith.constant 37 : index
    %c0_42 = arith.constant 0 : index
    %134 = vector.load %arg4[%c37, %c0_42] : memref<48x128xf32, #tpu.memory_space<vmem>>, vector<1x128xf32>
    %135 = vector.broadcast %134 : vector<1x128xf32> to vector<8x128xf32>
    %136 = arith.mulf %133, %135 : vector<8x128xf32>
    %137 = arith.addf %126, %136 : vector<8x128xf32>
    %138 = vector.extract_strided_slice %125 {offsets = [8, 0], sizes = [8, 128], strides = [1, 1]} : vector<136x128xf32> to vector<8x128xf32>
    %139 = vector.extract_strided_slice %125 {offsets = [16, 0], sizes = [8, 128], strides = [1, 1]} : vector<136x128xf32> to vector<8x128xf32>
    %140 = arith.maximumf %138, %139 : vector<8x128xf32>
    %141 = vector.extract_strided_slice %125 {offsets = [64, 0], sizes = [8, 128], strides = [1, 1]} : vector<136x128xf32> to vector<8x128xf32>
    %142 = arith.maximumf %140, %141 : vector<8x128xf32>
    %143 = vector.extract_strided_slice %125 {offsets = [72, 0], sizes = [8, 128], strides = [1, 1]} : vector<136x128xf32> to vector<8x128xf32>
    %144 = arith.maximumf %142, %143 : vector<8x128xf32>
    %c38 = arith.constant 38 : index
    %c0_43 = arith.constant 0 : index
    %145 = vector.load %arg4[%c38, %c0_43] : memref<48x128xf32, #tpu.memory_space<vmem>>, vector<1x128xf32>
    %146 = vector.broadcast %145 : vector<1x128xf32> to vector<8x128xf32>
    %147 = arith.mulf %144, %146 : vector<8x128xf32>
    %148 = arith.addf %137, %147 : vector<8x128xf32>
    %149 = vector.extract_strided_slice %125 {offsets = [56, 0], sizes = [8, 128], strides = [1, 1]} : vector<136x128xf32> to vector<8x128xf32>
    %150 = vector.extract_strided_slice %125 {offsets = [64, 0], sizes = [8, 128], strides = [1, 1]} : vector<136x128xf32> to vector<8x128xf32>
    %151 = arith.maximumf %149, %150 : vector<8x128xf32>
    %152 = vector.extract_strided_slice %125 {offsets = [112, 0], sizes = [8, 128], strides = [1, 1]} : vector<136x128xf32> to vector<8x128xf32>
    %153 = arith.maximumf %151, %152 : vector<8x128xf32>
    %154 = vector.extract_strided_slice %125 {offsets = [120, 0], sizes = [8, 128], strides = [1, 1]} : vector<136x128xf32> to vector<8x128xf32>
    %155 = arith.maximumf %153, %154 : vector<8x128xf32>
    %c39 = arith.constant 39 : index
    %c0_44 = arith.constant 0 : index
    %156 = vector.load %arg4[%c39, %c0_44] : memref<48x128xf32, #tpu.memory_space<vmem>>, vector<1x128xf32>
    %157 = vector.broadcast %156 : vector<1x128xf32> to vector<8x128xf32>
    %158 = arith.mulf %155, %157 : vector<8x128xf32>
    %159 = arith.addf %148, %158 : vector<8x128xf32>
    %160 = vector.extract_strided_slice %125 {offsets = [64, 0], sizes = [8, 128], strides = [1, 1]} : vector<136x128xf32> to vector<8x128xf32>
    %161 = vector.extract_strided_slice %125 {offsets = [72, 0], sizes = [8, 128], strides = [1, 1]} : vector<136x128xf32> to vector<8x128xf32>
    %162 = arith.maximumf %160, %161 : vector<8x128xf32>
    %163 = vector.extract_strided_slice %125 {offsets = [120, 0], sizes = [8, 128], strides = [1, 1]} : vector<136x128xf32> to vector<8x128xf32>
    %164 = arith.maximumf %162, %163 : vector<8x128xf32>
    %165 = vector.extract_strided_slice %125 {offsets = [128, 0], sizes = [8, 128], strides = [1, 1]} : vector<136x128xf32> to vector<8x128xf32>
    %166 = arith.maximumf %164, %165 : vector<8x128xf32>
    %c40 = arith.constant 40 : index
    %c0_45 = arith.constant 0 : index
    %167 = vector.load %arg4[%c40, %c0_45] : memref<48x128xf32, #tpu.memory_space<vmem>>, vector<1x128xf32>
    %168 = vector.broadcast %167 : vector<1x128xf32> to vector<8x128xf32>
    %169 = arith.mulf %166, %168 : vector<8x128xf32>
    %170 = arith.addf %159, %169 : vector<8x128xf32>
    %c3_46 = arith.constant 3 : index
    %c0_47 = arith.constant 0 : index
    %c0_48 = arith.constant 0 : index
    %171 = vector.load %arg3[%c3_46, %c0_47, %c0_48] : memref<8x128x128xf32, #tpu.memory_space<vmem>>, vector<1x128x128xf32>
    %172 = vector.shape_cast %171 : vector<1x128x128xf32> to vector<128x128xf32>
    %cst_49 = arith.constant dense<0.000000e+00> : vector<8x128xf32>
    %173 = tpu.matmul %170, %172, %cst_49 {dimension_numbers = #tpu.dot_dimension_numbers<[1], [0], [0], [1], [0, 0, 1, 1], [], []>} : vector<8x128xf32>, vector<128x128xf32>, vector<8x128xf32> -> vector<8x128xf32>
    %c7 = arith.constant 7 : index
    %c0_50 = arith.constant 0 : index
    %174 = vector.load %arg4[%c7, %c0_50] : memref<48x128xf32, #tpu.memory_space<vmem>>, vector<1x128xf32>
    %175 = vector.broadcast %174 : vector<1x128xf32> to vector<8x128xf32>
    %176 = arith.mulf %173, %175 : vector<8x128xf32>
    %c8 = arith.constant 8 : index
    %c0_51 = arith.constant 0 : index
    %177 = vector.load %arg4[%c8, %c0_51] : memref<48x128xf32, #tpu.memory_space<vmem>>, vector<1x128xf32>
    %178 = vector.broadcast %177 : vector<1x128xf32> to vector<8x128xf32>
    %179 = arith.addf %176, %178 : vector<8x128xf32>
    %c9 = arith.constant 9 : index
    %c0_52 = arith.constant 0 : index
    %180 = vector.load %arg4[%c9, %c0_52] : memref<48x128xf32, #tpu.memory_space<vmem>>, vector<1x128xf32>
    %cst_53 = arith.constant 0.000000e+00 : f32
    %181 = vector.broadcast %cst_53 : f32 to vector<8x128xf32>
    %182 = arith.cmpf oge, %179, %181 : vector<8x128xf32>
    %183 = vector.broadcast %180 : vector<1x128xf32> to vector<8x128xf32>
    %184 = arith.mulf %183, %179 : vector<8x128xf32>
    %185 = arith.select %182, %179, %184 : vector<8x128xi1>, vector<8x128xf32>
    %c4_54 = arith.constant 4 : index
    %c0_55 = arith.constant 0 : index
    %c0_56 = arith.constant 0 : index
    %186 = vector.load %arg3[%c4_54, %c0_55, %c0_56] : memref<8x128x128xf32, #tpu.memory_space<vmem>>, vector<1x128x128xf32>
    %187 = vector.shape_cast %186 : vector<1x128x128xf32> to vector<128x128xf32>
    %cst_57 = arith.constant dense<0.000000e+00> : vector<8x128xf32>
    %188 = tpu.matmul %185, %187, %cst_57 {dimension_numbers = #tpu.dot_dimension_numbers<[1], [0], [0], [1], [0, 0, 1, 1], [], []>} : vector<8x128xf32>, vector<128x128xf32>, vector<8x128xf32> -> vector<8x128xf32>
    %c10 = arith.constant 10 : index
    %c0_58 = arith.constant 0 : index
    %189 = vector.load %arg4[%c10, %c0_58] : memref<48x128xf32, #tpu.memory_space<vmem>>, vector<1x128xf32>
    %190 = vector.broadcast %189 : vector<1x128xf32> to vector<8x128xf32>
    %191 = arith.mulf %188, %190 : vector<8x128xf32>
    %c11 = arith.constant 11 : index
    %c0_59 = arith.constant 0 : index
    %192 = vector.load %arg4[%c11, %c0_59] : memref<48x128xf32, #tpu.memory_space<vmem>>, vector<1x128xf32>
    %193 = vector.broadcast %192 : vector<1x128xf32> to vector<8x128xf32>
    %194 = arith.addf %191, %193 : vector<8x128xf32>
    %c12 = arith.constant 12 : index
    %c0_60 = arith.constant 0 : index
    %195 = vector.load %arg4[%c12, %c0_60] : memref<48x128xf32, #tpu.memory_space<vmem>>, vector<1x128xf32>
    %cst_61 = arith.constant 0.000000e+00 : f32
    %196 = vector.broadcast %cst_61 : f32 to vector<8x128xf32>
    %197 = arith.cmpf oge, %194, %196 : vector<8x128xf32>
    %198 = vector.broadcast %195 : vector<1x128xf32> to vector<8x128xf32>
    %199 = arith.mulf %198, %194 : vector<8x128xf32>
    %200 = arith.select %197, %194, %199 : vector<8x128xi1>, vector<8x128xf32>
    %c5_62 = arith.constant 5 : index
    %c0_63 = arith.constant 0 : index
    %c0_64 = arith.constant 0 : index
    %201 = vector.load %arg3[%c5_62, %c0_63, %c0_64] : memref<8x128x128xf32, #tpu.memory_space<vmem>>, vector<1x128x128xf32>
    %202 = vector.shape_cast %201 : vector<1x128x128xf32> to vector<128x128xf32>
    %cst_65 = arith.constant dense<0.000000e+00> : vector<8x128xf32>
    %203 = tpu.matmul %200, %202, %cst_65 {dimension_numbers = #tpu.dot_dimension_numbers<[1], [0], [0], [1], [0, 0, 1, 1], [], []>} : vector<8x128xf32>, vector<128x128xf32>, vector<8x128xf32> -> vector<8x128xf32>
    %c13 = arith.constant 13 : index
    %c0_66 = arith.constant 0 : index
    %204 = vector.load %arg4[%c13, %c0_66] : memref<48x128xf32, #tpu.memory_space<vmem>>, vector<1x128xf32>
    %205 = vector.broadcast %204 : vector<1x128xf32> to vector<8x128xf32>
    %206 = arith.mulf %203, %205 : vector<8x128xf32>
    %c14 = arith.constant 14 : index
    %c0_67 = arith.constant 0 : index
    %207 = vector.load %arg4[%c14, %c0_67] : memref<48x128xf32, #tpu.memory_space<vmem>>, vector<1x128xf32>
    %208 = vector.broadcast %207 : vector<1x128xf32> to vector<8x128xf32>
    %209 = arith.addf %206, %208 : vector<8x128xf32>
    %c15 = arith.constant 15 : index
    %c0_68 = arith.constant 0 : index
    %210 = vector.load %arg4[%c15, %c0_68] : memref<48x128xf32, #tpu.memory_space<vmem>>, vector<1x128xf32>
    %cst_69 = arith.constant 0.000000e+00 : f32
    %211 = vector.broadcast %cst_69 : f32 to vector<8x128xf32>
    %212 = arith.cmpf oge, %209, %211 : vector<8x128xf32>
    %213 = vector.broadcast %210 : vector<1x128xf32> to vector<8x128xf32>
    %214 = arith.mulf %213, %209 : vector<8x128xf32>
    %215 = arith.select %212, %209, %214 : vector<8x128xi1>, vector<8x128xf32>
    %c6_70 = arith.constant 6 : index
    %c0_71 = arith.constant 0 : index
    %c0_72 = arith.constant 0 : index
    %216 = vector.load %arg3[%c6_70, %c0_71, %c0_72] : memref<8x128x128xf32, #tpu.memory_space<vmem>>, vector<1x128x128xf32>
    %217 = vector.shape_cast %216 : vector<1x128x128xf32> to vector<128x128xf32>
    %cst_73 = arith.constant dense<0.000000e+00> : vector<8x128xf32>
    %218 = tpu.matmul %215, %217, %cst_73 {dimension_numbers = #tpu.dot_dimension_numbers<[1], [0], [0], [1], [0, 0, 1, 1], [], []>} : vector<8x128xf32>, vector<128x128xf32>, vector<8x128xf32> -> vector<8x128xf32>
    %c16 = arith.constant 16 : index
    %c0_74 = arith.constant 0 : index
    %219 = vector.load %arg4[%c16, %c0_74] : memref<48x128xf32, #tpu.memory_space<vmem>>, vector<1x128xf32>
    %220 = vector.broadcast %219 : vector<1x128xf32> to vector<8x128xf32>
    %221 = arith.mulf %218, %220 : vector<8x128xf32>
    %c17 = arith.constant 17 : index
    %c0_75 = arith.constant 0 : index
    %222 = vector.load %arg4[%c17, %c0_75] : memref<48x128xf32, #tpu.memory_space<vmem>>, vector<1x128xf32>
    %223 = vector.broadcast %222 : vector<1x128xf32> to vector<8x128xf32>
    %224 = arith.addf %221, %223 : vector<8x128xf32>
    %c18 = arith.constant 18 : index
    %c0_76 = arith.constant 0 : index
    %225 = vector.load %arg4[%c18, %c0_76] : memref<48x128xf32, #tpu.memory_space<vmem>>, vector<1x128xf32>
    %cst_77 = arith.constant 0.000000e+00 : f32
    %226 = vector.broadcast %cst_77 : f32 to vector<8x128xf32>
    %227 = arith.cmpf oge, %224, %226 : vector<8x128xf32>
    %228 = vector.broadcast %225 : vector<1x128xf32> to vector<8x128xf32>
    %229 = arith.mulf %228, %224 : vector<8x128xf32>
    %230 = arith.select %227, %224, %229 : vector<8x128xi1>, vector<8x128xf32>
    %c7_78 = arith.constant 7 : index
    %c0_79 = arith.constant 0 : index
    %c0_80 = arith.constant 0 : index
    %231 = vector.load %arg3[%c7_78, %c0_79, %c0_80] : memref<8x128x128xf32, #tpu.memory_space<vmem>>, vector<1x128x128xf32>
    %232 = vector.shape_cast %231 : vector<1x128x128xf32> to vector<128x128xf32>
    %cst_81 = arith.constant dense<0.000000e+00> : vector<8x128xf32>
    %233 = tpu.matmul %230, %232, %cst_81 {dimension_numbers = #tpu.dot_dimension_numbers<[1], [0], [0], [1], [0, 0, 1, 1], [], []>} : vector<8x128xf32>, vector<128x128xf32>, vector<8x128xf32> -> vector<8x128xf32>
    %c19 = arith.constant 19 : index
    %c0_82 = arith.constant 0 : index
    %234 = vector.load %arg4[%c19, %c0_82] : memref<48x128xf32, #tpu.memory_space<vmem>>, vector<1x128xf32>
    %235 = vector.broadcast %234 : vector<1x128xf32> to vector<8x128xf32>
    %236 = arith.addf %233, %235 : vector<8x128xf32>
    %c0_83 = arith.constant 0 : index
    %c0_84 = arith.constant 0 : index
    %237 = vector.load %arg5[%c0_83, %c0_84] : memref<8x128xf32, #tpu.memory_space<vmem>>, vector<8x128xf32>
    tpu.vector_store %arg5[%c0_83, %c0_84], %236 {strides = array<i32>} : memref<8x128xf32, #tpu.memory_space<vmem>>, vector<8x128xf32>,
    return
  }
  func.func @transform_0(%arg0: i32) -> (i32, i32) {
    %c0_i32 = arith.constant 0 : i32
    %c0_i32_0 = arith.constant 0 : i32
    return %arg0, %c0_i32 : i32, i32
  }
  func.func @transform_1(%arg0: i32) -> (i32, i32) {
    %c0_i32 = arith.constant 0 : i32
    %c0_i32_0 = arith.constant 0 : i32
    return %arg0, %c0_i32 : i32, i32
  }
  func.func @transform_2(%arg0: i32) -> (i32, i32, i32) {
    %c0_i32 = arith.constant 0 : i32
    %c0_i32_0 = arith.constant 0 : i32
    %c0_i32_1 = arith.constant 0 : i32
    %c0_i32_2 = arith.constant 0 : i32
    return %c0_i32, %c0_i32_0, %c0_i32_1 : i32, i32, i32
  }
  func.func @transform_3(%arg0: i32) -> (i32, i32) {
    %c0_i32 = arith.constant 0 : i32
    %c0_i32_0 = arith.constant 0 : i32
    %c0_i32_1 = arith.constant 0 : i32
    return %c0_i32, %c0_i32_0 : i32, i32
  }
  func.func @transform_4(%arg0: i32) -> (i32, i32) {
    %c0_i32 = arith.constant 0 : i32
    %c0_i32_0 = arith.constant 0 : i32
    return %arg0, %c0_i32 : i32, i32
  }
}

</mosaic_0001>

<llo_original>
// kernel: tpu_custom_call.1
$region0: #{tpu_custom_call.1}
  #allocation0 [shape = 'u32[]', space=smem, size = 0x4, offset = 0x4, fixed_abs, tag = 'smem constant byte address 0x4 - core index']
  #allocation1 [shape = 'u32[144,128]{1,0:T(1,128)}', space=vmem, size = 0x12000, scoped, tag = 'internal scratch']
  %s0 = inlined_call_operand.vmem [shape: f32[784,1], index: 0, kind: input, shape index: {}]
  %s1 = inlined_call_operand.vmem [shape: f32[16,128], index: 1, kind: input, shape index: {}]
  %s2 = inlined_call_operand.hbm [shape: f32[8,128,128], index: 2, kind: input, shape index: {}]
  %s3 = inlined_call_operand.vmem [shape: f32[48,128], index: 3, kind: input, shape index: {}]
  %s4 = inlined_call_operand.hbm [shape: f32[16,128], index: 4, kind: output, shape index: {}]
  %s5 = sld [smem:[#allocation0]]
  $region53: #{tpu_custom_call.1} parent=0
    _
  %s7 = ssub.s32 1, %s5
  %s8 = scalar_select 0, %s7, %s5
  $region1: #{tpu_custom_call.1} parent=0
    #allocation2 [shape = 'u8[524288]{0}', space=vmem, size = 0x80000, scoped, tag = 'input window, operand 2, single buffered']
    #allocation3 [shape = 's32[2]{0}', space=sflag, size = 0x8, scoped, tag = 'scoped memory for tpu_custom_call.1']
    #allocation4 [shape = 's32[2]{0}', space=sflag, size = 0x8, scoped, tag = 'scoped memory for tpu_custom_call.1']
    #allocation5 [shape = 'u8[8192]{0}', space=vmem, size = 0x2000, scoped, tag = 'output window, operand 0']
    %9 = vsyncpa [#allocation3], 0
    %10 = vsyncpa [#allocation4], 0
    %s11 = scalar_lea.sflag [#allocation4], 1
    %12 = vsyncpa %s11, 0
    loop: start=0, step=1, limit=4
    $region2: #{tpu_custom_call.1} parent=1 // loop_pre_header
      _
    $region3: #{tpu_custom_call.1} parent=1 // loop_header
      %s14 = sphi 0, %s18
      %p15 = scmp.ge.s32.totalorder %s14, 4
      %s24 = sphi 0, %s26
      %s27 = sphi 0, %s24
      %s28 = sphi 0, %s27
      %s44 = sphi 0, %s28
      %s50 = sphi 0, %s52
      %s53 = sphi 0, %s50
      %s54 = sphi 0, %s53
      %s70 = sphi 0, %s54
      %s74 = sphi 0, %s74
      %s76 = sphi 0, %s74
      %s77 = sphi 0, %s76
      %s91 = sphi 0, %s77
      %s95 = sphi 0, %s95
      %s97 = sphi 0, %s95
      %s98 = sphi 0, %s97
      %s112 = sphi 0, %s98
      %s118 = sphi 0, %s120
      %s121 = sphi 0, %s118
      %s122 = sphi 0, %s121
      %s138 = sphi 0, %s122
    $region4: #{tpu_custom_call.1} parent=1 // loop_header_branch
      %17 = sbr.rel (%p15) target = $region8
    $region5: #{tpu_custom_call.1} parent=1 // loop_body
      %s19 = ssub.s32 %s14, 1
      %s20 = ssub.s32 %s14, 2
      %s21 = sadd.s32 %s14, 1
      %s22 = ssub.s32 %s14, %s21
      %p23 = scmp.eq.s32.totalorder %s22, 0
      %s25 = sadd.s32 %s24, 1
      %s26 = scalar_select %p23, %s24, %s25
      %p29 = pneg %p23
      %p30 = scmp.eq.s32.totalorder %s14, 1
      %p31 = por %p29, %p30
      %p32 = scmp.ne.s32.totalorder %s24, %s27
      %p33 = scmp.eq.s32.totalorder %s14, 0
      %p34 = por %p32, %p33
      %p35 = scmp.ne.s32.totalorder %s24, %s27
      %p36 = scmp.eq.s32.totalorder %s19, 1
      %p37 = por %p35, %p36
      %p38 = scmp.ne.s32.totalorder %s27, %s28
      %p39 = scmp.eq.s32.totalorder %s19, 0
      %p40 = por %p38, %p39
      %p41 = scmp.ne.s32.totalorder %s27, %s28
      %p42 = scmp.eq.s32.totalorder %s20, 1
      %p43 = por %p41, %p42
      %p45 = scmp.ne.s32.totalorder %s28, %s44
      %p46 = scmp.eq.s32.totalorder %s20, 0
      %p47 = por %p45, %p46
      %s48 = ssub.s32 %s14, %s21
      %p49 = scmp.eq.s32.totalorder %s48, 0
      %s51 = sadd.s32 %s50, 1
      %s52 = scalar_select %p49, %s50, %s51
      %p55 = pneg %p49
      %p56 = scmp.eq.s32.totalorder %s14, 1
      %p57 = por %p55, %p56
      %p58 = scmp.ne.s32.totalorder %s50, %s53
      %p59 = scmp.eq.s32.totalorder %s14, 0
      %p60 = por %p58, %p59
      %p61 = scmp.ne.s32.totalorder %s50, %s53
      %p62 = scmp.eq.s32.totalorder %s19, 1
      %p63 = por %p61, %p62
      %p64 = scmp.ne.s32.totalorder %s53, %s54
      %p65 = scmp.eq.s32.totalorder %s19, 0
      %p66 = por %p64, %p65
      %p67 = scmp.ne.s32.totalorder %s53, %s54
      %p68 = scmp.eq.s32.totalorder %s20, 1
      %p69 = por %p67, %p68
      %p71 = scmp.ne.s32.totalorder %s54, %s70
      %p72 = scmp.eq.s32.totalorder %s20, 0
      %p73 = por %p71, %p72
      %s75 = sadd.s32 %s74, 1
      %p78 = scmp.eq.s32.totalorder %s14, 1
      %p79 = scmp.ne.s32.totalorder %s74, %s76
      %p80 = scmp.eq.s32.totalorder %s14, 0
      %p81 = por %p79, %p80
      %p82 = scmp.ne.s32.totalorder %s74, %s76
      %p83 = scmp.eq.s32.totalorder %s19, 1
      %p84 = por %p82, %p83
      %p85 = scmp.ne.s32.totalorder %s76, %s77
      %p86 = scmp.eq.s32.totalorder %s19, 0
      %p87 = por %p85, %p86
      %p88 = scmp.ne.s32.totalorder %s76, %s77
      %p89 = scmp.eq.s32.totalorder %s20, 1
      %p90 = por %p88, %p89
      %p92 = scmp.ne.s32.totalorder %s77, %s91
      %p93 = scmp.eq.s32.totalorder %s20, 0
      %p94 = por %p92, %p93
      %s96 = sadd.s32 %s95, 1
      %p99 = scmp.eq.s32.totalorder %s14, 1
      %p100 = scmp.ne.s32.totalorder %s95, %s97
      %p101 = scmp.eq.s32.totalorder %s14, 0
      %p102 = por %p100, %p101
      %p103 = scmp.ne.s32.totalorder %s95, %s97
      %p104 = scmp.eq.s32.totalorder %s19, 1
      %p105 = por %p103, %p104
      %p106 = scmp.ne.s32.totalorder %s97, %s98
      %p107 = scmp.eq.s32.totalorder %s19, 0
      %p108 = por %p106, %p107
      %p109 = scmp.ne.s32.totalorder %s97, %s98
      %p110 = scmp.eq.s32.totalorder %s20, 1
      %p111 = por %p109, %p110
      %p113 = scmp.ne.s32.totalorder %s98, %s112
      %p114 = scmp.eq.s32.totalorder %s20, 0
      %p115 = por %p113, %p114
      %s116 = ssub.s32 %s14, %s21
      %p117 = scmp.eq.s32.totalorder %s116, 0
      %s119 = sadd.s32 %s118, 1
      %s120 = scalar_select %p117, %s118, %s119
      %p123 = pneg %p117
      %p124 = scmp.eq.s32.totalorder %s14, 1
      %p125 = por %p123, %p124
      %p126 = scmp.ne.s32.totalorder %s118, %s121
      %p127 = scmp.eq.s32.totalorder %s14, 0
      %p128 = por %p126, %p127
      %p129 = scmp.ne.s32.totalorder %s118, %s121
      %p130 = scmp.eq.s32.totalorder %s19, 1
      %p131 = por %p129, %p130
      %p132 = scmp.ne.s32.totalorder %s121, %s122
      %p133 = scmp.eq.s32.totalorder %s19, 0
      %p134 = por %p132, %p133
      %p135 = scmp.ne.s32.totalorder %s121, %s122
      %p136 = scmp.eq.s32.totalorder %s20, 1
      %p137 = por %p135, %p136
      %p139 = scmp.ne.s32.totalorder %s122, %s138
      %p140 = scmp.eq.s32.totalorder %s20, 0
      %p141 = por %p139, %p140
      %p142 = scmp.le.s32.totalorder 1, %s14
      %p143 = scmp.lt.s32.totalorder %s14, 3
      %p144 = pnand %p142, %p143
      %p145 = pneg %p144
      // Predicated region
      $region9: #{tpu_custom_call.1} parent=5 // pred_check
        _
      $region10: #{tpu_custom_call.1} parent=5 // pred_check_branch
        %147 = sbr.rel (%p144) target = $region12
      $region11: #{tpu_custom_call.1} parent=5 // pred_region
        %s148 = ssub.s32 %s14, 1
        // Predicated region
        $region13: #{tpu_custom_call.1} parent=11 // pred_check
          %p149 = pneg %p87
        $region14: #{tpu_custom_call.1} parent=11 // pred_check_branch
          %151 = sbr.rel (%p149) target = $region16
        $region15: #{tpu_custom_call.1} parent=11 // pred_region
          %s153 = ssub.s32 16384, 16384
          %154 = vsyncadd [#allocation3], %s153
          %s155 = sshll.u32 [#allocation2], 4
          %s156 = int_to_ptr.vmem [resolvable:$true] %s155
          %161 = dma.hbm_to_vmem [thread:$0]  %s2, 16384, %s156, [#allocation3], 128, 128, 8
        $region16: #{tpu_custom_call.1} parent=11 // pred_fallthru
          _
        // Predicated region
        $region17: #{tpu_custom_call.1} parent=11 // pred_check
          %p162 = pneg %p108
        $region18: #{tpu_custom_call.1} parent=11 // pred_check_branch
          %164 = sbr.rel (%p162) target = $region20
        $region19: #{tpu_custom_call.1} parent=11 // pred_region
          _
        $region20: #{tpu_custom_call.1} parent=11 // pred_fallthru
          _
      $region12: #{tpu_custom_call.1} parent=5 // pred_fallthru
        _
      %p165 = scmp.lt.s32.totalorder %s14, 2
      // Predicated region
      $region21: #{tpu_custom_call.1} parent=5 // pred_check
        %p166 = pneg %p165
      $region22: #{tpu_custom_call.1} parent=5 // pred_check_branch
        %168 = sbr.rel (%p166) target = $region24
      $region23: #{tpu_custom_call.1} parent=5 // pred_region
        // Predicated region
        $region25: #{tpu_custom_call.1} parent=23 // pred_check
          %p169 = pneg %p34
        $region26: #{tpu_custom_call.1} parent=23 // pred_check_branch
          %171 = sbr.rel (%p169) target = $region28
        $region27: #{tpu_custom_call.1} parent=23 // pred_region
          %s172 = smul.u32 49, %s14
          %p173 = scmp.lt.s32.totalorder %s172, 97
          %s174 = scalar_select %p173, %s172, 97
          %s175 = smul.addr %s174, 8
          %s176 = scalar_lea.vmem %s0, %s175
          %s177 = smul.u32 49, %s14
        $region28: #{tpu_custom_call.1} parent=23 // pred_fallthru
          _
        // Predicated region
        $region29: #{tpu_custom_call.1} parent=23 // pred_check
          %p178 = pneg %p60
        $region30: #{tpu_custom_call.1} parent=23 // pred_check_branch
          %180 = sbr.rel (%p178) target = $region32
        $region31: #{tpu_custom_call.1} parent=23 // pred_region
          %p181 = scmp.lt.s32.totalorder %s14, 1
          %s182 = scalar_select %p181, %s14, 1
          %s183 = smul.addr %s182, 8
          %s184 = scalar_lea.vmem %s1, %s183
        $region32: #{tpu_custom_call.1} parent=23 // pred_fallthru
          _
      $region24: #{tpu_custom_call.1} parent=5 // pred_fallthru
        _
      %p185 = scmp.le.s32.totalorder 1, %s14
      %p186 = scmp.lt.s32.totalorder %s14, 3
      %p187 = pnand %p185, %p186
      %p188 = pneg %p187
      // Predicated region
      $region33: #{tpu_custom_call.1} parent=5 // pred_check
        _
      $region34: #{tpu_custom_call.1} parent=5 // pred_check_branch
        %190 = sbr.rel (%p187) target = $region36
      $region35: #{tpu_custom_call.1} parent=5 // pred_region
        %s191 = ssub.s32 %s14, 1
        // Predicated region
        $region37: #{tpu_custom_call.1} parent=35 // pred_check
          %p192 = pneg %p87
        $region38: #{tpu_custom_call.1} parent=35 // pred_check_branch
          %194 = sbr.rel (%p192) target = $region40
        $region39: #{tpu_custom_call.1} parent=35 // pred_region
          %195 = dma.done [#allocation3], 16384
        $region40: #{tpu_custom_call.1} parent=35 // pred_fallthru
          _
        %s196 = smul.u32 49, %s19
        %p197 = scmp.lt.s32.totalorder %s196, 97
        %s198 = scalar_select %p197, %s196, 97
        %s199 = smul.addr %s198, 8
        %s200 = scalar_lea.vmem %s0, %s199
        %p201 = pneg %p40
        %p202 = pneg %p37
        %p203 = scmp.lt.s32.totalorder %s19, 1
        %s204 = scalar_select %p203, %s19, 1
        %s205 = smul.addr %s204, 8
        %s206 = scalar_lea.vmem %s1, %s205
        %p207 = pneg %p66
        %p208 = pneg %p63
        %p209 = pneg %p87
        %p210 = pneg %p84
        %p211 = pneg %p108
        %p212 = pneg %p105
        %p213 = pneg %p134
        %p214 = pneg %p131
        %s215 = sand.u32 %s121, 1
        %s216 = scalar_lea.sflag [#allocation4], %s215
        %s217 = sand.u32 %s121, 1
        %s218 = smul.addr %s217, 8
        %s219 = scalar_lea.vmem [#allocation5], %s218
        %s220 = smul.u32 49, %s19
        %p221 = scmp.lt.s32.totalorder %s220, 97
        %s222 = scalar_select %p221, %s220, 97
        %s223 = smul.addr %s222, 8
        %s224 = scalar_lea.vmem %s0, %s223
        %s225 = smul.u32 49, %s19
        %p226 = scmp.lt.s32.totalorder %s19, 1
        %s227 = scalar_select %p226, %s19, 1
        %s228 = smul.addr %s227, 8
        %s229 = scalar_lea.vmem %s1, %s228
        %v230 = vld [vmem:[%s224] sm:$0xff]
        %v231 = vld [vmem:[%s224 + $0x8] sm:$0xff]
        %v232 = vld [vmem:[%s224 + $0x10] sm:$0xff]
        %v233 = vld [vmem:[%s224 + $0x18] sm:$0xff]
        %v234 = vld [vmem:[%s224 + $0x20] sm:$0xff]
        %v235 = vld [vmem:[%s224 + $0x28] sm:$0xff]
        %v236 = vld [vmem:[%s224 + $0x30] sm:$0xff]
        %v237 = vld [vmem:[%s224 + $0x38] sm:$0xff]
        %v238 = vld [vmem:[%s224 + $0x40] sm:$0xff]
        %v239 = vld [vmem:[%s224 + $0x48] sm:$0xff]
        %v240 = vld [vmem:[%s224 + $0x50] sm:$0xff]
        %v241 = vld [vmem:[%s224 + $0x58] sm:$0xff]
        %v242 = vld [vmem:[%s224 + $0x60] sm:$0xff]
        %v243 = vld [vmem:[%s224 + $0x68] sm:$0xff]
        %v244 = vld [vmem:[%s224 + $0x70] sm:$0xff]
        %v245 = vld [vmem:[%s224 + $0x78] sm:$0xff]
        %v246 = vld [vmem:[%s224 + $0x80] sm:$0xff]
        %v247 = vld [vmem:[%s224 + $0x88] sm:$0xff]
        %v248 = vld [vmem:[%s224 + $0x90] sm:$0xff]
        %v249 = vld [vmem:[%s224 + $0x98] sm:$0xff]
        %v250 = vld [vmem:[%s224 + $0xa0] sm:$0xff]
        %v251 = vld [vmem:[%s224 + $0xa8] sm:$0xff]
        %v252 = vld [vmem:[%s224 + $0xb0] sm:$0xff]
        %v253 = vld [vmem:[%s224 + $0xb8] sm:$0xff]
        %v254 = vld [vmem:[%s224 + $0xc0] sm:$0xff]
        %v255 = vld [vmem:[%s224 + $0xc8] sm:$0xff]
        %v256 = vld [vmem:[%s224 + $0xd0] sm:$0xff]
        %v257 = vld [vmem:[%s224 + $0xd8] sm:$0xff]
        %v258 = vld [vmem:[%s224 + $0xe0] sm:$0xff]
        %v259 = vld [vmem:[%s224 + $0xe8] sm:$0xff]
        %v260 = vld [vmem:[%s224 + $0xf0] sm:$0xff]
        %v261 = vld [vmem:[%s224 + $0xf8] sm:$0xff]
        %v262 = vld [vmem:[%s224 + $0x100] sm:$0xff]
        %v263 = vld [vmem:[%s224 + $0x108] sm:$0xff]
        %v264 = vld [vmem:[%s224 + $0x110] sm:$0xff]
        %v265 = vld [vmem:[%s224 + $0x118] sm:$0xff]
        %v266 = vld [vmem:[%s224 + $0x120] sm:$0xff]
        %v267 = vld [vmem:[%s224 + $0x128] sm:$0xff]
        %v268 = vld [vmem:[%s224 + $0x130] sm:$0xff]
        %v269 = vld [vmem:[%s224 + $0x138] sm:$0xff]
        %v270 = vld [vmem:[%s224 + $0x140] sm:$0xff]
        %v271 = vld [vmem:[%s224 + $0x148] sm:$0xff]
        %v272 = vld [vmem:[%s224 + $0x150] sm:$0xff]
        %v273 = vld [vmem:[%s224 + $0x158] sm:$0xff]
        %v274 = vld [vmem:[%s224 + $0x160] sm:$0xff]
        %v275 = vld [vmem:[%s224 + $0x168] sm:$0xff]
        %v276 = vld [vmem:[%s224 + $0x170] sm:$0xff]
        %v277 = vld [vmem:[%s224 + $0x178] sm:$0xff]
        %v278 = vld [vmem:[%s224 + $0x180] sm:$0xff]
        %v279 = vld [vmem:[%s3] sm:$0x1]
        %281 = vset.pattern.permute.xlu0 0
        %282 = vperm.xlu0 %281, %v230
        %v283 = vpop.permute.xlu0 %282
        %286 = vset.pattern.permute.xlu0 0
        %287 = vperm.xlu0 %286, %v231
        %v288 = vpop.permute.xlu0 %287
        %291 = vset.pattern.permute.xlu0 0
        %292 = vperm.xlu0 %291, %v232
        %v293 = vpop.permute.xlu0 %292
        %296 = vset.pattern.permute.xlu0 0
        %297 = vperm.xlu0 %296, %v233
        %v298 = vpop.permute.xlu0 %297
        %301 = vset.pattern.permute.xlu0 0
        %302 = vperm.xlu0 %301, %v234
        %v303 = vpop.permute.xlu0 %302
        %306 = vset.pattern.permute.xlu0 0
        %307 = vperm.xlu0 %306, %v235
        %v308 = vpop.permute.xlu0 %307
        %311 = vset.pattern.permute.xlu0 0
        %312 = vperm.xlu0 %311, %v236
        %v313 = vpop.permute.xlu0 %312
        %316 = vset.pattern.permute.xlu0 0
        %317 = vperm.xlu0 %316, %v237
        %v318 = vpop.permute.xlu0 %317
        %321 = vset.pattern.permute.xlu0 0
        %322 = vperm.xlu0 %321, %v238
        %v323 = vpop.permute.xlu0 %322
        %326 = vset.pattern.permute.xlu0 0
        %327 = vperm.xlu0 %326, %v239
        %v328 = vpop.permute.xlu0 %327
        %331 = vset.pattern.permute.xlu0 0
        %332 = vperm.xlu0 %331, %v240
        %v333 = vpop.permute.xlu0 %332
        %336 = vset.pattern.permute.xlu0 0
        %337 = vperm.xlu0 %336, %v241
        %v338 = vpop.permute.xlu0 %337
        %341 = vset.pattern.permute.xlu0 0
        %342 = vperm.xlu0 %341, %v242
        %v343 = vpop.permute.xlu0 %342
        %346 = vset.pattern.permute.xlu0 0
        %347 = vperm.xlu0 %346, %v243
        %v348 = vpop.permute.xlu0 %347
        %351 = vset.pattern.permute.xlu0 0
        %352 = vperm.xlu0 %351, %v244
        %v353 = vpop.permute.xlu0 %352
        %356 = vset.pattern.permute.xlu0 0
        %357 = vperm.xlu0 %356, %v245
        %v358 = vpop.permute.xlu0 %357
        %361 = vset.pattern.permute.xlu0 0
        %362 = vperm.xlu0 %361, %v246
        %v363 = vpop.permute.xlu0 %362
        %366 = vset.pattern.permute.xlu0 0
        %367 = vperm.xlu0 %366, %v247
        %v368 = vpop.permute.xlu0 %367
        %371 = vset.pattern.permute.xlu0 0
        %372 = vperm.xlu0 %371, %v248
        %v373 = vpop.permute.xlu0 %372
        %376 = vset.pattern.permute.xlu0 0
        %377 = vperm.xlu0 %376, %v249
        %v378 = vpop.permute.xlu0 %377
        %381 = vset.pattern.permute.xlu0 0
        %382 = vperm.xlu0 %381, %v250
        %v383 = vpop.permute.xlu0 %382
        %386 = vset.pattern.permute.xlu0 0
        %387 = vperm.xlu0 %386, %v251
        %v388 = vpop.permute.xlu0 %387
        %391 = vset.pattern.permute.xlu0 0
        %392 = vperm.xlu0 %391, %v252
        %v393 = vpop.permute.xlu0 %392
        %396 = vset.pattern.permute.xlu0 0
        %397 = vperm.xlu0 %396, %v253
        %v398 = vpop.permute.xlu0 %397
        %401 = vset.pattern.permute.xlu0 0
        %402 = vperm.xlu0 %401, %v254
        %v403 = vpop.permute.xlu0 %402
        %406 = vset.pattern.permute.xlu0 0
        %407 = vperm.xlu0 %406, %v255
        %v408 = vpop.permute.xlu0 %407
        %411 = vset.pattern.permute.xlu0 0
        %412 = vperm.xlu0 %411, %v256
        %v413 = vpop.permute.xlu0 %412
        %416 = vset.pattern.permute.xlu0 0
        %417 = vperm.xlu0 %416, %v257
        %v418 = vpop.permute.xlu0 %417
        %421 = vset.pattern.permute.xlu0 0
        %422 = vperm.xlu0 %421, %v258
        %v423 = vpop.permute.xlu0 %422
        %426 = vset.pattern.permute.xlu0 0
        %427 = vperm.xlu0 %426, %v259
        %v428 = vpop.permute.xlu0 %427
        %431 = vset.pattern.permute.xlu0 0
        %432 = vperm.xlu0 %431, %v260
        %v433 = vpop.permute.xlu0 %432
        %436 = vset.pattern.permute.xlu0 0
        %437 = vperm.xlu0 %436, %v261
        %v438 = vpop.permute.xlu0 %437
        %441 = vset.pattern.permute.xlu0 0
        %442 = vperm.xlu0 %441, %v262
        %v443 = vpop.permute.xlu0 %442
        %446 = vset.pattern.permute.xlu0 0
        %447 = vperm.xlu0 %446, %v263
        %v448 = vpop.permute.xlu0 %447
        %451 = vset.pattern.permute.xlu0 0
        %452 = vperm.xlu0 %451, %v264
        %v453 = vpop.permute.xlu0 %452
        %456 = vset.pattern.permute.xlu0 0
        %457 = vperm.xlu0 %456, %v265
        %v458 = vpop.permute.xlu0 %457
        %461 = vset.pattern.permute.xlu0 0
        %462 = vperm.xlu0 %461, %v266
        %v463 = vpop.permute.xlu0 %462
        %466 = vset.pattern.permute.xlu0 0
        %467 = vperm.xlu0 %466, %v267
        %v468 = vpop.permute.xlu0 %467
        %471 = vset.pattern.permute.xlu0 0
        %472 = vperm.xlu0 %471, %v268
        %v473 = vpop.permute.xlu0 %472
        %476 = vset.pattern.permute.xlu0 0
        %477 = vperm.xlu0 %476, %v269
        %v478 = vpop.permute.xlu0 %477
        %481 = vset.pattern.permute.xlu0 0
        %482 = vperm.xlu0 %481, %v270
        %v483 = vpop.permute.xlu0 %482
        %486 = vset.pattern.permute.xlu0 0
        %487 = vperm.xlu0 %486, %v271
        %v488 = vpop.permute.xlu0 %487
        %491 = vset.pattern.permute.xlu0 0
        %492 = vperm.xlu0 %491, %v272
        %v493 = vpop.permute.xlu0 %492
        %496 = vset.pattern.permute.xlu0 0
        %497 = vperm.xlu0 %496, %v273
        %v498 = vpop.permute.xlu0 %497
        %501 = vset.pattern.permute.xlu0 0
        %502 = vperm.xlu0 %501, %v274
        %v503 = vpop.permute.xlu0 %502
        %506 = vset.pattern.permute.xlu0 0
        %507 = vperm.xlu0 %506, %v275
        %v508 = vpop.permute.xlu0 %507
        %511 = vset.pattern.permute.xlu0 0
        %512 = vperm.xlu0 %511, %v276
        %v513 = vpop.permute.xlu0 %512
        %516 = vset.pattern.permute.xlu0 0
        %517 = vperm.xlu0 %516, %v277
        %v518 = vpop.permute.xlu0 %517
        %521 = vset.pattern.permute.xlu0 0
        %522 = vperm.xlu0 %521, %v278
        %v523 = vpop.permute.xlu0 %522
        %v525 = vlaneseq
        %v526 = vshrl.u32 %v525, 7
        %v527 = vsub.s32 0, %v526
        %v528 = vrot.slane %v279, %v527
        %v529 = vmul.f32 %v283, %v528
        %v530 = vmul.f32 %v288, %v528
        %v531 = vmul.f32 %v293, %v528
        %v532 = vmul.f32 %v298, %v528
        %v533 = vmul.f32 %v303, %v528
        %v534 = vmul.f32 %v308, %v528
        %v535 = vmul.f32 %v313, %v528
        %v536 = vmul.f32 %v318, %v528
        %v537 = vmul.f32 %v323, %v528
        %v538 = vmul.f32 %v328, %v528
        %v539 = vmul.f32 %v333, %v528
        %v540 = vmul.f32 %v338, %v528
        %v541 = vmul.f32 %v343, %v528
        %v542 = vmul.f32 %v348, %v528
        %v543 = vmul.f32 %v353, %v528
        %v544 = vmul.f32 %v358, %v528
        %v545 = vmul.f32 %v363, %v528
        %v546 = vmul.f32 %v368, %v528
        %v547 = vmul.f32 %v373, %v528
        %v548 = vmul.f32 %v378, %v528
        %v549 = vmul.f32 %v383, %v528
        %v550 = vmul.f32 %v388, %v528
        %v551 = vmul.f32 %v393, %v528
        %v552 = vmul.f32 %v398, %v528
        %v553 = vmul.f32 %v403, %v528
        %v554 = vmul.f32 %v408, %v528
        %v555 = vmul.f32 %v413, %v528
        %v556 = vmul.f32 %v418, %v528
        %v557 = vmul.f32 %v423, %v528
        %v558 = vmul.f32 %v428, %v528
        %v559 = vmul.f32 %v433, %v528
        %v560 = vmul.f32 %v438, %v528
        %v561 = vmul.f32 %v443, %v528
        %v562 = vmul.f32 %v448, %v528
        %v563 = vmul.f32 %v453, %v528
        %v564 = vmul.f32 %v458, %v528
        %v565 = vmul.f32 %v463, %v528
        %v566 = vmul.f32 %v468, %v528
        %v567 = vmul.f32 %v473, %v528
        %v568 = vmul.f32 %v478, %v528
        %v569 = vmul.f32 %v483, %v528
        %v570 = vmul.f32 %v488, %v528
        %v571 = vmul.f32 %v493, %v528
        %v572 = vmul.f32 %v498, %v528
        %v573 = vmul.f32 %v503, %v528
        %v574 = vmul.f32 %v508, %v528
        %v575 = vmul.f32 %v513, %v528
        %v576 = vmul.f32 %v518, %v528
        %v577 = vmul.f32 %v523, %v528
        %v578 = vld [vmem:[%s3 + $0x1] sm:$0x1]
        %v579 = vlaneseq
        %v580 = vshrl.u32 %v579, 7
        %v581 = vsub.s32 0, %v580
        %v582 = vrot.slane %v578, %v581
        %v583 = vadd.f32 %v529, %v582
        %v584 = vadd.f32 %v530, %v582
        %v585 = vadd.f32 %v531, %v582
        %v586 = vadd.f32 %v532, %v582
        %v587 = vadd.f32 %v533, %v582
        %v588 = vadd.f32 %v534, %v582
        %v589 = vadd.f32 %v535, %v582
        %v590 = vadd.f32 %v536, %v582
        %v591 = vadd.f32 %v537, %v582
        %v592 = vadd.f32 %v538, %v582
        %v593 = vadd.f32 %v539, %v582
        %v594 = vadd.f32 %v540, %v582
        %v595 = vadd.f32 %v541, %v582
        %v596 = vadd.f32 %v542, %v582
        %v597 = vadd.f32 %v543, %v582
        %v598 = vadd.f32 %v544, %v582
        %v599 = vadd.f32 %v545, %v582
        %v600 = vadd.f32 %v546, %v582
        %v601 = vadd.f32 %v547, %v582
        %v602 = vadd.f32 %v548, %v582
        %v603 = vadd.f32 %v549, %v582
        %v604 = vadd.f32 %v550, %v582
        %v605 = vadd.f32 %v551, %v582
        %v606 = vadd.f32 %v552, %v582
        %v607 = vadd.f32 %v553, %v582
        %v608 = vadd.f32 %v554, %v582
        %v609 = vadd.f32 %v555, %v582
        %v610 = vadd.f32 %v556, %v582
        %v611 = vadd.f32 %v557, %v582
        %v612 = vadd.f32 %v558, %v582
        %v613 = vadd.f32 %v559, %v582
        %v614 = vadd.f32 %v560, %v582
        %v615 = vadd.f32 %v561, %v582
        %v616 = vadd.f32 %v562, %v582
        %v617 = vadd.f32 %v563, %v582
        %v618 = vadd.f32 %v564, %v582
        %v619 = vadd.f32 %v565, %v582
        %v620 = vadd.f32 %v566, %v582
        %v621 = vadd.f32 %v567, %v582
        %v622 = vadd.f32 %v568, %v582
        %v623 = vadd.f32 %v569, %v582
        %v624 = vadd.f32 %v570, %v582
        %v625 = vadd.f32 %v571, %v582
        %v626 = vadd.f32 %v572, %v582
        %v627 = vadd.f32 %v573, %v582
        %v628 = vadd.f32 %v574, %v582
        %v629 = vadd.f32 %v575, %v582
        %v630 = vadd.f32 %v576, %v582
        %v631 = vadd.f32 %v577, %v582
        %v632 = vld [vmem:[%s3 + $0x2] sm:$0x1]
        %vm633 = vcmp.ge.f32.partialorder %v583, 0.0
        %vm634 = vcmp.ge.f32.partialorder %v584, 0.0
        %vm635 = vcmp.ge.f32.partialorder %v585, 0.0
        %vm636 = vcmp.ge.f32.partialorder %v586, 0.0
        %vm637 = vcmp.ge.f32.partialorder %v587, 0.0
        %vm638 = vcmp.ge.f32.partialorder %v588, 0.0
        %vm639 = vcmp.ge.f32.partialorder %v589, 0.0
        %vm640 = vcmp.ge.f32.partialorder %v590, 0.0
        %vm641 = vcmp.ge.f32.partialorder %v591, 0.0
        %vm642 = vcmp.ge.f32.partialorder %v592, 0.0
        %vm643 = vcmp.ge.f32.partialorder %v593, 0.0
        %vm644 = vcmp.ge.f32.partialorder %v594, 0.0
        %vm645 = vcmp.ge.f32.partialorder %v595, 0.0
        %vm646 = vcmp.ge.f32.partialorder %v596, 0.0
        %vm647 = vcmp.ge.f32.partialorder %v597, 0.0
        %vm648 = vcmp.ge.f32.partialorder %v598, 0.0
        %vm649 = vcmp.ge.f32.partialorder %v599, 0.0
        %vm650 = vcmp.ge.f32.partialorder %v600, 0.0
        %vm651 = vcmp.ge.f32.partialorder %v601, 0.0
        %vm652 = vcmp.ge.f32.partialorder %v602, 0.0
        %vm653 = vcmp.ge.f32.partialorder %v603, 0.0
        %vm654 = vcmp.ge.f32.partialorder %v604, 0.0
        %vm655 = vcmp.ge.f32.partialorder %v605, 0.0
        %vm656 = vcmp.ge.f32.partialorder %v606, 0.0
        %vm657 = vcmp.ge.f32.partialorder %v607, 0.0
        %vm658 = vcmp.ge.f32.partialorder %v608, 0.0
        %vm659 = vcmp.ge.f32.partialorder %v609, 0.0
        %vm660 = vcmp.ge.f32.partialorder %v610, 0.0
        %vm661 = vcmp.ge.f32.partialorder %v611, 0.0
        %vm662 = vcmp.ge.f32.partialorder %v612, 0.0
        %vm663 = vcmp.ge.f32.partialorder %v613, 0.0
        %vm664 = vcmp.ge.f32.partialorder %v614, 0.0
        %vm665 = vcmp.ge.f32.partialorder %v615, 0.0
        %vm666 = vcmp.ge.f32.partialorder %v616, 0.0
        %vm667 = vcmp.ge.f32.partialorder %v617, 0.0
        %vm668 = vcmp.ge.f32.partialorder %v618, 0.0
        %vm669 = vcmp.ge.f32.partialorder %v619, 0.0
        %vm670 = vcmp.ge.f32.partialorder %v620, 0.0
        %vm671 = vcmp.ge.f32.partialorder %v621, 0.0
        %vm672 = vcmp.ge.f32.partialorder %v622, 0.0
        %vm673 = vcmp.ge.f32.partialorder %v623, 0.0
        %vm674 = vcmp.ge.f32.partialorder %v624, 0.0
        %vm675 = vcmp.ge.f32.partialorder %v625, 0.0
        %vm676 = vcmp.ge.f32.partialorder %v626, 0.0
        %vm677 = vcmp.ge.f32.partialorder %v627, 0.0
        %vm678 = vcmp.ge.f32.partialorder %v628, 0.0
        %vm679 = vcmp.ge.f32.partialorder %v629, 0.0
        %vm680 = vcmp.ge.f32.partialorder %v630, 0.0
        %vm681 = vcmp.ge.f32.partialorder %v631, 0.0
        %v682 = vlaneseq
        %v683 = vshrl.u32 %v682, 7
        %v684 = vsub.s32 0, %v683
        %v685 = vrot.slane %v632, %v684
        %v686 = vmul.f32 %v685, %v583
        %v687 = vmul.f32 %v685, %v584
        %v688 = vmul.f32 %v685, %v585
        %v689 = vmul.f32 %v685, %v586
        %v690 = vmul.f32 %v685, %v587
        %v691 = vmul.f32 %v685, %v588
        %v692 = vmul.f32 %v685, %v589
        %v693 = vmul.f32 %v685, %v590
        %v694 = vmul.f32 %v685, %v591
        %v695 = vmul.f32 %v685, %v592
        %v696 = vmul.f32 %v685, %v593
        %v697 = vmul.f32 %v685, %v594
        %v698 = vmul.f32 %v685, %v595
        %v699 = vmul.f32 %v685, %v596
        %v700 = vmul.f32 %v685, %v597
        %v701 = vmul.f32 %v685, %v598
        %v702 = vmul.f32 %v685, %v599
        %v703 = vmul.f32 %v685, %v600
        %v704 = vmul.f32 %v685, %v601
        %v705 = vmul.f32 %v685, %v602
        %v706 = vmul.f32 %v685, %v603
        %v707 = vmul.f32 %v685, %v604
        %v708 = vmul.f32 %v685, %v605
        %v709 = vmul.f32 %v685, %v606
        %v710 = vmul.f32 %v685, %v607
        %v711 = vmul.f32 %v685, %v608
        %v712 = vmul.f32 %v685, %v609
        %v713 = vmul.f32 %v685, %v610
        %v714 = vmul.f32 %v685, %v611
        %v715 = vmul.f32 %v685, %v612
        %v716 = vmul.f32 %v685, %v613
        %v717 = vmul.f32 %v685, %v614
        %v718 = vmul.f32 %v685, %v615
        %v719 = vmul.f32 %v685, %v616
        %v720 = vmul.f32 %v685, %v617
        %v721 = vmul.f32 %v685, %v618
        %v722 = vmul.f32 %v685, %v619
        %v723 = vmul.f32 %v685, %v620
        %v724 = vmul.f32 %v685, %v621
        %v725 = vmul.f32 %v685, %v622
        %v726 = vmul.f32 %v685, %v623
        %v727 = vmul.f32 %v685, %v624
        %v728 = vmul.f32 %v685, %v625
        %v729 = vmul.f32 %v685, %v626
        %v730 = vmul.f32 %v685, %v627
        %v731 = vmul.f32 %v685, %v628
        %v732 = vmul.f32 %v685, %v629
        %v733 = vmul.f32 %v685, %v630
        %v734 = vmul.f32 %v685, %v631
        %v735 = vsel %vm633, %v583, %v686
        %v736 = vsel %vm634, %v584, %v687
        %v737 = vsel %vm635, %v585, %v688
        %v738 = vsel %vm636, %v586, %v689
        %v739 = vsel %vm637, %v587, %v690
        %v740 = vsel %vm638, %v588, %v691
        %v741 = vsel %vm639, %v589, %v692
        %v742 = vsel %vm640, %v590, %v693
        %v743 = vsel %vm641, %v591, %v694
        %v744 = vsel %vm642, %v592, %v695
        %v745 = vsel %vm643, %v593, %v696
        %v746 = vsel %vm644, %v594, %v697
        %v747 = vsel %vm645, %v595, %v698
        %v748 = vsel %vm646, %v596, %v699
        %v749 = vsel %vm647, %v597, %v700
        %v750 = vsel %vm648, %v598, %v701
        %v751 = vsel %vm649, %v599, %v702
        %v752 = vsel %vm650, %v600, %v703
        %v753 = vsel %vm651, %v601, %v704
        %v754 = vsel %vm652, %v602, %v705
        %v755 = vsel %vm653, %v603, %v706
        %v756 = vsel %vm654, %v604, %v707
        %v757 = vsel %vm655, %v605, %v708
        %v758 = vsel %vm656, %v606, %v709
        %v759 = vsel %vm657, %v607, %v710
        %v760 = vsel %vm658, %v608, %v711
        %v761 = vsel %vm659, %v609, %v712
        %v762 = vsel %vm660, %v610, %v713
        %v763 = vsel %vm661, %v611, %v714
        %v764 = vsel %vm662, %v612, %v715
        %v765 = vsel %vm663, %v613, %v716
        %v766 = vsel %vm664, %v614, %v717
        %v767 = vsel %vm665, %v615, %v718
        %v768 = vsel %vm666, %v616, %v719
        %v769 = vsel %vm667, %v617, %v720
        %v770 = vsel %vm668, %v618, %v721
        %v771 = vsel %vm669, %v619, %v722
        %v772 = vsel %vm670, %v620, %v723
        %v773 = vsel %vm671, %v621, %v724
        %v774 = vsel %vm672, %v622, %v725
        %v775 = vsel %vm673, %v623, %v726
        %v776 = vsel %vm674, %v624, %v727
        %v777 = vsel %vm675, %v625, %v728
        %v778 = vsel %vm676, %v626, %v729
        %v779 = vsel %vm677, %v627, %v730
        %v780 = vsel %vm678, %v628, %v731
        %v781 = vsel %vm679, %v629, %v732
        %v782 = vsel %vm680, %v630, %v733
        %v783 = vsel %vm681, %v631, %v734
        %v784 = vld [vmem:[%s3 + $0x14] sm:$0x1]
        %v785 = vlaneseq
        %v786 = vshrl.u32 %v785, 7
        %v787 = vsub.s32 0, %v786
        %v788 = vrot.slane %v784, %v787
        %v789 = vmul.f32 %v735, %v788
        %v790 = vmul.f32 %v736, %v788
        %v791 = vmul.f32 %v737, %v788
        %v792 = vmul.f32 %v738, %v788
        %v793 = vmul.f32 %v739, %v788
        %v794 = vmul.f32 %v740, %v788
        %v795 = vmul.f32 %v741, %v788
        %v796 = vmul.f32 %v742, %v788
        %v797 = vmul.f32 %v743, %v788
        %v798 = vmul.f32 %v744, %v788
        %v799 = vmul.f32 %v745, %v788
        %v800 = vmul.f32 %v746, %v788
        %v801 = vmul.f32 %v747, %v788
        %v802 = vmul.f32 %v748, %v788
        %v803 = vmul.f32 %v749, %v788
        %v804 = vmul.f32 %v750, %v788
        %v805 = vmul.f32 %v751, %v788
        %v806 = vmul.f32 %v752, %v788
        %v807 = vmul.f32 %v753, %v788
        %v808 = vmul.f32 %v754, %v788
        %v809 = vmul.f32 %v755, %v788
        %v810 = vmul.f32 %v756, %v788
        %v811 = vmul.f32 %v757, %v788
        %v812 = vmul.f32 %v758, %v788
        %v813 = vmul.f32 %v759, %v788
        %v814 = vmul.f32 %v760, %v788
        %v815 = vmul.f32 %v761, %v788
        %v816 = vmul.f32 %v762, %v788
        %v817 = vmul.f32 %v763, %v788
        %v818 = vmul.f32 %v764, %v788
        %v819 = vmul.f32 %v765, %v788
        %v820 = vmul.f32 %v766, %v788
        %v821 = vmul.f32 %v767, %v788
        %v822 = vld [vmem:[%s3 + $0x15] sm:$0x1]
        %v823 = vlaneseq
        %v824 = vshrl.u32 %v823, 7
        %v825 = vsub.s32 0, %v824
        %v826 = vrot.slane %v822, %v825
        %v827 = vmul.f32 %v736, %v826
        %v828 = vmul.f32 %v737, %v826
        %v829 = vmul.f32 %v738, %v826
        %v830 = vmul.f32 %v739, %v826
        %v831 = vmul.f32 %v740, %v826
        %v832 = vmul.f32 %v741, %v826
        %v833 = vmul.f32 %v742, %v826
        %v834 = vmul.f32 %v743, %v826
        %v835 = vmul.f32 %v744, %v826
        %v836 = vmul.f32 %v745, %v826
        %v837 = vmul.f32 %v746, %v826
        %v838 = vmul.f32 %v747, %v826
        %v839 = vmul.f32 %v748, %v826
        %v840 = vmul.f32 %v749, %v826
        %v841 = vmul.f32 %v750, %v826
        %v842 = vmul.f32 %v751, %v826
        %v843 = vmul.f32 %v752, %v826
        %v844 = vmul.f32 %v753, %v826
        %v845 = vmul.f32 %v754, %v826
        %v846 = vmul.f32 %v755, %v826
        %v847 = vmul.f32 %v756, %v826
        %v848 = vmul.f32 %v757, %v826
        %v849 = vmul.f32 %v758, %v826
        %v850 = vmul.f32 %v759, %v826
        %v851 = vmul.f32 %v760, %v826
        %v852 = vmul.f32 %v761, %v826
        %v853 = vmul.f32 %v762, %v826
        %v854 = vmul.f32 %v763, %v826
        %v855 = vmul.f32 %v764, %v826
        %v856 = vmul.f32 %v765, %v826
        %v857 = vmul.f32 %v766, %v826
        %v858 = vmul.f32 %v767, %v826
        %v859 = vmul.f32 %v768, %v826
        %v860 = vadd.f32 %v789, %v827
        %v861 = vadd.f32 %v790, %v828
        %v862 = vadd.f32 %v791, %v829
        %v863 = vadd.f32 %v792, %v830
        %v864 = vadd.f32 %v793, %v831
        %v865 = vadd.f32 %v794, %v832
        %v866 = vadd.f32 %v795, %v833
        %v867 = vadd.f32 %v796, %v834
        %v868 = vadd.f32 %v797, %v835
        %v869 = vadd.f32 %v798, %v836
        %v870 = vadd.f32 %v799, %v837
        %v871 = vadd.f32 %v800, %v838
        %v872 = vadd.f32 %v801, %v839
        %v873 = vadd.f32 %v802, %v840
        %v874 = vadd.f32 %v803, %v841
        %v875 = vadd.f32 %v804, %v842
        %v876 = vadd.f32 %v805, %v843
        %v877 = vadd.f32 %v806, %v844
        %v878 = vadd.f32 %v807, %v845
        %v879 = vadd.f32 %v808, %v846
        %v880 = vadd.f32 %v809, %v847
        %v881 = vadd.f32 %v810, %v848
        %v882 = vadd.f32 %v811, %v849
        %v883 = vadd.f32 %v812, %v850
        %v884 = vadd.f32 %v813, %v851
        %v885 = vadd.f32 %v814, %v852
        %v886 = vadd.f32 %v815, %v853
        %v887 = vadd.f32 %v816, %v854
        %v888 = vadd.f32 %v817, %v855
        %v889 = vadd.f32 %v818, %v856
        %v890 = vadd.f32 %v819, %v857
        %v891 = vadd.f32 %v820, %v858
        %v892 = vadd.f32 %v821, %v859
        %v893 = vld [vmem:[%s3 + $0x16] sm:$0x1]
        %v894 = vlaneseq
        %v895 = vshrl.u32 %v894, 7
        %v896 = vsub.s32 0, %v895
        %v897 = vrot.slane %v893, %v896
        %v898 = vmul.f32 %v737, %v897
        %v899 = vmul.f32 %v738, %v897
        %v900 = vmul.f32 %v739, %v897
        %v901 = vmul.f32 %v740, %v897
        %v902 = vmul.f32 %v741, %v897
        %v903 = vmul.f32 %v742, %v897
        %v904 = vmul.f32 %v743, %v897
        %v905 = vmul.f32 %v744, %v897
        %v906 = vmul.f32 %v745, %v897
        %v907 = vmul.f32 %v746, %v897
        %v908 = vmul.f32 %v747, %v897
        %v909 = vmul.f32 %v748, %v897
        %v910 = vmul.f32 %v749, %v897
        %v911 = vmul.f32 %v750, %v897
        %v912 = vmul.f32 %v751, %v897
        %v913 = vmul.f32 %v752, %v897
        %v914 = vmul.f32 %v753, %v897
        %v915 = vmul.f32 %v754, %v897
        %v916 = vmul.f32 %v755, %v897
        %v917 = vmul.f32 %v756, %v897
        %v918 = vmul.f32 %v757, %v897
        %v919 = vmul.f32 %v758, %v897
        %v920 = vmul.f32 %v759, %v897
        %v921 = vmul.f32 %v760, %v897
        %v922 = vmul.f32 %v761, %v897
        %v923 = vmul.f32 %v762, %v897
        %v924 = vmul.f32 %v763, %v897
        %v925 = vmul.f32 %v764, %v897
        %v926 = vmul.f32 %v765, %v897
        %v927 = vmul.f32 %v766, %v897
        %v928 = vmul.f32 %v767, %v897
        %v929 = vmul.f32 %v768, %v897
        %v930 = vmul.f32 %v769, %v897
        %v931 = vadd.f32 %v860, %v898
        %v932 = vadd.f32 %v861, %v899
        %v933 = vadd.f32 %v862, %v900
        %v934 = vadd.f32 %v863, %v901
        %v935 = vadd.f32 %v864, %v902
        %v936 = vadd.f32 %v865, %v903
        %v937 = vadd.f32 %v866, %v904
        %v938 = vadd.f32 %v867, %v905
        %v939 = vadd.f32 %v868, %v906
        %v940 = vadd.f32 %v869, %v907
        %v941 = vadd.f32 %v870, %v908
        %v942 = vadd.f32 %v871, %v909
        %v943 = vadd.f32 %v872, %v910
        %v944 = vadd.f32 %v873, %v911
        %v945 = vadd.f32 %v874, %v912
        %v946 = vadd.f32 %v875, %v913
        %v947 = vadd.f32 %v876, %v914
        %v948 = vadd.f32 %v877, %v915
        %v949 = vadd.f32 %v878, %v916
        %v950 = vadd.f32 %v879, %v917
        %v951 = vadd.f32 %v880, %v918
        %v952 = vadd.f32 %v881, %v919
        %v953 = vadd.f32 %v882, %v920
        %v954 = vadd.f32 %v883, %v921
        %v955 = vadd.f32 %v884, %v922
        %v956 = vadd.f32 %v885, %v923
        %v957 = vadd.f32 %v886, %v924
        %v958 = vadd.f32 %v887, %v925
        %v959 = vadd.f32 %v888, %v926
        %v960 = vadd.f32 %v889, %v927
        %v961 = vadd.f32 %v890, %v928
        %v962 = vadd.f32 %v891, %v929
        %v963 = vadd.f32 %v892, %v930
        %v964 = vld [vmem:[%s3 + $0x17] sm:$0x1]
        %v965 = vlaneseq
        %v966 = vshrl.u32 %v965, 7
        %v967 = vsub.s32 0, %v966
        %v968 = vrot.slane %v964, %v967
        %v969 = vmul.f32 %v742, %v968
        %v970 = vmul.f32 %v743, %v968
        %v971 = vmul.f32 %v744, %v968
        %v972 = vmul.f32 %v745, %v968
        %v973 = vmul.f32 %v746, %v968
        %v974 = vmul.f32 %v747, %v968
        %v975 = vmul.f32 %v748, %v968
        %v976 = vmul.f32 %v749, %v968
        %v977 = vmul.f32 %v750, %v968
        %v978 = vmul.f32 %v751, %v968
        %v979 = vmul.f32 %v752, %v968
        %v980 = vmul.f32 %v753, %v968
        %v981 = vmul.f32 %v754, %v968
        %v982 = vmul.f32 %v755, %v968
        %v983 = vmul.f32 %v756, %v968
        %v984 = vmul.f32 %v757, %v968
        %v985 = vmul.f32 %v758, %v968
        %v986 = vmul.f32 %v759, %v968
        %v987 = vmul.f32 %v760, %v968
        %v988 = vmul.f32 %v761, %v968
        %v989 = vmul.f32 %v762, %v968
        %v990 = vmul.f32 %v763, %v968
        %v991 = vmul.f32 %v764, %v968
        %v992 = vmul.f32 %v765, %v968
        %v993 = vmul.f32 %v766, %v968
        %v994 = vmul.f32 %v767, %v968
        %v995 = vmul.f32 %v768, %v968
        %v996 = vmul.f32 %v769, %v968
        %v997 = vmul.f32 %v770, %v968
        %v998 = vmul.f32 %v771, %v968
        %v999 = vmul.f32 %v772, %v968
        %v1000 = vmul.f32 %v773, %v968
        %v1001 = vmul.f32 %v774, %v968
        %v1002 = vadd.f32 %v931, %v969
        %v1003 = vadd.f32 %v932, %v970
        %v1004 = vadd.f32 %v933, %v971
        %v1005 = vadd.f32 %v934, %v972
        %v1006 = vadd.f32 %v935, %v973
        %v1007 = vadd.f32 %v936, %v974
        %v1008 = vadd.f32 %v937, %v975
        %v1009 = vadd.f32 %v938, %v976
        %v1010 = vadd.f32 %v939, %v977
        %v1011 = vadd.f32 %v940, %v978
        %v1012 = vadd.f32 %v941, %v979
        %v1013 = vadd.f32 %v942, %v980
        %v1014 = vadd.f32 %v943, %v981
        %v1015 = vadd.f32 %v944, %v982
        %v1016 = vadd.f32 %v945, %v983
        %v1017 = vadd.f32 %v946, %v984
        %v1018 = vadd.f32 %v947, %v985
        %v1019 = vadd.f32 %v948, %v986
        %v1020 = vadd.f32 %v949, %v987
        %v1021 = vadd.f32 %v950, %v988
        %v1022 = vadd.f32 %v951, %v989
        %v1023 = vadd.f32 %v952, %v990
        %v1024 = vadd.f32 %v953, %v991
        %v1025 = vadd.f32 %v954, %v992
        %v1026 = vadd.f32 %v955, %v993
        %v1027 = vadd.f32 %v956, %v994
        %v1028 = vadd.f32 %v957, %v995
        %v1029 = vadd.f32 %v958, %v996
        %v1030 = vadd.f32 %v959, %v997
        %v1031 = vadd.f32 %v960, %v998
        %v1032 = vadd.f32 %v961, %v999
        %v1033 = vadd.f32 %v962, %v1000
        %v1034 = vadd.f32 %v963, %v1001
        %v1035 = vld [vmem:[%s3 + $0x18] sm:$0x1]
        %v1036 = vlaneseq
        %v1037 = vshrl.u32 %v1036, 7
        %v1038 = vsub.s32 0, %v1037
        %v1039 = vrot.slane %v1035, %v1038
        %v1040 = vmul.f32 %v743, %v1039
        %v1041 = vmul.f32 %v744, %v1039
        %v1042 = vmul.f32 %v745, %v1039
        %v1043 = vmul.f32 %v746, %v1039
        %v1044 = vmul.f32 %v747, %v1039
        %v1045 = vmul.f32 %v748, %v1039
        %v1046 = vmul.f32 %v749, %v1039
        %v1047 = vmul.f32 %v750, %v1039
        %v1048 = vmul.f32 %v751, %v1039
        %v1049 = vmul.f32 %v752, %v1039
        %v1050 = vmul.f32 %v753, %v1039
        %v1051 = vmul.f32 %v754, %v1039
        %v1052 = vmul.f32 %v755, %v1039
        %v1053 = vmul.f32 %v756, %v1039
        %v1054 = vmul.f32 %v757, %v1039
        %v1055 = vmul.f32 %v758, %v1039
        %v1056 = vmul.f32 %v759, %v1039
        %v1057 = vmul.f32 %v760, %v1039
        %v1058 = vmul.f32 %v761, %v1039
        %v1059 = vmul.f32 %v762, %v1039
        %v1060 = vmul.f32 %v763, %v1039
        %v1061 = vmul.f32 %v764, %v1039
        %v1062 = vmul.f32 %v765, %v1039
        %v1063 = vmul.f32 %v766, %v1039
        %v1064 = vmul.f32 %v767, %v1039
        %v1065 = vmul.f32 %v768, %v1039
        %v1066 = vmul.f32 %v769, %v1039
        %v1067 = vmul.f32 %v770, %v1039
        %v1068 = vmul.f32 %v771, %v1039
        %v1069 = vmul.f32 %v772, %v1039
        %v1070 = vmul.f32 %v773, %v1039
        %v1071 = vmul.f32 %v774, %v1039
        %v1072 = vmul.f32 %v775, %v1039
        %v1073 = vadd.f32 %v1002, %v1040
        %v1074 = vadd.f32 %v1003, %v1041
        %v1075 = vadd.f32 %v1004, %v1042
        %v1076 = vadd.f32 %v1005, %v1043
        %v1077 = vadd.f32 %v1006, %v1044
        %v1078 = vadd.f32 %v1007, %v1045
        %v1079 = vadd.f32 %v1008, %v1046
        %v1080 = vadd.f32 %v1009, %v1047
        %v1081 = vadd.f32 %v1010, %v1048
        %v1082 = vadd.f32 %v1011, %v1049
        %v1083 = vadd.f32 %v1012, %v1050
        %v1084 = vadd.f32 %v1013, %v1051
        %v1085 = vadd.f32 %v1014, %v1052
        %v1086 = vadd.f32 %v1015, %v1053
        %v1087 = vadd.f32 %v1016, %v1054
        %v1088 = vadd.f32 %v1017, %v1055
        %v1089 = vadd.f32 %v1018, %v1056
        %v1090 = vadd.f32 %v1019, %v1057
        %v1091 = vadd.f32 %v1020, %v1058
        %v1092 = vadd.f32 %v1021, %v1059
        %v1093 = vadd.f32 %v1022, %v1060
        %v1094 = vadd.f32 %v1023, %v1061
        %v1095 = vadd.f32 %v1024, %v1062
        %v1096 = vadd.f32 %v1025, %v1063
        %v1097 = vadd.f32 %v1026, %v1064
        %v1098 = vadd.f32 %v1027, %v1065
        %v1099 = vadd.f32 %v1028, %v1066
        %v1100 = vadd.f32 %v1029, %v1067
        %v1101 = vadd.f32 %v1030, %v1068
        %v1102 = vadd.f32 %v1031, %v1069
        %v1103 = vadd.f32 %v1032, %v1070
        %v1104 = vadd.f32 %v1033, %v1071
        %v1105 = vadd.f32 %v1034, %v1072
        %v1106 = vld [vmem:[%s3 + $0x19] sm:$0x1]
        %v1107 = vlaneseq
        %v1108 = vshrl.u32 %v1107, 7
        %v1109 = vsub.s32 0, %v1108
        %v1110 = vrot.slane %v1106, %v1109
        %v1111 = vmul.f32 %v744, %v1110
        %v1112 = vmul.f32 %v745, %v1110
        %v1113 = vmul.f32 %v746, %v1110
        %v1114 = vmul.f32 %v747, %v1110
        %v1115 = vmul.f32 %v748, %v1110
        %v1116 = vmul.f32 %v749, %v1110
        %v1117 = vmul.f32 %v750, %v1110
        %v1118 = vmul.f32 %v751, %v1110
        %v1119 = vmul.f32 %v752, %v1110
        %v1120 = vmul.f32 %v753, %v1110
        %v1121 = vmul.f32 %v754, %v1110
        %v1122 = vmul.f32 %v755, %v1110
        %v1123 = vmul.f32 %v756, %v1110
        %v1124 = vmul.f32 %v757, %v1110
        %v1125 = vmul.f32 %v758, %v1110
        %v1126 = vmul.f32 %v759, %v1110
        %v1127 = vmul.f32 %v760, %v1110
        %v1128 = vmul.f32 %v761, %v1110
        %v1129 = vmul.f32 %v762, %v1110
        %v1130 = vmul.f32 %v763, %v1110
        %v1131 = vmul.f32 %v764, %v1110
        %v1132 = vmul.f32 %v765, %v1110
        %v1133 = vmul.f32 %v766, %v1110
        %v1134 = vmul.f32 %v767, %v1110
        %v1135 = vmul.f32 %v768, %v1110
        %v1136 = vmul.f32 %v769, %v1110
        %v1137 = vmul.f32 %v770, %v1110
        %v1138 = vmul.f32 %v771, %v1110
        %v1139 = vmul.f32 %v772, %v1110
        %v1140 = vmul.f32 %v773, %v1110
        %v1141 = vmul.f32 %v774, %v1110
        %v1142 = vmul.f32 %v775, %v1110
        %v1143 = vmul.f32 %v776, %v1110
        %v1144 = vadd.f32 %v1073, %v1111
        %v1145 = vadd.f32 %v1074, %v1112
        %v1146 = vadd.f32 %v1075, %v1113
        %v1147 = vadd.f32 %v1076, %v1114
        %v1148 = vadd.f32 %v1077, %v1115
        %v1149 = vadd.f32 %v1078, %v1116
        %v1150 = vadd.f32 %v1079, %v1117
        %v1151 = vadd.f32 %v1080, %v1118
        %v1152 = vadd.f32 %v1081, %v1119
        %v1153 = vadd.f32 %v1082, %v1120
        %v1154 = vadd.f32 %v1083, %v1121
        %v1155 = vadd.f32 %v1084, %v1122
        %v1156 = vadd.f32 %v1085, %v1123
        %v1157 = vadd.f32 %v1086, %v1124
        %v1158 = vadd.f32 %v1087, %v1125
        %v1159 = vadd.f32 %v1088, %v1126
        %v1160 = vadd.f32 %v1089, %v1127
        %v1161 = vadd.f32 %v1090, %v1128
        %v1162 = vadd.f32 %v1091, %v1129
        %v1163 = vadd.f32 %v1092, %v1130
        %v1164 = vadd.f32 %v1093, %v1131
        %v1165 = vadd.f32 %v1094, %v1132
        %v1166 = vadd.f32 %v1095, %v1133
        %v1167 = vadd.f32 %v1096, %v1134
        %v1168 = vadd.f32 %v1097, %v1135
        %v1169 = vadd.f32 %v1098, %v1136
        %v1170 = vadd.f32 %v1099, %v1137
        %v1171 = vadd.f32 %v1100, %v1138
        %v1172 = vadd.f32 %v1101, %v1139
        %v1173 = vadd.f32 %v1102, %v1140
        %v1174 = vadd.f32 %v1103, %v1141
        %v1175 = vadd.f32 %v1104, %v1142
        %v1176 = vadd.f32 %v1105, %v1143
        %v1177 = vld [vmem:[%s3 + $0x1a] sm:$0x1]
        %v1178 = vlaneseq
        %v1179 = vshrl.u32 %v1178, 7
        %v1180 = vsub.s32 0, %v1179
        %v1181 = vrot.slane %v1177, %v1180
        %v1182 = vmul.f32 %v749, %v1181
        %v1183 = vmul.f32 %v750, %v1181
        %v1184 = vmul.f32 %v751, %v1181
        %v1185 = vmul.f32 %v752, %v1181
        %v1186 = vmul.f32 %v753, %v1181
        %v1187 = vmul.f32 %v754, %v1181
        %v1188 = vmul.f32 %v755, %v1181
        %v1189 = vmul.f32 %v756, %v1181
        %v1190 = vmul.f32 %v757, %v1181
        %v1191 = vmul.f32 %v758, %v1181
        %v1192 = vmul.f32 %v759, %v1181
        %v1193 = vmul.f32 %v760, %v1181
        %v1194 = vmul.f32 %v761, %v1181
        %v1195 = vmul.f32 %v762, %v1181
        %v1196 = vmul.f32 %v763, %v1181
        %v1197 = vmul.f32 %v764, %v1181
        %v1198 = vmul.f32 %v765, %v1181
        %v1199 = vmul.f32 %v766, %v1181
        %v1200 = vmul.f32 %v767, %v1181
        %v1201 = vmul.f32 %v768, %v1181
        %v1202 = vmul.f32 %v769, %v1181
        %v1203 = vmul.f32 %v770, %v1181
        %v1204 = vmul.f32 %v771, %v1181
        %v1205 = vmul.f32 %v772, %v1181
        %v1206 = vmul.f32 %v773, %v1181
        %v1207 = vmul.f32 %v774, %v1181
        %v1208 = vmul.f32 %v775, %v1181
        %v1209 = vmul.f32 %v776, %v1181
        %v1210 = vmul.f32 %v777, %v1181
        %v1211 = vmul.f32 %v778, %v1181
        %v1212 = vmul.f32 %v779, %v1181
        %v1213 = vmul.f32 %v780, %v1181
        %v1214 = vmul.f32 %v781, %v1181
        %v1215 = vadd.f32 %v1144, %v1182
        %v1216 = vadd.f32 %v1145, %v1183
        %v1217 = vadd.f32 %v1146, %v1184
        %v1218 = vadd.f32 %v1147, %v1185
        %v1219 = vadd.f32 %v1148, %v1186
        %v1220 = vadd.f32 %v1149, %v1187
        %v1221 = vadd.f32 %v1150, %v1188
        %v1222 = vadd.f32 %v1151, %v1189
        %v1223 = vadd.f32 %v1152, %v1190
        %v1224 = vadd.f32 %v1153, %v1191
        %v1225 = vadd.f32 %v1154, %v1192
        %v1226 = vadd.f32 %v1155, %v1193
        %v1227 = vadd.f32 %v1156, %v1194
        %v1228 = vadd.f32 %v1157, %v1195
        %v1229 = vadd.f32 %v1158, %v1196
        %v1230 = vadd.f32 %v1159, %v1197
        %v1231 = vadd.f32 %v1160, %v1198
        %v1232 = vadd.f32 %v1161, %v1199
        %v1233 = vadd.f32 %v1162, %v1200
        %v1234 = vadd.f32 %v1163, %v1201
        %v1235 = vadd.f32 %v1164, %v1202
        %v1236 = vadd.f32 %v1165, %v1203
        %v1237 = vadd.f32 %v1166, %v1204
        %v1238 = vadd.f32 %v1167, %v1205
        %v1239 = vadd.f32 %v1168, %v1206
        %v1240 = vadd.f32 %v1169, %v1207
        %v1241 = vadd.f32 %v1170, %v1208
        %v1242 = vadd.f32 %v1171, %v1209
        %v1243 = vadd.f32 %v1172, %v1210
        %v1244 = vadd.f32 %v1173, %v1211
        %v1245 = vadd.f32 %v1174, %v1212
        %v1246 = vadd.f32 %v1175, %v1213
        %v1247 = vadd.f32 %v1176, %v1214
        %v1248 = vld [vmem:[%s3 + $0x1b] sm:$0x1]
        %v1249 = vlaneseq
        %v1250 = vshrl.u32 %v1249, 7
        %v1251 = vsub.s32 0, %v1250
        %v1252 = vrot.slane %v1248, %v1251
        %v1253 = vmul.f32 %v750, %v1252
        %v1254 = vmul.f32 %v751, %v1252
        %v1255 = vmul.f32 %v752, %v1252
        %v1256 = vmul.f32 %v753, %v1252
        %v1257 = vmul.f32 %v754, %v1252
        %v1258 = vmul.f32 %v755, %v1252
        %v1259 = vmul.f32 %v756, %v1252
        %v1260 = vmul.f32 %v757, %v1252
        %v1261 = vmul.f32 %v758, %v1252
        %v1262 = vmul.f32 %v759, %v1252
        %v1263 = vmul.f32 %v760, %v1252
        %v1264 = vmul.f32 %v761, %v1252
        %v1265 = vmul.f32 %v762, %v1252
        %v1266 = vmul.f32 %v763, %v1252
        %v1267 = vmul.f32 %v764, %v1252
        %v1268 = vmul.f32 %v765, %v1252
        %v1269 = vmul.f32 %v766, %v1252
        %v1270 = vmul.f32 %v767, %v1252
        %v1271 = vmul.f32 %v768, %v1252
        %v1272 = vmul.f32 %v769, %v1252
        %v1273 = vmul.f32 %v770, %v1252
        %v1274 = vmul.f32 %v771, %v1252
        %v1275 = vmul.f32 %v772, %v1252
        %v1276 = vmul.f32 %v773, %v1252
        %v1277 = vmul.f32 %v774, %v1252
        %v1278 = vmul.f32 %v775, %v1252
        %v1279 = vmul.f32 %v776, %v1252
        %v1280 = vmul.f32 %v777, %v1252
        %v1281 = vmul.f32 %v778, %v1252
        %v1282 = vmul.f32 %v779, %v1252
        %v1283 = vmul.f32 %v780, %v1252
        %v1284 = vmul.f32 %v781, %v1252
        %v1285 = vmul.f32 %v782, %v1252
        %v1286 = vadd.f32 %v1215, %v1253
        %v1287 = vadd.f32 %v1216, %v1254
        %v1288 = vadd.f32 %v1217, %v1255
        %v1289 = vadd.f32 %v1218, %v1256
        %v1290 = vadd.f32 %v1219, %v1257
        %v1291 = vadd.f32 %v1220, %v1258
        %v1292 = vadd.f32 %v1221, %v1259
        %v1293 = vadd.f32 %v1222, %v1260
        %v1294 = vadd.f32 %v1223, %v1261
        %v1295 = vadd.f32 %v1224, %v1262
        %v1296 = vadd.f32 %v1225, %v1263
        %v1297 = vadd.f32 %v1226, %v1264
        %v1298 = vadd.f32 %v1227, %v1265
        %v1299 = vadd.f32 %v1228, %v1266
        %v1300 = vadd.f32 %v1229, %v1267
        %v1301 = vadd.f32 %v1230, %v1268
        %v1302 = vadd.f32 %v1231, %v1269
        %v1303 = vadd.f32 %v1232, %v1270
        %v1304 = vadd.f32 %v1233, %v1271
        %v1305 = vadd.f32 %v1234, %v1272
        %v1306 = vadd.f32 %v1235, %v1273
        %v1307 = vadd.f32 %v1236, %v1274
        %v1308 = vadd.f32 %v1237, %v1275
        %v1309 = vadd.f32 %v1238, %v1276
        %v1310 = vadd.f32 %v1239, %v1277
        %v1311 = vadd.f32 %v1240, %v1278
        %v1312 = vadd.f32 %v1241, %v1279
        %v1313 = vadd.f32 %v1242, %v1280
        %v1314 = vadd.f32 %v1243, %v1281
        %v1315 = vadd.f32 %v1244, %v1282
        %v1316 = vadd.f32 %v1245, %v1283
        %v1317 = vadd.f32 %v1246, %v1284
        %v1318 = vadd.f32 %v1247, %v1285
        %v1319 = vld [vmem:[%s3 + $0x1c] sm:$0x1]
        %v1320 = vlaneseq
        %v1321 = vshrl.u32 %v1320, 7
        %v1322 = vsub.s32 0, %v1321
        %v1323 = vrot.slane %v1319, %v1322
        %v1324 = vmul.f32 %v751, %v1323
        %v1325 = vmul.f32 %v752, %v1323
        %v1326 = vmul.f32 %v753, %v1323
        %v1327 = vmul.f32 %v754, %v1323
        %v1328 = vmul.f32 %v755, %v1323
        %v1329 = vmul.f32 %v756, %v1323
        %v1330 = vmul.f32 %v757, %v1323
        %v1331 = vmul.f32 %v758, %v1323
        %v1332 = vmul.f32 %v759, %v1323
        %v1333 = vmul.f32 %v760, %v1323
        %v1334 = vmul.f32 %v761, %v1323
        %v1335 = vmul.f32 %v762, %v1323
        %v1336 = vmul.f32 %v763, %v1323
        %v1337 = vmul.f32 %v764, %v1323
        %v1338 = vmul.f32 %v765, %v1323
        %v1339 = vmul.f32 %v766, %v1323
        %v1340 = vmul.f32 %v767, %v1323
        %v1341 = vmul.f32 %v768, %v1323
        %v1342 = vmul.f32 %v769, %v1323
        %v1343 = vmul.f32 %v770, %v1323
        %v1344 = vmul.f32 %v771, %v1323
        %v1345 = vmul.f32 %v772, %v1323
        %v1346 = vmul.f32 %v773, %v1323
        %v1347 = vmul.f32 %v774, %v1323
        %v1348 = vmul.f32 %v775, %v1323
        %v1349 = vmul.f32 %v776, %v1323
        %v1350 = vmul.f32 %v777, %v1323
        %v1351 = vmul.f32 %v778, %v1323
        %v1352 = vmul.f32 %v779, %v1323
        %v1353 = vmul.f32 %v780, %v1323
        %v1354 = vmul.f32 %v781, %v1323
        %v1355 = vmul.f32 %v782, %v1323
        %v1356 = vmul.f32 %v783, %v1323
        %v1357 = vadd.f32 %v1286, %v1324
        %v1358 = vadd.f32 %v1287, %v1325
        %v1359 = vadd.f32 %v1288, %v1326
        %v1360 = vadd.f32 %v1289, %v1327
        %v1361 = vadd.f32 %v1290, %v1328
        %v1362 = vadd.f32 %v1291, %v1329
        %v1363 = vadd.f32 %v1292, %v1330
        %v1364 = vadd.f32 %v1293, %v1331
        %v1365 = vadd.f32 %v1294, %v1332
        %v1366 = vadd.f32 %v1295, %v1333
        %v1367 = vadd.f32 %v1296, %v1334
        %v1368 = vadd.f32 %v1297, %v1335
        %v1369 = vadd.f32 %v1298, %v1336
        %v1370 = vadd.f32 %v1299, %v1337
        %v1371 = vadd.f32 %v1300, %v1338
        %v1372 = vadd.f32 %v1301, %v1339
        %v1373 = vadd.f32 %v1302, %v1340
        %v1374 = vadd.f32 %v1303, %v1341
        %v1375 = vadd.f32 %v1304, %v1342
        %v1376 = vadd.f32 %v1305, %v1343
        %v1377 = vadd.f32 %v1306, %v1344
        %v1378 = vadd.f32 %v1307, %v1345
        %v1379 = vadd.f32 %v1308, %v1346
        %v1380 = vadd.f32 %v1309, %v1347
        %v1381 = vadd.f32 %v1310, %v1348
        %v1382 = vadd.f32 %v1311, %v1349
        %v1383 = vadd.f32 %v1312, %v1350
        %v1384 = vadd.f32 %v1313, %v1351
        %v1385 = vadd.f32 %v1314, %v1352
        %v1386 = vadd.f32 %v1315, %v1353
        %v1387 = vadd.f32 %v1316, %v1354
        %v1388 = vadd.f32 %v1317, %v1355
        %v1389 = vadd.f32 %v1318, %v1356
        %v1390 = vld [vmem:[#allocation2] sm:$0xff]
        %v1391 = vld [vmem:[#allocation2 + $0x8] sm:$0xff]
        %v1392 = vld [vmem:[#allocation2 + $0x10] sm:$0xff]
        %v1393 = vld [vmem:[#allocation2 + $0x18] sm:$0xff]
        %v1394 = vld [vmem:[#allocation2 + $0x20] sm:$0xff]
        %v1395 = vld [vmem:[#allocation2 + $0x28] sm:$0xff]
        %v1396 = vld [vmem:[#allocation2 + $0x30] sm:$0xff]
        %v1397 = vld [vmem:[#allocation2 + $0x38] sm:$0xff]
        %v1398 = vld [vmem:[#allocation2 + $0x40] sm:$0xff]
        %v1399 = vld [vmem:[#allocation2 + $0x48] sm:$0xff]
        %v1400 = vld [vmem:[#allocation2 + $0x50] sm:$0xff]
        %v1401 = vld [vmem:[#allocation2 + $0x58] sm:$0xff]
        %v1402 = vld [vmem:[#allocation2 + $0x60] sm:$0xff]
        %v1403 = vld [vmem:[#allocation2 + $0x68] sm:$0xff]
        %v1404 = vld [vmem:[#allocation2 + $0x70] sm:$0xff]
        %v1405 = vld [vmem:[#allocation2 + $0x78] sm:$0xff]
        %v1406 = vld [vmem:[%s3 + $0x3] sm:$0x1]
        %v1407 = vlaneseq
        %v1408 = vshrl.u32 %v1407, 7
        %v1409 = vsub.s32 0, %v1408
        %v1410 = vrot.slane %v1406, %v1409
        %1411 = vmatprep.subr.mxu0 0.0
        %1412 = vmatpush1.msra.mxu0 %v1390
        %1413 = vmatprep.subr.mxu0 0.0
        %1414 = vmatpush1.msra.mxu0 %v1391
        %1415 = vmatprep.subr.mxu0 0.0
        %1416 = vmatpush1.msra.mxu0 %v1392
        %1417 = vmatprep.subr.mxu0 0.0
        %1418 = vmatpush1.msra.mxu0 %v1393
        %1419 = vmatprep.subr.mxu0 0.0
        %1420 = vmatpush1.msra.mxu0 %v1394
        %1421 = vmatprep.subr.mxu0 0.0
        %1422 = vmatpush1.msra.mxu0 %v1395
        %1423 = vmatprep.subr.mxu0 0.0
        %1424 = vmatpush1.msra.mxu0 %v1396
        %1425 = vmatprep.subr.mxu0 0.0
        %1426 = vmatpush1.msra.mxu0 %v1397
        %1427 = vmatprep.subr.mxu0 0.0
        %1428 = vmatpush1.msra.mxu0 %v1398
        %1429 = vmatprep.subr.mxu0 0.0
        %1430 = vmatpush1.msra.mxu0 %v1399
        %1431 = vmatprep.subr.mxu0 0.0
        %1432 = vmatpush1.msra.mxu0 %v1400
        %1433 = vmatprep.subr.mxu0 0.0
        %1434 = vmatpush1.msra.mxu0 %v1401
        %1435 = vmatprep.subr.mxu0 0.0
        %1436 = vmatpush1.msra.mxu0 %v1402
        %1437 = vmatprep.subr.mxu0 0.0
        %1438 = vmatpush1.msra.mxu0 %v1403
        %1439 = vmatprep.subr.mxu0 0.0
        %1440 = vmatpush1.msra.mxu0 %v1404
        %1441 = vmatprep.subr.mxu0 0.0
        %1442 = vmatpush1.msra.mxu0 %v1405
        %1443 = vmatprep.subr.mxu0 0.0
        %1444 = vmatpush1.msra.mxu0 0.0
        %1445 = vmatprep.subr.mxu0 0.0
        %1446 = vmatpush1.msra.mxu0 0.0
        %1447 = vmatprep.subr.mxu0 0.0
        %1448 = vmatpush1.msra.mxu0 0.0
        %1449 = vmatprep.subr.mxu0 0.0
        %1450 = vmatpush1.msra.mxu0 0.0
        %1451 = vmatprep.subr.mxu0 0.0
        %1452 = vmatpush1.msra.mxu0 0.0
        %1453 = vmatprep.subr.mxu0 0.0
        %1454 = vmatpush1.msra.mxu0 0.0
        %1455 = vmatprep.subr.mxu0 0.0
        %1456 = vmatpush1.msra.mxu0 0.0
        %1457 = vmatprep.subr.mxu0 0.0
        %1458 = vmatpush1.msra.mxu0 0.0
        %1459 = vmatprep.subr.mxu0 0.0
        %1460 = vmatpush1.msra.mxu0 0.0
        %1461 = vmatprep.subr.mxu0 0.0
        %1462 = vmatpush1.msra.mxu0 0.0
        %1463 = vmatprep.subr.mxu0 0.0
        %1464 = vmatpush1.msra.mxu0 0.0
        %1465 = vmatprep.subr.mxu0 0.0
        %1466 = vmatpush1.msra.mxu0 0.0
        %1467 = vmatprep.subr.mxu0 0.0
        %1468 = vmatpush1.msra.mxu0 0.0
        %1469 = vmatprep.subr.mxu0 0.0
        %1470 = vmatpush1.msra.mxu0 0.0
        %1471 = vmatprep.subr.mxu0 0.0
        %1472 = vmatpush1.msra.mxu0 0.0
        %1473 = vmatprep.subr.mxu0 0.0
        %1474 = vmatpush1.msra.mxu0 0.0
        %1475 = vmatprep.mubr.f32.mxu0 0.0
        %1476 = vmatmul.mubr.f32.gmra.mrb[0].mxu0 %v1357
        %v1477 = vpop.f32.mrb[0].mxu0
        %v1478 = vadd.f32 %v1410, %v1477
        %v1479 = vpop.f32.mrb[0].mxu0
        %1480 = vmatprep.mubr.f32.mxu0 0.0
        %1481 = vmatmul.mubr.f32.gmra.mrb[0].mxu0 %v1358
        %v1482 = vpop.f32.mrb[0].mxu0
        %v1483 = vadd.f32 %v1410, %v1482
        %v1484 = vpop.f32.mrb[0].mxu0
        %1485 = vmatprep.mubr.f32.mxu0 0.0
        %1486 = vmatmul.mubr.f32.gmra.mrb[0].mxu0 %v1359
        %v1487 = vpop.f32.mrb[0].mxu0
        %v1488 = vadd.f32 %v1410, %v1487
        %v1489 = vpop.f32.mrb[0].mxu0
        %1490 = vmatprep.mubr.f32.mxu0 0.0
        %1491 = vmatmul.mubr.f32.gmra.mrb[0].mxu0 %v1360
        %v1492 = vpop.f32.mrb[0].mxu0
        %v1493 = vadd.f32 %v1410, %v1492
        %v1494 = vpop.f32.mrb[0].mxu0
        %1495 = vmatprep.mubr.f32.mxu0 0.0
        %1496 = vmatmul.mubr.f32.gmra.mrb[0].mxu0 %v1361
        %v1497 = vpop.f32.mrb[0].mxu0
        %v1498 = vadd.f32 %v1410, %v1497
        %v1499 = vpop.f32.mrb[0].mxu0
        %1500 = vmatprep.mubr.f32.mxu0 0.0
        %1501 = vmatmul.mubr.f32.gmra.mrb[0].mxu0 %v1362
        %v1502 = vpop.f32.mrb[0].mxu0
        %v1503 = vadd.f32 %v1410, %v1502
        %v1504 = vpop.f32.mrb[0].mxu0
        %1505 = vmatprep.mubr.f32.mxu0 0.0
        %1506 = vmatmul.mubr.f32.gmra.mrb[0].mxu0 %v1363
        %v1507 = vpop.f32.mrb[0].mxu0
        %v1508 = vadd.f32 %v1410, %v1507
        %v1509 = vpop.f32.mrb[0].mxu0
        %1510 = vmatprep.mubr.f32.mxu0 0.0
        %1511 = vmatmul.mubr.f32.gmra.mrb[0].mxu0 %v1364
        %v1512 = vpop.f32.mrb[0].mxu0
        %v1513 = vadd.f32 %v1410, %v1512
        %v1514 = vpop.f32.mrb[0].mxu0
        %1515 = vmatprep.mubr.f32.mxu0 0.0
        %1516 = vmatmul.mubr.f32.gmra.mrb[0].mxu0 %v1365
        %v1517 = vpop.f32.mrb[0].mxu0
        %v1518 = vadd.f32 %v1410, %v1517
        %v1519 = vpop.f32.mrb[0].mxu0
        %1520 = vmatprep.mubr.f32.mxu0 0.0
        %1521 = vmatmul.mubr.f32.gmra.mrb[0].mxu0 %v1366
        %v1522 = vpop.f32.mrb[0].mxu0
        %v1523 = vadd.f32 %v1410, %v1522
        %v1524 = vpop.f32.mrb[0].mxu0
        %1525 = vmatprep.mubr.f32.mxu0 0.0
        %1526 = vmatmul.mubr.f32.gmra.mrb[0].mxu0 %v1367
        %v1527 = vpop.f32.mrb[0].mxu0
        %v1528 = vadd.f32 %v1410, %v1527
        %v1529 = vpop.f32.mrb[0].mxu0
        %1530 = vmatprep.mubr.f32.mxu0 0.0
        %1531 = vmatmul.mubr.f32.gmra.mrb[0].mxu0 %v1368
        %v1532 = vpop.f32.mrb[0].mxu0
        %v1533 = vadd.f32 %v1410, %v1532
        %v1534 = vpop.f32.mrb[0].mxu0
        %1535 = vmatprep.mubr.f32.mxu0 0.0
        %1536 = vmatmul.mubr.f32.gmra.mrb[0].mxu0 %v1369
        %v1537 = vpop.f32.mrb[0].mxu0
        %v1538 = vadd.f32 %v1410, %v1537
        %v1539 = vpop.f32.mrb[0].mxu0
        %1540 = vmatprep.mubr.f32.mxu0 0.0
        %1541 = vmatmul.mubr.f32.gmra.mrb[0].mxu0 %v1370
        %v1542 = vpop.f32.mrb[0].mxu0
        %v1543 = vadd.f32 %v1410, %v1542
        %v1544 = vpop.f32.mrb[0].mxu0
        %1545 = vmatprep.mubr.f32.mxu0 0.0
        %1546 = vmatmul.mubr.f32.gmra.mrb[0].mxu0 %v1371
        %v1547 = vpop.f32.mrb[0].mxu0
        %v1548 = vadd.f32 %v1410, %v1547
        %v1549 = vpop.f32.mrb[0].mxu0
        %1550 = vmatprep.mubr.f32.mxu0 0.0
        %1551 = vmatmul.mubr.f32.gmra.mrb[0].mxu0 %v1372
        %v1552 = vpop.f32.mrb[0].mxu0
        %v1553 = vadd.f32 %v1410, %v1552
        %v1554 = vpop.f32.mrb[0].mxu0
        %1555 = vmatprep.mubr.f32.mxu0 0.0
        %1556 = vmatmul.mubr.f32.gmra.mrb[0].mxu0 %v1373
        %v1557 = vpop.f32.mrb[0].mxu0
        %v1558 = vadd.f32 %v1410, %v1557
        %v1559 = vpop.f32.mrb[0].mxu0
        %1560 = vmatprep.mubr.f32.mxu0 0.0
        %1561 = vmatmul.mubr.f32.gmra.mrb[0].mxu0 %v1374
        %v1562 = vpop.f32.mrb[0].mxu0
        %v1563 = vadd.f32 %v1410, %v1562
        %v1564 = vpop.f32.mrb[0].mxu0
        %1565 = vmatprep.mubr.f32.mxu0 0.0
        %1566 = vmatmul.mubr.f32.gmra.mrb[0].mxu0 %v1375
        %v1567 = vpop.f32.mrb[0].mxu0
        %v1568 = vadd.f32 %v1410, %v1567
        %v1569 = vpop.f32.mrb[0].mxu0
        %1570 = vmatprep.mubr.f32.mxu0 0.0
        %1571 = vmatmul.mubr.f32.gmra.mrb[0].mxu0 %v1376
        %v1572 = vpop.f32.mrb[0].mxu0
        %v1573 = vadd.f32 %v1410, %v1572
        %v1574 = vpop.f32.mrb[0].mxu0
        %1575 = vmatprep.mubr.f32.mxu0 0.0
        %1576 = vmatmul.mubr.f32.gmra.mrb[0].mxu0 %v1377
        %v1577 = vpop.f32.mrb[0].mxu0
        %v1578 = vadd.f32 %v1410, %v1577
        %v1579 = vpop.f32.mrb[0].mxu0
        %1580 = vmatprep.mubr.f32.mxu0 0.0
        %1581 = vmatmul.mubr.f32.gmra.mrb[0].mxu0 %v1378
        %v1582 = vpop.f32.mrb[0].mxu0
        %v1583 = vadd.f32 %v1410, %v1582
        %v1584 = vpop.f32.mrb[0].mxu0
        %1585 = vmatprep.mubr.f32.mxu0 0.0
        %1586 = vmatmul.mubr.f32.gmra.mrb[0].mxu0 %v1379
        %v1587 = vpop.f32.mrb[0].mxu0
        %v1588 = vadd.f32 %v1410, %v1587
        %v1589 = vpop.f32.mrb[0].mxu0
        %1590 = vmatprep.mubr.f32.mxu0 0.0
        %1591 = vmatmul.mubr.f32.gmra.mrb[0].mxu0 %v1380
        %v1592 = vpop.f32.mrb[0].mxu0
        %v1593 = vadd.f32 %v1410, %v1592
        %v1594 = vpop.f32.mrb[0].mxu0
        %1595 = vmatprep.mubr.f32.mxu0 0.0
        %1596 = vmatmul.mubr.f32.gmra.mrb[0].mxu0 %v1381
        %v1597 = vpop.f32.mrb[0].mxu0
        %v1598 = vadd.f32 %v1410, %v1597
        %v1599 = vpop.f32.mrb[0].mxu0
        %1600 = vmatprep.mubr.f32.mxu0 0.0
        %1601 = vmatmul.mubr.f32.gmra.mrb[0].mxu0 %v1382
        %v1602 = vpop.f32.mrb[0].mxu0
        %v1603 = vadd.f32 %v1410, %v1602
        %v1604 = vpop.f32.mrb[0].mxu0
        %1605 = vmatprep.mubr.f32.mxu0 0.0
        %1606 = vmatmul.mubr.f32.gmra.mrb[0].mxu0 %v1383
        %v1607 = vpop.f32.mrb[0].mxu0
        %v1608 = vadd.f32 %v1410, %v1607
        %v1609 = vpop.f32.mrb[0].mxu0
        %1610 = vmatprep.mubr.f32.mxu0 0.0
        %1611 = vmatmul.mubr.f32.gmra.mrb[0].mxu0 %v1384
        %v1612 = vpop.f32.mrb[0].mxu0
        %v1613 = vadd.f32 %v1410, %v1612
        %v1614 = vpop.f32.mrb[0].mxu0
        %1615 = vmatprep.mubr.f32.mxu0 0.0
        %1616 = vmatmul.mubr.f32.gmra.mrb[0].mxu0 %v1385
        %v1617 = vpop.f32.mrb[0].mxu0
        %v1618 = vadd.f32 %v1410, %v1617
        %v1619 = vpop.f32.mrb[0].mxu0
        %1620 = vmatprep.mubr.f32.mxu0 0.0
        %1621 = vmatmul.mubr.f32.gmra.mrb[0].mxu0 %v1386
        %v1622 = vpop.f32.mrb[0].mxu0
        %v1623 = vadd.f32 %v1410, %v1622
        %v1624 = vpop.f32.mrb[0].mxu0
        %1625 = vmatprep.mubr.f32.mxu0 0.0
        %1626 = vmatmul.mubr.f32.gmra.mrb[0].mxu0 %v1387
        %v1627 = vpop.f32.mrb[0].mxu0
        %v1628 = vadd.f32 %v1410, %v1627
        %v1629 = vpop.f32.mrb[0].mxu0
        %1630 = vmatprep.mubr.f32.mxu0 0.0
        %1631 = vmatmul.mubr.f32.gmra.mrb[0].mxu0 %v1388
        %v1632 = vpop.f32.mrb[0].mxu0
        %v1633 = vadd.f32 %v1410, %v1632
        %v1634 = vpop.f32.mrb[0].mxu0
        %1635 = vmatprep.mubr.f32.mxu0 0.0
        %1636 = vmatmul.mubr.f32.gmra.mrb[0].mxu0 %v1389
        %v1637 = vpop.f32.mrb[0].mxu0
        %v1638 = vadd.f32 %v1410, %v1637
        %v1639 = vpop.f32.mrb[0].mxu0
        %1640 = vdwg.mxu0
        %v1641 = vld [vmem:[%s3 + $0x4] sm:$0x1]
        %vm1642 = vcmp.ge.f32.partialorder %v1478, 0.0
        %vm1643 = vcmp.ge.f32.partialorder %v1483, 0.0
        %vm1644 = vcmp.ge.f32.partialorder %v1488, 0.0
        %vm1645 = vcmp.ge.f32.partialorder %v1493, 0.0
        %vm1646 = vcmp.ge.f32.partialorder %v1498, 0.0
        %vm1647 = vcmp.ge.f32.partialorder %v1503, 0.0
        %vm1648 = vcmp.ge.f32.partialorder %v1508, 0.0
        %vm1649 = vcmp.ge.f32.partialorder %v1513, 0.0
        %vm1650 = vcmp.ge.f32.partialorder %v1518, 0.0
        %vm1651 = vcmp.ge.f32.partialorder %v1523, 0.0
        %vm1652 = vcmp.ge.f32.partialorder %v1528, 0.0
        %vm1653 = vcmp.ge.f32.partialorder %v1533, 0.0
        %vm1654 = vcmp.ge.f32.partialorder %v1538, 0.0
        %vm1655 = vcmp.ge.f32.partialorder %v1543, 0.0
        %vm1656 = vcmp.ge.f32.partialorder %v1548, 0.0
        %vm1657 = vcmp.ge.f32.partialorder %v1553, 0.0
        %vm1658 = vcmp.ge.f32.partialorder %v1558, 0.0
        %vm1659 = vcmp.ge.f32.partialorder %v1563, 0.0
        %vm1660 = vcmp.ge.f32.partialorder %v1568, 0.0
        %vm1661 = vcmp.ge.f32.partialorder %v1573, 0.0
        %vm1662 = vcmp.ge.f32.partialorder %v1578, 0.0
        %vm1663 = vcmp.ge.f32.partialorder %v1583, 0.0
        %vm1664 = vcmp.ge.f32.partialorder %v1588, 0.0
        %vm1665 = vcmp.ge.f32.partialorder %v1593, 0.0
        %vm1666 = vcmp.ge.f32.partialorder %v1598, 0.0
        %vm1667 = vcmp.ge.f32.partialorder %v1603, 0.0
        %vm1668 = vcmp.ge.f32.partialorder %v1608, 0.0
        %vm1669 = vcmp.ge.f32.partialorder %v1613, 0.0
        %vm1670 = vcmp.ge.f32.partialorder %v1618, 0.0
        %vm1671 = vcmp.ge.f32.partialorder %v1623, 0.0
        %vm1672 = vcmp.ge.f32.partialorder %v1628, 0.0
        %vm1673 = vcmp.ge.f32.partialorder %v1633, 0.0
        %vm1674 = vcmp.ge.f32.partialorder %v1638, 0.0
        %v1675 = vlaneseq
        %v1676 = vshrl.u32 %v1675, 7
        %v1677 = vsub.s32 0, %v1676
        %v1678 = vrot.slane %v1641, %v1677
        %v1679 = vmul.f32 %v1678, %v1478
        %v1680 = vmul.f32 %v1678, %v1483
        %v1681 = vmul.f32 %v1678, %v1488
        %v1682 = vmul.f32 %v1678, %v1493
        %v1683 = vmul.f32 %v1678, %v1498
        %v1684 = vmul.f32 %v1678, %v1503
        %v1685 = vmul.f32 %v1678, %v1508
        %v1686 = vmul.f32 %v1678, %v1513
        %v1687 = vmul.f32 %v1678, %v1518
        %v1688 = vmul.f32 %v1678, %v1523
        %v1689 = vmul.f32 %v1678, %v1528
        %v1690 = vmul.f32 %v1678, %v1533
        %v1691 = vmul.f32 %v1678, %v1538
        %v1692 = vmul.f32 %v1678, %v1543
        %v1693 = vmul.f32 %v1678, %v1548
        %v1694 = vmul.f32 %v1678, %v1553
        %v1695 = vmul.f32 %v1678, %v1558
        %v1696 = vmul.f32 %v1678, %v1563
        %v1697 = vmul.f32 %v1678, %v1568
        %v1698 = vmul.f32 %v1678, %v1573
        %v1699 = vmul.f32 %v1678, %v1578
        %v1700 = vmul.f32 %v1678, %v1583
        %v1701 = vmul.f32 %v1678, %v1588
        %v1702 = vmul.f32 %v1678, %v1593
        %v1703 = vmul.f32 %v1678, %v1598
        %v1704 = vmul.f32 %v1678, %v1603
        %v1705 = vmul.f32 %v1678, %v1608
        %v1706 = vmul.f32 %v1678, %v1613
        %v1707 = vmul.f32 %v1678, %v1618
        %v1708 = vmul.f32 %v1678, %v1623
        %v1709 = vmul.f32 %v1678, %v1628
        %v1710 = vmul.f32 %v1678, %v1633
        %v1711 = vmul.f32 %v1678, %v1638
        %v1712 = vsel %vm1642, %v1478, %v1679
        %v1713 = vsel %vm1643, %v1483, %v1680
        %v1714 = vsel %vm1644, %v1488, %v1681
        %v1715 = vsel %vm1645, %v1493, %v1682
        %v1716 = vsel %vm1646, %v1498, %v1683
        %v1717 = vsel %vm1647, %v1503, %v1684
        %v1718 = vsel %vm1648, %v1508, %v1685
        %v1719 = vsel %vm1649, %v1513, %v1686
        %v1720 = vsel %vm1650, %v1518, %v1687
        %v1721 = vsel %vm1651, %v1523, %v1688
        %v1722 = vsel %vm1652, %v1528, %v1689
        %v1723 = vsel %vm1653, %v1533, %v1690
        %v1724 = vsel %vm1654, %v1538, %v1691
        %v1725 = vsel %vm1655, %v1543, %v1692
        %v1726 = vsel %vm1656, %v1548, %v1693
        %v1727 = vsel %vm1657, %v1553, %v1694
        %v1728 = vsel %vm1658, %v1558, %v1695
        %v1729 = vsel %vm1659, %v1563, %v1696
        %v1730 = vsel %vm1660, %v1568, %v1697
        %v1731 = vsel %vm1661, %v1573, %v1698
        %v1732 = vsel %vm1662, %v1578, %v1699
        %v1733 = vsel %vm1663, %v1583, %v1700
        %v1734 = vsel %vm1664, %v1588, %v1701
        %v1735 = vsel %vm1665, %v1593, %v1702
        %v1736 = vsel %vm1666, %v1598, %v1703
        %v1737 = vsel %vm1667, %v1603, %v1704
        %v1738 = vsel %vm1668, %v1608, %v1705
        %v1739 = vsel %vm1669, %v1613, %v1706
        %v1740 = vsel %vm1670, %v1618, %v1707
        %v1741 = vsel %vm1671, %v1623, %v1708
        %v1742 = vsel %vm1672, %v1628, %v1709
        %v1743 = vsel %vm1673, %v1633, %v1710
        %v1744 = vsel %vm1674, %v1638, %v1711
        %v1745 = vld [vmem:[%s3 + $0x1d] sm:$0x1]
        %v1746 = vlaneseq
        %v1747 = vshrl.u32 %v1746, 7
        %v1748 = vsub.s32 0, %v1747
        %v1749 = vrot.slane %v1745, %v1748
        %v1750 = vmul.f32 %v1712, %v1749
        %v1751 = vmul.f32 %v1713, %v1749
        %v1752 = vmul.f32 %v1714, %v1749
        %v1753 = vmul.f32 %v1715, %v1749
        %v1754 = vmul.f32 %v1716, %v1749
        %v1755 = vmul.f32 %v1717, %v1749
        %v1756 = vmul.f32 %v1718, %v1749
        %v1757 = vmul.f32 %v1719, %v1749
        %v1758 = vmul.f32 %v1720, %v1749
        %v1759 = vmul.f32 %v1721, %v1749
        %v1760 = vmul.f32 %v1722, %v1749
        %v1761 = vmul.f32 %v1723, %v1749
        %v1762 = vmul.f32 %v1724, %v1749
        %v1763 = vmul.f32 %v1725, %v1749
        %v1764 = vmul.f32 %v1726, %v1749
        %v1765 = vmul.f32 %v1727, %v1749
        %v1766 = vmul.f32 %v1728, %v1749
        %v1767 = vld [vmem:[%s3 + $0x1e] sm:$0x1]
        %v1768 = vlaneseq
        %v1769 = vshrl.u32 %v1768, 7
        %v1770 = vsub.s32 0, %v1769
        %v1771 = vrot.slane %v1767, %v1770
        %v1772 = vmul.f32 %v1713, %v1771
        %v1773 = vmul.f32 %v1714, %v1771
        %v1774 = vmul.f32 %v1715, %v1771
        %v1775 = vmul.f32 %v1716, %v1771
        %v1776 = vmul.f32 %v1717, %v1771
        %v1777 = vmul.f32 %v1718, %v1771
        %v1778 = vmul.f32 %v1719, %v1771
        %v1779 = vmul.f32 %v1720, %v1771
        %v1780 = vmul.f32 %v1721, %v1771
        %v1781 = vmul.f32 %v1722, %v1771
        %v1782 = vmul.f32 %v1723, %v1771
        %v1783 = vmul.f32 %v1724, %v1771
        %v1784 = vmul.f32 %v1725, %v1771
        %v1785 = vmul.f32 %v1726, %v1771
        %v1786 = vmul.f32 %v1727, %v1771
        %v1787 = vmul.f32 %v1728, %v1771
        %v1788 = vmul.f32 %v1729, %v1771
        %v1789 = vadd.f32 %v1750, %v1772
        %v1790 = vadd.f32 %v1751, %v1773
        %v1791 = vadd.f32 %v1752, %v1774
        %v1792 = vadd.f32 %v1753, %v1775
        %v1793 = vadd.f32 %v1754, %v1776
        %v1794 = vadd.f32 %v1755, %v1777
        %v1795 = vadd.f32 %v1756, %v1778
        %v1796 = vadd.f32 %v1757, %v1779
        %v1797 = vadd.f32 %v1758, %v1780
        %v1798 = vadd.f32 %v1759, %v1781
        %v1799 = vadd.f32 %v1760, %v1782
        %v1800 = vadd.f32 %v1761, %v1783
        %v1801 = vadd.f32 %v1762, %v1784
        %v1802 = vadd.f32 %v1763, %v1785
        %v1803 = vadd.f32 %v1764, %v1786
        %v1804 = vadd.f32 %v1765, %v1787
        %v1805 = vadd.f32 %v1766, %v1788
        %v1806 = vld [vmem:[%s3 + $0x1f] sm:$0x1]
        %v1807 = vlaneseq
        %v1808 = vshrl.u32 %v1807, 7
        %v1809 = vsub.s32 0, %v1808
        %v1810 = vrot.slane %v1806, %v1809
        %v1811 = vmul.f32 %v1714, %v1810
        %v1812 = vmul.f32 %v1715, %v1810
        %v1813 = vmul.f32 %v1716, %v1810
        %v1814 = vmul.f32 %v1717, %v1810
        %v1815 = vmul.f32 %v1718, %v1810
        %v1816 = vmul.f32 %v1719, %v1810
        %v1817 = vmul.f32 %v1720, %v1810
        %v1818 = vmul.f32 %v1721, %v1810
        %v1819 = vmul.f32 %v1722, %v1810
        %v1820 = vmul.f32 %v1723, %v1810
        %v1821 = vmul.f32 %v1724, %v1810
        %v1822 = vmul.f32 %v1725, %v1810
        %v1823 = vmul.f32 %v1726, %v1810
        %v1824 = vmul.f32 %v1727, %v1810
        %v1825 = vmul.f32 %v1728, %v1810
        %v1826 = vmul.f32 %v1729, %v1810
        %v1827 = vmul.f32 %v1730, %v1810
        %v1828 = vadd.f32 %v1789, %v1811
        %v1829 = vadd.f32 %v1790, %v1812
        %v1830 = vadd.f32 %v1791, %v1813
        %v1831 = vadd.f32 %v1792, %v1814
        %v1832 = vadd.f32 %v1793, %v1815
        %v1833 = vadd.f32 %v1794, %v1816
        %v1834 = vadd.f32 %v1795, %v1817
        %v1835 = vadd.f32 %v1796, %v1818
        %v1836 = vadd.f32 %v1797, %v1819
        %v1837 = vadd.f32 %v1798, %v1820
        %v1838 = vadd.f32 %v1799, %v1821
        %v1839 = vadd.f32 %v1800, %v1822
        %v1840 = vadd.f32 %v1801, %v1823
        %v1841 = vadd.f32 %v1802, %v1824
        %v1842 = vadd.f32 %v1803, %v1825
        %v1843 = vadd.f32 %v1804, %v1826
        %v1844 = vadd.f32 %v1805, %v1827
        %v1845 = vld [vmem:[%s3 + $0x20] sm:$0x1]
        %v1846 = vlaneseq
        %v1847 = vshrl.u32 %v1846, 7
        %v1848 = vsub.s32 0, %v1847
        %v1849 = vrot.slane %v1845, %v1848
        %v1850 = vmul.f32 %v1719, %v1849
        %v1851 = vmul.f32 %v1720, %v1849
        %v1852 = vmul.f32 %v1721, %v1849
        %v1853 = vmul.f32 %v1722, %v1849
        %v1854 = vmul.f32 %v1723, %v1849
        %v1855 = vmul.f32 %v1724, %v1849
        %v1856 = vmul.f32 %v1725, %v1849
        %v1857 = vmul.f32 %v1726, %v1849
        %v1858 = vmul.f32 %v1727, %v1849
        %v1859 = vmul.f32 %v1728, %v1849
        %v1860 = vmul.f32 %v1729, %v1849
        %v1861 = vmul.f32 %v1730, %v1849
        %v1862 = vmul.f32 %v1731, %v1849
        %v1863 = vmul.f32 %v1732, %v1849
        %v1864 = vmul.f32 %v1733, %v1849
        %v1865 = vmul.f32 %v1734, %v1849
        %v1866 = vmul.f32 %v1735, %v1849
        %v1867 = vadd.f32 %v1828, %v1850
        %v1868 = vadd.f32 %v1829, %v1851
        %v1869 = vadd.f32 %v1830, %v1852
        %v1870 = vadd.f32 %v1831, %v1853
        %v1871 = vadd.f32 %v1832, %v1854
        %v1872 = vadd.f32 %v1833, %v1855
        %v1873 = vadd.f32 %v1834, %v1856
        %v1874 = vadd.f32 %v1835, %v1857
        %v1875 = vadd.f32 %v1836, %v1858
        %v1876 = vadd.f32 %v1837, %v1859
        %v1877 = vadd.f32 %v1838, %v1860
        %v1878 = vadd.f32 %v1839, %v1861
        %v1879 = vadd.f32 %v1840, %v1862
        %v1880 = vadd.f32 %v1841, %v1863
        %v1881 = vadd.f32 %v1842, %v1864
        %v1882 = vadd.f32 %v1843, %v1865
        %v1883 = vadd.f32 %v1844, %v1866
        %v1884 = vld [vmem:[%s3 + $0x21] sm:$0x1]
        %v1885 = vlaneseq
        %v1886 = vshrl.u32 %v1885, 7
        %v1887 = vsub.s32 0, %v1886
        %v1888 = vrot.slane %v1884, %v1887
        %v1889 = vmul.f32 %v1720, %v1888
        %v1890 = vmul.f32 %v1721, %v1888
        %v1891 = vmul.f32 %v1722, %v1888
        %v1892 = vmul.f32 %v1723, %v1888
        %v1893 = vmul.f32 %v1724, %v1888
        %v1894 = vmul.f32 %v1725, %v1888
        %v1895 = vmul.f32 %v1726, %v1888
        %v1896 = vmul.f32 %v1727, %v1888
        %v1897 = vmul.f32 %v1728, %v1888
        %v1898 = vmul.f32 %v1729, %v1888
        %v1899 = vmul.f32 %v1730, %v1888
        %v1900 = vmul.f32 %v1731, %v1888
        %v1901 = vmul.f32 %v1732, %v1888
        %v1902 = vmul.f32 %v1733, %v1888
        %v1903 = vmul.f32 %v1734, %v1888
        %v1904 = vmul.f32 %v1735, %v1888
        %v1905 = vmul.f32 %v1736, %v1888
        %v1906 = vadd.f32 %v1867, %v1889
        %v1907 = vadd.f32 %v1868, %v1890
        %v1908 = vadd.f32 %v1869, %v1891
        %v1909 = vadd.f32 %v1870, %v1892
        %v1910 = vadd.f32 %v1871, %v1893
        %v1911 = vadd.f32 %v1872, %v1894
        %v1912 = vadd.f32 %v1873, %v1895
        %v1913 = vadd.f32 %v1874, %v1896
        %v1914 = vadd.f32 %v1875, %v1897
        %v1915 = vadd.f32 %v1876, %v1898
        %v1916 = vadd.f32 %v1877, %v1899
        %v1917 = vadd.f32 %v1878, %v1900
        %v1918 = vadd.f32 %v1879, %v1901
        %v1919 = vadd.f32 %v1880, %v1902
        %v1920 = vadd.f32 %v1881, %v1903
        %v1921 = vadd.f32 %v1882, %v1904
        %v1922 = vadd.f32 %v1883, %v1905
        %v1923 = vld [vmem:[%s3 + $0x22] sm:$0x1]
        %v1924 = vlaneseq
        %v1925 = vshrl.u32 %v1924, 7
        %v1926 = vsub.s32 0, %v1925
        %v1927 = vrot.slane %v1923, %v1926
        %v1928 = vmul.f32 %v1721, %v1927
        %v1929 = vmul.f32 %v1722, %v1927
        %v1930 = vmul.f32 %v1723, %v1927
        %v1931 = vmul.f32 %v1724, %v1927
        %v1932 = vmul.f32 %v1725, %v1927
        %v1933 = vmul.f32 %v1726, %v1927
        %v1934 = vmul.f32 %v1727, %v1927
        %v1935 = vmul.f32 %v1728, %v1927
        %v1936 = vmul.f32 %v1729, %v1927
        %v1937 = vmul.f32 %v1730, %v1927
        %v1938 = vmul.f32 %v1731, %v1927
        %v1939 = vmul.f32 %v1732, %v1927
        %v1940 = vmul.f32 %v1733, %v1927
        %v1941 = vmul.f32 %v1734, %v1927
        %v1942 = vmul.f32 %v1735, %v1927
        %v1943 = vmul.f32 %v1736, %v1927
        %v1944 = vmul.f32 %v1737, %v1927
        %v1945 = vadd.f32 %v1906, %v1928
        %v1946 = vadd.f32 %v1907, %v1929
        %v1947 = vadd.f32 %v1908, %v1930
        %v1948 = vadd.f32 %v1909, %v1931
        %v1949 = vadd.f32 %v1910, %v1932
        %v1950 = vadd.f32 %v1911, %v1933
        %v1951 = vadd.f32 %v1912, %v1934
        %v1952 = vadd.f32 %v1913, %v1935
        %v1953 = vadd.f32 %v1914, %v1936
        %v1954 = vadd.f32 %v1915, %v1937
        %v1955 = vadd.f32 %v1916, %v1938
        %v1956 = vadd.f32 %v1917, %v1939
        %v1957 = vadd.f32 %v1918, %v1940
        %v1958 = vadd.f32 %v1919, %v1941
        %v1959 = vadd.f32 %v1920, %v1942
        %v1960 = vadd.f32 %v1921, %v1943
        %v1961 = vadd.f32 %v1922, %v1944
        %v1962 = vld [vmem:[%s3 + $0x23] sm:$0x1]
        %v1963 = vlaneseq
        %v1964 = vshrl.u32 %v1963, 7
        %v1965 = vsub.s32 0, %v1964
        %v1966 = vrot.slane %v1962, %v1965
        %v1967 = vmul.f32 %v1726, %v1966
        %v1968 = vmul.f32 %v1727, %v1966
        %v1969 = vmul.f32 %v1728, %v1966
        %v1970 = vmul.f32 %v1729, %v1966
        %v1971 = vmul.f32 %v1730, %v1966
        %v1972 = vmul.f32 %v1731, %v1966
        %v1973 = vmul.f32 %v1732, %v1966
        %v1974 = vmul.f32 %v1733, %v1966
        %v1975 = vmul.f32 %v1734, %v1966
        %v1976 = vmul.f32 %v1735, %v1966
        %v1977 = vmul.f32 %v1736, %v1966
        %v1978 = vmul.f32 %v1737, %v1966
        %v1979 = vmul.f32 %v1738, %v1966
        %v1980 = vmul.f32 %v1739, %v1966
        %v1981 = vmul.f32 %v1740, %v1966
        %v1982 = vmul.f32 %v1741, %v1966
        %v1983 = vmul.f32 %v1742, %v1966
        %v1984 = vadd.f32 %v1945, %v1967
        %v1985 = vadd.f32 %v1946, %v1968
        %v1986 = vadd.f32 %v1947, %v1969
        %v1987 = vadd.f32 %v1948, %v1970
        %v1988 = vadd.f32 %v1949, %v1971
        %v1989 = vadd.f32 %v1950, %v1972
        %v1990 = vadd.f32 %v1951, %v1973
        %v1991 = vadd.f32 %v1952, %v1974
        %v1992 = vadd.f32 %v1953, %v1975
        %v1993 = vadd.f32 %v1954, %v1976
        %v1994 = vadd.f32 %v1955, %v1977
        %v1995 = vadd.f32 %v1956, %v1978
        %v1996 = vadd.f32 %v1957, %v1979
        %v1997 = vadd.f32 %v1958, %v1980
        %v1998 = vadd.f32 %v1959, %v1981
        %v1999 = vadd.f32 %v1960, %v1982
        %v2000 = vadd.f32 %v1961, %v1983
        %v2001 = vld [vmem:[%s3 + $0x24] sm:$0x1]
        %v2002 = vlaneseq
        %v2003 = vshrl.u32 %v2002, 7
        %v2004 = vsub.s32 0, %v2003
        %v2005 = vrot.slane %v2001, %v2004
        %v2006 = vmul.f32 %v1727, %v2005
        %v2007 = vmul.f32 %v1728, %v2005
        %v2008 = vmul.f32 %v1729, %v2005
        %v2009 = vmul.f32 %v1730, %v2005
        %v2010 = vmul.f32 %v1731, %v2005
        %v2011 = vmul.f32 %v1732, %v2005
        %v2012 = vmul.f32 %v1733, %v2005
        %v2013 = vmul.f32 %v1734, %v2005
        %v2014 = vmul.f32 %v1735, %v2005
        %v2015 = vmul.f32 %v1736, %v2005
        %v2016 = vmul.f32 %v1737, %v2005
        %v2017 = vmul.f32 %v1738, %v2005
        %v2018 = vmul.f32 %v1739, %v2005
        %v2019 = vmul.f32 %v1740, %v2005
        %v2020 = vmul.f32 %v1741, %v2005
        %v2021 = vmul.f32 %v1742, %v2005
        %v2022 = vmul.f32 %v1743, %v2005
        %v2023 = vadd.f32 %v1984, %v2006
        %v2024 = vadd.f32 %v1985, %v2007
        %v2025 = vadd.f32 %v1986, %v2008
        %v2026 = vadd.f32 %v1987, %v2009
        %v2027 = vadd.f32 %v1988, %v2010
        %v2028 = vadd.f32 %v1989, %v2011
        %v2029 = vadd.f32 %v1990, %v2012
        %v2030 = vadd.f32 %v1991, %v2013
        %v2031 = vadd.f32 %v1992, %v2014
        %v2032 = vadd.f32 %v1993, %v2015
        %v2033 = vadd.f32 %v1994, %v2016
        %v2034 = vadd.f32 %v1995, %v2017
        %v2035 = vadd.f32 %v1996, %v2018
        %v2036 = vadd.f32 %v1997, %v2019
        %v2037 = vadd.f32 %v1998, %v2020
        %v2038 = vadd.f32 %v1999, %v2021
        %v2039 = vadd.f32 %v2000, %v2022
        %s2040 = scalar_lea.vmem [#allocation2], 128
        %v2041 = vld [vmem:[%s2040] sm:$0xff]
        %v2042 = vld [vmem:[%s2040 + $0x8] sm:$0xff]
        %v2043 = vld [vmem:[%s2040 + $0x10] sm:$0xff]
        %v2044 = vld [vmem:[%s2040 + $0x18] sm:$0xff]
        %v2045 = vld [vmem:[%s2040 + $0x20] sm:$0xff]
        %v2046 = vld [vmem:[%s2040 + $0x28] sm:$0xff]
        %v2047 = vld [vmem:[%s2040 + $0x30] sm:$0xff]
        %v2048 = vld [vmem:[%s2040 + $0x38] sm:$0xff]
        %v2049 = vld [vmem:[%s2040 + $0x40] sm:$0xff]
        %v2050 = vld [vmem:[%s2040 + $0x48] sm:$0xff]
        %v2051 = vld [vmem:[%s2040 + $0x50] sm:$0xff]
        %v2052 = vld [vmem:[%s2040 + $0x58] sm:$0xff]
        %v2053 = vld [vmem:[%s2040 + $0x60] sm:$0xff]
        %v2054 = vld [vmem:[%s2040 + $0x68] sm:$0xff]
        %v2055 = vld [vmem:[%s2040 + $0x70] sm:$0xff]
        %v2056 = vld [vmem:[%s2040 + $0x78] sm:$0xff]
        %s2057 = scalar_lea.vmem [#allocation2], 256
        %v2058 = vld [vmem:[%s2057] sm:$0xff]
        %v2059 = vld [vmem:[%s2057 + $0x8] sm:$0xff]
        %v2060 = vld [vmem:[%s2057 + $0x10] sm:$0xff]
        %v2061 = vld [vmem:[%s2057 + $0x18] sm:$0xff]
        %v2062 = vld [vmem:[%s2057 + $0x20] sm:$0xff]
        %v2063 = vld [vmem:[%s2057 + $0x28] sm:$0xff]
        %v2064 = vld [vmem:[%s2057 + $0x30] sm:$0xff]
        %v2065 = vld [vmem:[%s2057 + $0x38] sm:$0xff]
        %v2066 = vld [vmem:[%s2057 + $0x40] sm:$0xff]
        %v2067 = vld [vmem:[%s2057 + $0x48] sm:$0xff]
        %v2068 = vld [vmem:[%s2057 + $0x50] sm:$0xff]
        %v2069 = vld [vmem:[%s2057 + $0x58] sm:$0xff]
        %v2070 = vld [vmem:[%s2057 + $0x60] sm:$0xff]
        %v2071 = vld [vmem:[%s2057 + $0x68] sm:$0xff]
        %v2072 = vld [vmem:[%s2057 + $0x70] sm:$0xff]
        %v2073 = vld [vmem:[%s2057 + $0x78] sm:$0xff]
        %2074 = vmatprep.subr.mxu0 0.0
        %2075 = vmatpush1.msra.mxu0 %v2058
        %2076 = vmatprep.subr.mxu0 0.0
        %2077 = vmatpush1.msra.mxu0 %v2059
        %2078 = vmatprep.subr.mxu0 0.0
        %2079 = vmatpush1.msra.mxu0 %v2060
        %2080 = vmatprep.subr.mxu0 0.0
        %2081 = vmatpush1.msra.mxu0 %v2061
        %2082 = vmatprep.subr.mxu0 0.0
        %2083 = vmatpush1.msra.mxu0 %v2062
        %2084 = vmatprep.subr.mxu0 0.0
        %2085 = vmatpush1.msra.mxu0 %v2063
        %2086 = vmatprep.subr.mxu0 0.0
        %2087 = vmatpush1.msra.mxu0 %v2064
        %2088 = vmatprep.subr.mxu0 0.0
        %2089 = vmatpush1.msra.mxu0 %v2065
        %2090 = vmatprep.subr.mxu0 0.0
        %2091 = vmatpush1.msra.mxu0 %v2066
        %2092 = vmatprep.subr.mxu0 0.0
        %2093 = vmatpush1.msra.mxu0 %v2067
        %2094 = vmatprep.subr.mxu0 0.0
        %2095 = vmatpush1.msra.mxu0 %v2068
        %2096 = vmatprep.subr.mxu0 0.0
        %2097 = vmatpush1.msra.mxu0 %v2069
        %2098 = vmatprep.subr.mxu0 0.0
        %2099 = vmatpush1.msra.mxu0 %v2070
        %2100 = vmatprep.subr.mxu0 0.0
        %2101 = vmatpush1.msra.mxu0 %v2071
        %2102 = vmatprep.subr.mxu0 0.0
        %2103 = vmatpush1.msra.mxu0 %v2072
        %2104 = vmatprep.subr.mxu0 0.0
        %2105 = vmatpush1.msra.mxu0 %v2073
        %2106 = vmatprep.subr.mxu0 0.0
        %2107 = vmatpush1.msra.mxu0 0.0
        %2108 = vmatprep.subr.mxu0 0.0
        %2109 = vmatpush1.msra.mxu0 0.0
        %2110 = vmatprep.subr.mxu0 0.0
        %2111 = vmatpush1.msra.mxu0 0.0
        %2112 = vmatprep.subr.mxu0 0.0
        %2113 = vmatpush1.msra.mxu0 0.0
        %2114 = vmatprep.subr.mxu0 0.0
        %2115 = vmatpush1.msra.mxu0 0.0
        %2116 = vmatprep.subr.mxu0 0.0
        %2117 = vmatpush1.msra.mxu0 0.0
        %2118 = vmatprep.subr.mxu0 0.0
        %2119 = vmatpush1.msra.mxu0 0.0
        %2120 = vmatprep.subr.mxu0 0.0
        %2121 = vmatpush1.msra.mxu0 0.0
        %2122 = vmatprep.subr.mxu0 0.0
        %2123 = vmatpush1.msra.mxu0 0.0
        %2124 = vmatprep.subr.mxu0 0.0
        %2125 = vmatpush1.msra.mxu0 0.0
        %2126 = vmatprep.subr.mxu0 0.0
        %2127 = vmatpush1.msra.mxu0 0.0
        %2128 = vmatprep.subr.mxu0 0.0
        %2129 = vmatpush1.msra.mxu0 0.0
        %2130 = vmatprep.subr.mxu0 0.0
        %2131 = vmatpush1.msra.mxu0 0.0
        %2132 = vmatprep.subr.mxu0 0.0
        %2133 = vmatpush1.msra.mxu0 0.0
        %2134 = vmatprep.subr.mxu0 0.0
        %2135 = vmatpush1.msra.mxu0 0.0
        %2136 = vmatprep.subr.mxu0 0.0
        %2137 = vmatpush1.msra.mxu0 0.0
        %2138 = vmatprep.mubr.f32.mxu0 0.0
        %2139 = vmatmul.mubr.f32.gmra.mrb[0].mxu0 %v1728
        %v2140 = vpop.f32.mrb[0].mxu0
        %v2141 = vadd.f32 0.0, %v2140
        %v2142 = vpop.f32.mrb[0].mxu0
        %2143 = vmatprep.mubr.f32.mxu0 0.0
        %2144 = vmatmul.mubr.f32.gmra.mrb[0].mxu0 %v1729
        %v2145 = vpop.f32.mrb[0].mxu0
        %v2146 = vadd.f32 0.0, %v2145
        %v2147 = vpop.f32.mrb[0].mxu0
        %2148 = vmatprep.mubr.f32.mxu0 0.0
        %2149 = vmatmul.mubr.f32.gmra.mrb[0].mxu0 %v1730
        %v2150 = vpop.f32.mrb[0].mxu0
        %v2151 = vadd.f32 0.0, %v2150
        %v2152 = vpop.f32.mrb[0].mxu0
        %2153 = vmatprep.mubr.f32.mxu0 0.0
        %2154 = vmatmul.mubr.f32.gmra.mrb[0].mxu0 %v1731
        %v2155 = vpop.f32.mrb[0].mxu0
        %v2156 = vpop.f32.mrb[0].mxu0
        %2157 = vmatprep.mubr.f32.mxu0 0.0
        %2158 = vmatmul.mubr.f32.gmra.mrb[0].mxu0 %v1732
        %v2159 = vpop.f32.mrb[0].mxu0
        %v2160 = vpop.f32.mrb[0].mxu0
        %2161 = vmatprep.mubr.f32.mxu0 0.0
        %2162 = vmatmul.mubr.f32.gmra.mrb[0].mxu0 %v1733
        %v2163 = vpop.f32.mrb[0].mxu0
        %v2164 = vpop.f32.mrb[0].mxu0
        %2165 = vmatprep.mubr.f32.mxu0 0.0
        %2166 = vmatmul.mubr.f32.gmra.mrb[0].mxu0 %v1734
        %v2167 = vpop.f32.mrb[0].mxu0
        %v2168 = vpop.f32.mrb[0].mxu0
        %2169 = vmatprep.mubr.f32.mxu0 0.0
        %2170 = vmatmul.mubr.f32.gmra.mrb[0].mxu0 %v1735
        %v2171 = vpop.f32.mrb[0].mxu0
        %v2172 = vadd.f32 0.0, %v2171
        %v2173 = vpop.f32.mrb[0].mxu0
        %2174 = vmatprep.mubr.f32.mxu0 0.0
        %2175 = vmatmul.mubr.f32.gmra.mrb[0].mxu0 %v1736
        %v2176 = vpop.f32.mrb[0].mxu0
        %v2177 = vadd.f32 0.0, %v2176
        %v2178 = vpop.f32.mrb[0].mxu0
        %2179 = vmatprep.mubr.f32.mxu0 0.0
        %2180 = vmatmul.mubr.f32.gmra.mrb[0].mxu0 %v1737
        %v2181 = vpop.f32.mrb[0].mxu0
        %v2182 = vadd.f32 0.0, %v2181
        %v2183 = vpop.f32.mrb[0].mxu0
        %2184 = vmatprep.mubr.f32.mxu0 0.0
        %2185 = vmatmul.mubr.f32.gmra.mrb[0].mxu0 %v1738
        %v2186 = vpop.f32.mrb[0].mxu0
        %v2187 = vpop.f32.mrb[0].mxu0
        %2188 = vmatprep.mubr.f32.mxu0 0.0
        %2189 = vmatmul.mubr.f32.gmra.mrb[0].mxu0 %v1739
        %v2190 = vpop.f32.mrb[0].mxu0
        %v2191 = vpop.f32.mrb[0].mxu0
        %2192 = vmatprep.mubr.f32.mxu0 0.0
        %2193 = vmatmul.mubr.f32.gmra.mrb[0].mxu0 %v1740
        %v2194 = vpop.f32.mrb[0].mxu0
        %v2195 = vpop.f32.mrb[0].mxu0
        %2196 = vmatprep.mubr.f32.mxu0 0.0
        %2197 = vmatmul.mubr.f32.gmra.mrb[0].mxu0 %v1741
        %v2198 = vpop.f32.mrb[0].mxu0
        %v2199 = vpop.f32.mrb[0].mxu0
        %2200 = vmatprep.mubr.f32.mxu0 0.0
        %2201 = vmatmul.mubr.f32.gmra.mrb[0].mxu0 %v1742
        %v2202 = vpop.f32.mrb[0].mxu0
        %v2203 = vadd.f32 0.0, %v2202
        %v2204 = vpop.f32.mrb[0].mxu0
        %2205 = vmatprep.mubr.f32.mxu0 0.0
        %2206 = vmatmul.mubr.f32.gmra.mrb[0].mxu0 %v1743
        %v2207 = vpop.f32.mrb[0].mxu0
        %v2208 = vadd.f32 0.0, %v2207
        %v2209 = vpop.f32.mrb[0].mxu0
        %2210 = vmatprep.mubr.f32.mxu0 0.0
        %2211 = vmatmul.mubr.f32.gmra.mrb[0].mxu0 %v1744
        %v2212 = vpop.f32.mrb[0].mxu0
        %v2213 = vadd.f32 0.0, %v2212
        %v2214 = vpop.f32.mrb[0].mxu0
        %2215 = vdwg.mxu0
        %2216 = vmatprep.subr.mxu0 0.0
        %2217 = vmatpush1.msra.mxu0 %v2041
        %2218 = vmatprep.subr.mxu0 0.0
        %2219 = vmatpush1.msra.mxu0 %v2042
        %2220 = vmatprep.subr.mxu0 0.0
        %2221 = vmatpush1.msra.mxu0 %v2043
        %2222 = vmatprep.subr.mxu0 0.0
        %2223 = vmatpush1.msra.mxu0 %v2044
        %2224 = vmatprep.subr.mxu0 0.0
        %2225 = vmatpush1.msra.mxu0 %v2045
        %2226 = vmatprep.subr.mxu0 0.0
        %2227 = vmatpush1.msra.mxu0 %v2046
        %2228 = vmatprep.subr.mxu0 0.0
        %2229 = vmatpush1.msra.mxu0 %v2047
        %2230 = vmatprep.subr.mxu0 0.0
        %2231 = vmatpush1.msra.mxu0 %v2048
        %2232 = vmatprep.subr.mxu0 0.0
        %2233 = vmatpush1.msra.mxu0 %v2049
        %2234 = vmatprep.subr.mxu0 0.0
        %2235 = vmatpush1.msra.mxu0 %v2050
        %2236 = vmatprep.subr.mxu0 0.0
        %2237 = vmatpush1.msra.mxu0 %v2051
        %2238 = vmatprep.subr.mxu0 0.0
        %2239 = vmatpush1.msra.mxu0 %v2052
        %2240 = vmatprep.subr.mxu0 0.0
        %2241 = vmatpush1.msra.mxu0 %v2053
        %2242 = vmatprep.subr.mxu0 0.0
        %2243 = vmatpush1.msra.mxu0 %v2054
        %2244 = vmatprep.subr.mxu0 0.0
        %2245 = vmatpush1.msra.mxu0 %v2055
        %2246 = vmatprep.subr.mxu0 0.0
        %2247 = vmatpush1.msra.mxu0 %v2056
        %2248 = vmatprep.subr.mxu0 0.0
        %2249 = vmatpush1.msra.mxu0 0.0
        %2250 = vmatprep.subr.mxu0 0.0
        %2251 = vmatpush1.msra.mxu0 0.0
        %2252 = vmatprep.subr.mxu0 0.0
        %2253 = vmatpush1.msra.mxu0 0.0
        %2254 = vmatprep.subr.mxu0 0.0
        %2255 = vmatpush1.msra.mxu0 0.0
        %2256 = vmatprep.subr.mxu0 0.0
        %2257 = vmatpush1.msra.mxu0 0.0
        %2258 = vmatprep.subr.mxu0 0.0
        %2259 = vmatpush1.msra.mxu0 0.0
        %2260 = vmatprep.subr.mxu0 0.0
        %2261 = vmatpush1.msra.mxu0 0.0
        %2262 = vmatprep.subr.mxu0 0.0
        %2263 = vmatpush1.msra.mxu0 0.0
        %2264 = vmatprep.subr.mxu0 0.0
        %2265 = vmatpush1.msra.mxu0 0.0
        %2266 = vmatprep.subr.mxu0 0.0
        %2267 = vmatpush1.msra.mxu0 0.0
        %2268 = vmatprep.subr.mxu0 0.0
        %2269 = vmatpush1.msra.mxu0 0.0
        %2270 = vmatprep.subr.mxu0 0.0
        %2271 = vmatpush1.msra.mxu0 0.0
        %2272 = vmatprep.subr.mxu0 0.0
        %2273 = vmatpush1.msra.mxu0 0.0
        %2274 = vmatprep.subr.mxu0 0.0
        %2275 = vmatpush1.msra.mxu0 0.0
        %2276 = vmatprep.subr.mxu0 0.0
        %2277 = vmatpush1.msra.mxu0 0.0
        %2278 = vmatprep.subr.mxu0 0.0
        %2279 = vmatpush1.msra.mxu0 0.0
        %2280 = vmatprep.mubr.f32.mxu0 0.0
        %2281 = vmatmul.mubr.f32.gmra.mrb[0].mxu0 %v2023
        %v2282 = vpop.f32.mrb[0].mxu0
        %v2283 = vadd.f32 %v2141, %v2282
        %v2284 = vpop.f32.mrb[0].mxu0
        %2285 = vmatprep.mubr.f32.mxu0 0.0
        %2286 = vmatmul.mubr.f32.gmra.mrb[0].mxu0 %v2024
        %v2287 = vpop.f32.mrb[0].mxu0
        %v2288 = vadd.f32 %v2146, %v2287
        %v2289 = vpop.f32.mrb[0].mxu0
        %2290 = vmatprep.mubr.f32.mxu0 0.0
        %2291 = vmatmul.mubr.f32.gmra.mrb[0].mxu0 %v2025
        %v2292 = vpop.f32.mrb[0].mxu0
        %v2293 = vadd.f32 %v2151, %v2292
        %v2294 = vpop.f32.mrb[0].mxu0
        %2295 = vmatprep.mubr.f32.mxu0 0.0
        %2296 = vmatmul.mubr.f32.gmra.mrb[0].mxu0 %v2026
        %v2297 = vpop.f32.mrb[0].mxu0
        %v2298 = vpop.f32.mrb[0].mxu0
        %2299 = vmatprep.mubr.f32.mxu0 0.0
        %2300 = vmatmul.mubr.f32.gmra.mrb[0].mxu0 %v2027
        %v2301 = vpop.f32.mrb[0].mxu0
        %v2302 = vpop.f32.mrb[0].mxu0
        %2303 = vmatprep.mubr.f32.mxu0 0.0
        %2304 = vmatmul.mubr.f32.gmra.mrb[0].mxu0 %v2028
        %v2305 = vpop.f32.mrb[0].mxu0
        %v2306 = vpop.f32.mrb[0].mxu0
        %2307 = vmatprep.mubr.f32.mxu0 0.0
        %2308 = vmatmul.mubr.f32.gmra.mrb[0].mxu0 %v2029
        %v2309 = vpop.f32.mrb[0].mxu0
        %v2310 = vpop.f32.mrb[0].mxu0
        %2311 = vmatprep.mubr.f32.mxu0 0.0
        %2312 = vmatmul.mubr.f32.gmra.mrb[0].mxu0 %v2030
        %v2313 = vpop.f32.mrb[0].mxu0
        %v2314 = vadd.f32 %v2172, %v2313
        %v2315 = vpop.f32.mrb[0].mxu0
        %2316 = vmatprep.mubr.f32.mxu0 0.0
        %2317 = vmatmul.mubr.f32.gmra.mrb[0].mxu0 %v2031
        %v2318 = vpop.f32.mrb[0].mxu0
        %v2319 = vadd.f32 %v2177, %v2318
        %v2320 = vpop.f32.mrb[0].mxu0
        %2321 = vmatprep.mubr.f32.mxu0 0.0
        %2322 = vmatmul.mubr.f32.gmra.mrb[0].mxu0 %v2032
        %v2323 = vpop.f32.mrb[0].mxu0
        %v2324 = vadd.f32 %v2182, %v2323
        %v2325 = vpop.f32.mrb[0].mxu0
        %2326 = vmatprep.mubr.f32.mxu0 0.0
        %2327 = vmatmul.mubr.f32.gmra.mrb[0].mxu0 %v2033
        %v2328 = vpop.f32.mrb[0].mxu0
        %v2329 = vpop.f32.mrb[0].mxu0
        %2330 = vmatprep.mubr.f32.mxu0 0.0
        %2331 = vmatmul.mubr.f32.gmra.mrb[0].mxu0 %v2034
        %v2332 = vpop.f32.mrb[0].mxu0
        %v2333 = vpop.f32.mrb[0].mxu0
        %2334 = vmatprep.mubr.f32.mxu0 0.0
        %2335 = vmatmul.mubr.f32.gmra.mrb[0].mxu0 %v2035
        %v2336 = vpop.f32.mrb[0].mxu0
        %v2337 = vpop.f32.mrb[0].mxu0
        %2338 = vmatprep.mubr.f32.mxu0 0.0
        %2339 = vmatmul.mubr.f32.gmra.mrb[0].mxu0 %v2036
        %v2340 = vpop.f32.mrb[0].mxu0
        %v2341 = vpop.f32.mrb[0].mxu0
        %2342 = vmatprep.mubr.f32.mxu0 0.0
        %2343 = vmatmul.mubr.f32.gmra.mrb[0].mxu0 %v2037
        %v2344 = vpop.f32.mrb[0].mxu0
        %v2345 = vadd.f32 %v2203, %v2344
        %v2346 = vpop.f32.mrb[0].mxu0
        %2347 = vmatprep.mubr.f32.mxu0 0.0
        %2348 = vmatmul.mubr.f32.gmra.mrb[0].mxu0 %v2038
        %v2349 = vpop.f32.mrb[0].mxu0
        %v2350 = vadd.f32 %v2208, %v2349
        %v2351 = vpop.f32.mrb[0].mxu0
        %2352 = vmatprep.mubr.f32.mxu0 0.0
        %2353 = vmatmul.mubr.f32.gmra.mrb[0].mxu0 %v2039
        %v2354 = vpop.f32.mrb[0].mxu0
        %v2355 = vadd.f32 %v2213, %v2354
        %v2356 = vpop.f32.mrb[0].mxu0
        %2357 = vdwg.mxu0
        %v2358 = vld [vmem:[%s3 + $0x5] sm:$0x1]
        %v2359 = vlaneseq
        %v2360 = vshrl.u32 %v2359, 7
        %v2361 = vsub.s32 0, %v2360
        %v2362 = vrot.slane %v2358, %v2361
        %v2363 = vadd.f32 %v2283, %v2362
        %v2364 = vadd.f32 %v2288, %v2362
        %v2365 = vadd.f32 %v2293, %v2362
        %v2366 = vadd.f32 %v2314, %v2362
        %v2367 = vadd.f32 %v2319, %v2362
        %v2368 = vadd.f32 %v2324, %v2362
        %v2369 = vadd.f32 %v2345, %v2362
        %v2370 = vadd.f32 %v2350, %v2362
        %v2371 = vadd.f32 %v2355, %v2362
        %v2372 = vld [vmem:[%s3 + $0x6] sm:$0x1]
        %vm2373 = vcmp.ge.f32.partialorder %v2363, 0.0
        %vm2374 = vcmp.ge.f32.partialorder %v2364, 0.0
        %vm2375 = vcmp.ge.f32.partialorder %v2365, 0.0
        %vm2376 = vcmp.ge.f32.partialorder %v2366, 0.0
        %vm2377 = vcmp.ge.f32.partialorder %v2367, 0.0
        %vm2378 = vcmp.ge.f32.partialorder %v2368, 0.0
        %vm2379 = vcmp.ge.f32.partialorder %v2369, 0.0
        %vm2380 = vcmp.ge.f32.partialorder %v2370, 0.0
        %vm2381 = vcmp.ge.f32.partialorder %v2371, 0.0
        %v2382 = vlaneseq
        %v2383 = vshrl.u32 %v2382, 7
        %v2384 = vsub.s32 0, %v2383
        %v2385 = vrot.slane %v2372, %v2384
        %v2386 = vmul.f32 %v2385, %v2363
        %v2387 = vmul.f32 %v2385, %v2364
        %v2388 = vmul.f32 %v2385, %v2365
        %v2389 = vmul.f32 %v2385, %v2366
        %v2390 = vmul.f32 %v2385, %v2367
        %v2391 = vmul.f32 %v2385, %v2368
        %v2392 = vmul.f32 %v2385, %v2369
        %v2393 = vmul.f32 %v2385, %v2370
        %v2394 = vmul.f32 %v2385, %v2371
        %v2395 = vsel %vm2373, %v2363, %v2386
        %v2396 = vsel %vm2374, %v2364, %v2387
        %v2397 = vsel %vm2375, %v2365, %v2388
        %v2398 = vsel %vm2376, %v2366, %v2389
        %v2399 = vsel %vm2377, %v2367, %v2390
        %v2400 = vsel %vm2378, %v2368, %v2391
        %v2401 = vsel %vm2379, %v2369, %v2392
        %v2402 = vsel %vm2380, %v2370, %v2393
        %v2403 = vsel %vm2381, %v2371, %v2394
        %v2404 = vld [vmem:[%s229] sm:$0xff]
        %v2405 = vmax.f32 %v2395, %v2396
        %v2406 = vmax.f32 %v2405, %v2398
        %v2407 = vmax.f32 %v2406, %v2399
        %v2408 = vld [vmem:[%s3 + $0x25] sm:$0x1]
        %v2409 = vlaneseq
        %v2410 = vshrl.u32 %v2409, 7
        %v2411 = vsub.s32 0, %v2410
        %v2412 = vrot.slane %v2408, %v2411
        %v2413 = vmul.f32 %v2407, %v2412
        %v2414 = vadd.f32 %v2404, %v2413
        %v2415 = vmax.f32 %v2396, %v2397
        %v2416 = vmax.f32 %v2415, %v2399
        %v2417 = vmax.f32 %v2416, %v2400
        %v2418 = vld [vmem:[%s3 + $0x26] sm:$0x1]
        %v2419 = vlaneseq
        %v2420 = vshrl.u32 %v2419, 7
        %v2421 = vsub.s32 0, %v2420
        %v2422 = vrot.slane %v2418, %v2421
        %v2423 = vmul.f32 %v2417, %v2422
        %v2424 = vadd.f32 %v2414, %v2423
        %v2425 = vmax.f32 %v2398, %v2399
        %v2426 = vmax.f32 %v2425, %v2401
        %v2427 = vmax.f32 %v2426, %v2402
        %v2428 = vld [vmem:[%s3 + $0x27] sm:$0x1]
        %v2429 = vlaneseq
        %v2430 = vshrl.u32 %v2429, 7
        %v2431 = vsub.s32 0, %v2430
        %v2432 = vrot.slane %v2428, %v2431
        %v2433 = vmul.f32 %v2427, %v2432
        %v2434 = vadd.f32 %v2424, %v2433
        %v2435 = vmax.f32 %v2399, %v2400
        %v2436 = vmax.f32 %v2435, %v2402
        %v2437 = vmax.f32 %v2436, %v2403
        %v2438 = vld [vmem:[%s3 + $0x28] sm:$0x1]
        %v2439 = vlaneseq
        %v2440 = vshrl.u32 %v2439, 7
        %v2441 = vsub.s32 0, %v2440
        %v2442 = vrot.slane %v2438, %v2441
        %v2443 = vmul.f32 %v2437, %v2442
        %v2444 = vadd.f32 %v2434, %v2443
        %s2445 = scalar_lea.vmem [#allocation2], 384
        %v2446 = vld [vmem:[%s2445] sm:$0xff]
        %v2447 = vld [vmem:[%s2445 + $0x8] sm:$0xff]
        %v2448 = vld [vmem:[%s2445 + $0x10] sm:$0xff]
        %v2449 = vld [vmem:[%s2445 + $0x18] sm:$0xff]
        %v2450 = vld [vmem:[%s2445 + $0x20] sm:$0xff]
        %v2451 = vld [vmem:[%s2445 + $0x28] sm:$0xff]
        %v2452 = vld [vmem:[%s2445 + $0x30] sm:$0xff]
        %v2453 = vld [vmem:[%s2445 + $0x38] sm:$0xff]
        %v2454 = vld [vmem:[%s2445 + $0x40] sm:$0xff]
        %v2455 = vld [vmem:[%s2445 + $0x48] sm:$0xff]
        %v2456 = vld [vmem:[%s2445 + $0x50] sm:$0xff]
        %v2457 = vld [vmem:[%s2445 + $0x58] sm:$0xff]
        %v2458 = vld [vmem:[%s2445 + $0x60] sm:$0xff]
        %v2459 = vld [vmem:[%s2445 + $0x68] sm:$0xff]
        %v2460 = vld [vmem:[%s2445 + $0x70] sm:$0xff]
        %v2461 = vld [vmem:[%s2445 + $0x78] sm:$0xff]
        %2462 = vmatprep.subr.mxu0 0.0
        %2463 = vmatpush1.msra.mxu0 %v2446
        %2464 = vmatprep.subr.mxu0 0.0
        %2465 = vmatpush1.msra.mxu0 %v2447
        %2466 = vmatprep.subr.mxu0 0.0
        %2467 = vmatpush1.msra.mxu0 %v2448
        %2468 = vmatprep.subr.mxu0 0.0
        %2469 = vmatpush1.msra.mxu0 %v2449
        %2470 = vmatprep.subr.mxu0 0.0
        %2471 = vmatpush1.msra.mxu0 %v2450
        %2472 = vmatprep.subr.mxu0 0.0
        %2473 = vmatpush1.msra.mxu0 %v2451
        %2474 = vmatprep.subr.mxu0 0.0
        %2475 = vmatpush1.msra.mxu0 %v2452
        %2476 = vmatprep.subr.mxu0 0.0
        %2477 = vmatpush1.msra.mxu0 %v2453
        %2478 = vmatprep.subr.mxu0 0.0
        %2479 = vmatpush1.msra.mxu0 %v2454
        %2480 = vmatprep.subr.mxu0 0.0
        %2481 = vmatpush1.msra.mxu0 %v2455
        %2482 = vmatprep.subr.mxu0 0.0
        %2483 = vmatpush1.msra.mxu0 %v2456
        %2484 = vmatprep.subr.mxu0 0.0
        %2485 = vmatpush1.msra.mxu0 %v2457
        %2486 = vmatprep.subr.mxu0 0.0
        %2487 = vmatpush1.msra.mxu0 %v2458
        %2488 = vmatprep.subr.mxu0 0.0
        %2489 = vmatpush1.msra.mxu0 %v2459
        %2490 = vmatprep.subr.mxu0 0.0
        %2491 = vmatpush1.msra.mxu0 %v2460
        %2492 = vmatprep.subr.mxu0 0.0
        %2493 = vmatpush1.msra.mxu0 %v2461
        %2494 = vmatprep.subr.mxu0 0.0
        %2495 = vmatpush1.msra.mxu0 0.0
        %2496 = vmatprep.subr.mxu0 0.0
        %2497 = vmatpush1.msra.mxu0 0.0
        %2498 = vmatprep.subr.mxu0 0.0
        %2499 = vmatpush1.msra.mxu0 0.0
        %2500 = vmatprep.subr.mxu0 0.0
        %2501 = vmatpush1.msra.mxu0 0.0
        %2502 = vmatprep.subr.mxu0 0.0
        %2503 = vmatpush1.msra.mxu0 0.0
        %2504 = vmatprep.subr.mxu0 0.0
        %2505 = vmatpush1.msra.mxu0 0.0
        %2506 = vmatprep.subr.mxu0 0.0
        %2507 = vmatpush1.msra.mxu0 0.0
        %2508 = vmatprep.subr.mxu0 0.0
        %2509 = vmatpush1.msra.mxu0 0.0
        %2510 = vmatprep.subr.mxu0 0.0
        %2511 = vmatpush1.msra.mxu0 0.0
        %2512 = vmatprep.subr.mxu0 0.0
        %2513 = vmatpush1.msra.mxu0 0.0
        %2514 = vmatprep.subr.mxu0 0.0
        %2515 = vmatpush1.msra.mxu0 0.0
        %2516 = vmatprep.subr.mxu0 0.0
        %2517 = vmatpush1.msra.mxu0 0.0
        %2518 = vmatprep.subr.mxu0 0.0
        %2519 = vmatpush1.msra.mxu0 0.0
        %2520 = vmatprep.subr.mxu0 0.0
        %2521 = vmatpush1.msra.mxu0 0.0
        %2522 = vmatprep.subr.mxu0 0.0
        %2523 = vmatpush1.msra.mxu0 0.0
        %2524 = vmatprep.subr.mxu0 0.0
        %2525 = vmatpush1.msra.mxu0 0.0
        %2526 = vmatprep.mubr.f32.mxu0 0.0
        %2527 = vmatmul.mubr.f32.gmra.mrb[0].mxu0 %v2444
        %v2528 = vpop.f32.mrb[0].mxu0
        %v2529 = vadd.f32 0.0, %v2528
        %v2530 = vpop.f32.mrb[0].mxu0
        %2531 = vdwg.mxu0
        %v2532 = vld [vmem:[%s3 + $0x7] sm:$0x1]
        %v2533 = vlaneseq
        %v2534 = vshrl.u32 %v2533, 7
        %v2535 = vsub.s32 0, %v2534
        %v2536 = vrot.slane %v2532, %v2535
        %v2537 = vmul.f32 %v2529, %v2536
        %v2538 = vld [vmem:[%s3 + $0x8] sm:$0x1]
        %v2539 = vlaneseq
        %v2540 = vshrl.u32 %v2539, 7
        %v2541 = vsub.s32 0, %v2540
        %v2542 = vrot.slane %v2538, %v2541
        %v2543 = vadd.f32 %v2537, %v2542
        %v2544 = vld [vmem:[%s3 + $0x9] sm:$0x1]
        %vm2545 = vcmp.ge.f32.partialorder %v2543, 0.0
        %v2546 = vlaneseq
        %v2547 = vshrl.u32 %v2546, 7
        %v2548 = vsub.s32 0, %v2547
        %v2549 = vrot.slane %v2544, %v2548
        %v2550 = vmul.f32 %v2549, %v2543
        %v2551 = vsel %vm2545, %v2543, %v2550
        %s2552 = scalar_lea.vmem [#allocation2], 512
        %v2553 = vld [vmem:[%s2552] sm:$0xff]
        %v2554 = vld [vmem:[%s2552 + $0x8] sm:$0xff]
        %v2555 = vld [vmem:[%s2552 + $0x10] sm:$0xff]
        %v2556 = vld [vmem:[%s2552 + $0x18] sm:$0xff]
        %v2557 = vld [vmem:[%s2552 + $0x20] sm:$0xff]
        %v2558 = vld [vmem:[%s2552 + $0x28] sm:$0xff]
        %v2559 = vld [vmem:[%s2552 + $0x30] sm:$0xff]
        %v2560 = vld [vmem:[%s2552 + $0x38] sm:$0xff]
        %v2561 = vld [vmem:[%s2552 + $0x40] sm:$0xff]
        %v2562 = vld [vmem:[%s2552 + $0x48] sm:$0xff]
        %v2563 = vld [vmem:[%s2552 + $0x50] sm:$0xff]
        %v2564 = vld [vmem:[%s2552 + $0x58] sm:$0xff]
        %v2565 = vld [vmem:[%s2552 + $0x60] sm:$0xff]
        %v2566 = vld [vmem:[%s2552 + $0x68] sm:$0xff]
        %v2567 = vld [vmem:[%s2552 + $0x70] sm:$0xff]
        %v2568 = vld [vmem:[%s2552 + $0x78] sm:$0xff]
        %2569 = vmatprep.subr.mxu0 0.0
        %2570 = vmatpush1.msra.mxu0 %v2553
        %2571 = vmatprep.subr.mxu0 0.0
        %2572 = vmatpush1.msra.mxu0 %v2554
        %2573 = vmatprep.subr.mxu0 0.0
        %2574 = vmatpush1.msra.mxu0 %v2555
        %2575 = vmatprep.subr.mxu0 0.0
        %2576 = vmatpush1.msra.mxu0 %v2556
        %2577 = vmatprep.subr.mxu0 0.0
        %2578 = vmatpush1.msra.mxu0 %v2557
        %2579 = vmatprep.subr.mxu0 0.0
        %2580 = vmatpush1.msra.mxu0 %v2558
        %2581 = vmatprep.subr.mxu0 0.0
        %2582 = vmatpush1.msra.mxu0 %v2559
        %2583 = vmatprep.subr.mxu0 0.0
        %2584 = vmatpush1.msra.mxu0 %v2560
        %2585 = vmatprep.subr.mxu0 0.0
        %2586 = vmatpush1.msra.mxu0 %v2561
        %2587 = vmatprep.subr.mxu0 0.0
        %2588 = vmatpush1.msra.mxu0 %v2562
        %2589 = vmatprep.subr.mxu0 0.0
        %2590 = vmatpush1.msra.mxu0 %v2563
        %2591 = vmatprep.subr.mxu0 0.0
        %2592 = vmatpush1.msra.mxu0 %v2564
        %2593 = vmatprep.subr.mxu0 0.0
        %2594 = vmatpush1.msra.mxu0 %v2565
        %2595 = vmatprep.subr.mxu0 0.0
        %2596 = vmatpush1.msra.mxu0 %v2566
        %2597 = vmatprep.subr.mxu0 0.0
        %2598 = vmatpush1.msra.mxu0 %v2567
        %2599 = vmatprep.subr.mxu0 0.0
        %2600 = vmatpush1.msra.mxu0 %v2568
        %2601 = vmatprep.subr.mxu0 0.0
        %2602 = vmatpush1.msra.mxu0 0.0
        %2603 = vmatprep.subr.mxu0 0.0
        %2604 = vmatpush1.msra.mxu0 0.0
        %2605 = vmatprep.subr.mxu0 0.0
        %2606 = vmatpush1.msra.mxu0 0.0
        %2607 = vmatprep.subr.mxu0 0.0
        %2608 = vmatpush1.msra.mxu0 0.0
        %2609 = vmatprep.subr.mxu0 0.0
        %2610 = vmatpush1.msra.mxu0 0.0
        %2611 = vmatprep.subr.mxu0 0.0
        %2612 = vmatpush1.msra.mxu0 0.0
        %2613 = vmatprep.subr.mxu0 0.0
        %2614 = vmatpush1.msra.mxu0 0.0
        %2615 = vmatprep.subr.mxu0 0.0
        %2616 = vmatpush1.msra.mxu0 0.0
        %2617 = vmatprep.subr.mxu0 0.0
        %2618 = vmatpush1.msra.mxu0 0.0
        %2619 = vmatprep.subr.mxu0 0.0
        %2620 = vmatpush1.msra.mxu0 0.0
        %2621 = vmatprep.subr.mxu0 0.0
        %2622 = vmatpush1.msra.mxu0 0.0
        %2623 = vmatprep.subr.mxu0 0.0
        %2624 = vmatpush1.msra.mxu0 0.0
        %2625 = vmatprep.subr.mxu0 0.0
        %2626 = vmatpush1.msra.mxu0 0.0
        %2627 = vmatprep.subr.mxu0 0.0
        %2628 = vmatpush1.msra.mxu0 0.0
        %2629 = vmatprep.subr.mxu0 0.0
        %2630 = vmatpush1.msra.mxu0 0.0
        %2631 = vmatprep.subr.mxu0 0.0
        %2632 = vmatpush1.msra.mxu0 0.0
        %2633 = vmatprep.mubr.f32.mxu0 0.0
        %2634 = vmatmul.mubr.f32.gmra.mrb[0].mxu0 %v2551
        %v2635 = vpop.f32.mrb[0].mxu0
        %v2636 = vadd.f32 0.0, %v2635
        %v2637 = vpop.f32.mrb[0].mxu0
        %2638 = vdwg.mxu0
        %v2639 = vld [vmem:[%s3 + $0xa] sm:$0x1]
        %v2640 = vlaneseq
        %v2641 = vshrl.u32 %v2640, 7
        %v2642 = vsub.s32 0, %v2641
        %v2643 = vrot.slane %v2639, %v2642
        %v2644 = vmul.f32 %v2636, %v2643
        %v2645 = vld [vmem:[%s3 + $0xb] sm:$0x1]
        %v2646 = vlaneseq
        %v2647 = vshrl.u32 %v2646, 7
        %v2648 = vsub.s32 0, %v2647
        %v2649 = vrot.slane %v2645, %v2648
        %v2650 = vadd.f32 %v2644, %v2649
        %v2651 = vld [vmem:[%s3 + $0xc] sm:$0x1]
        %vm2652 = vcmp.ge.f32.partialorder %v2650, 0.0
        %v2653 = vlaneseq
        %v2654 = vshrl.u32 %v2653, 7
        %v2655 = vsub.s32 0, %v2654
        %v2656 = vrot.slane %v2651, %v2655
        %v2657 = vmul.f32 %v2656, %v2650
        %v2658 = vsel %vm2652, %v2650, %v2657
        %s2659 = scalar_lea.vmem [#allocation2], 640
        %v2660 = vld [vmem:[%s2659] sm:$0xff]
        %v2661 = vld [vmem:[%s2659 + $0x8] sm:$0xff]
        %v2662 = vld [vmem:[%s2659 + $0x10] sm:$0xff]
        %v2663 = vld [vmem:[%s2659 + $0x18] sm:$0xff]
        %v2664 = vld [vmem:[%s2659 + $0x20] sm:$0xff]
        %v2665 = vld [vmem:[%s2659 + $0x28] sm:$0xff]
        %v2666 = vld [vmem:[%s2659 + $0x30] sm:$0xff]
        %v2667 = vld [vmem:[%s2659 + $0x38] sm:$0xff]
        %v2668 = vld [vmem:[%s2659 + $0x40] sm:$0xff]
        %v2669 = vld [vmem:[%s2659 + $0x48] sm:$0xff]
        %v2670 = vld [vmem:[%s2659 + $0x50] sm:$0xff]
        %v2671 = vld [vmem:[%s2659 + $0x58] sm:$0xff]
        %v2672 = vld [vmem:[%s2659 + $0x60] sm:$0xff]
        %v2673 = vld [vmem:[%s2659 + $0x68] sm:$0xff]
        %v2674 = vld [vmem:[%s2659 + $0x70] sm:$0xff]
        %v2675 = vld [vmem:[%s2659 + $0x78] sm:$0xff]
        %2676 = vmatprep.subr.mxu0 0.0
        %2677 = vmatpush1.msra.mxu0 %v2660
        %2678 = vmatprep.subr.mxu0 0.0
        %2679 = vmatpush1.msra.mxu0 %v2661
        %2680 = vmatprep.subr.mxu0 0.0
        %2681 = vmatpush1.msra.mxu0 %v2662
        %2682 = vmatprep.subr.mxu0 0.0
        %2683 = vmatpush1.msra.mxu0 %v2663
        %2684 = vmatprep.subr.mxu0 0.0
        %2685 = vmatpush1.msra.mxu0 %v2664
        %2686 = vmatprep.subr.mxu0 0.0
        %2687 = vmatpush1.msra.mxu0 %v2665
        %2688 = vmatprep.subr.mxu0 0.0
        %2689 = vmatpush1.msra.mxu0 %v2666
        %2690 = vmatprep.subr.mxu0 0.0
        %2691 = vmatpush1.msra.mxu0 %v2667
        %2692 = vmatprep.subr.mxu0 0.0
        %2693 = vmatpush1.msra.mxu0 %v2668
        %2694 = vmatprep.subr.mxu0 0.0
        %2695 = vmatpush1.msra.mxu0 %v2669
        %2696 = vmatprep.subr.mxu0 0.0
        %2697 = vmatpush1.msra.mxu0 %v2670
        %2698 = vmatprep.subr.mxu0 0.0
        %2699 = vmatpush1.msra.mxu0 %v2671
        %2700 = vmatprep.subr.mxu0 0.0
        %2701 = vmatpush1.msra.mxu0 %v2672
        %2702 = vmatprep.subr.mxu0 0.0
        %2703 = vmatpush1.msra.mxu0 %v2673
        %2704 = vmatprep.subr.mxu0 0.0
        %2705 = vmatpush1.msra.mxu0 %v2674
        %2706 = vmatprep.subr.mxu0 0.0
        %2707 = vmatpush1.msra.mxu0 %v2675
        %2708 = vmatprep.subr.mxu0 0.0
        %2709 = vmatpush1.msra.mxu0 0.0
        %2710 = vmatprep.subr.mxu0 0.0
        %2711 = vmatpush1.msra.mxu0 0.0
        %2712 = vmatprep.subr.mxu0 0.0
        %2713 = vmatpush1.msra.mxu0 0.0
        %2714 = vmatprep.subr.mxu0 0.0
        %2715 = vmatpush1.msra.mxu0 0.0
        %2716 = vmatprep.subr.mxu0 0.0
        %2717 = vmatpush1.msra.mxu0 0.0
        %2718 = vmatprep.subr.mxu0 0.0
        %2719 = vmatpush1.msra.mxu0 0.0
        %2720 = vmatprep.subr.mxu0 0.0
        %2721 = vmatpush1.msra.mxu0 0.0
        %2722 = vmatprep.subr.mxu0 0.0
        %2723 = vmatpush1.msra.mxu0 0.0
        %2724 = vmatprep.subr.mxu0 0.0
        %2725 = vmatpush1.msra.mxu0 0.0
        %2726 = vmatprep.subr.mxu0 0.0
        %2727 = vmatpush1.msra.mxu0 0.0
        %2728 = vmatprep.subr.mxu0 0.0
        %2729 = vmatpush1.msra.mxu0 0.0
        %2730 = vmatprep.subr.mxu0 0.0
        %2731 = vmatpush1.msra.mxu0 0.0
        %2732 = vmatprep.subr.mxu0 0.0
        %2733 = vmatpush1.msra.mxu0 0.0
        %2734 = vmatprep.subr.mxu0 0.0
        %2735 = vmatpush1.msra.mxu0 0.0
        %2736 = vmatprep.subr.mxu0 0.0
        %2737 = vmatpush1.msra.mxu0 0.0
        %2738 = vmatprep.subr.mxu0 0.0
        %2739 = vmatpush1.msra.mxu0 0.0
        %2740 = vmatprep.mubr.f32.mxu0 0.0
        %2741 = vmatmul.mubr.f32.gmra.mrb[0].mxu0 %v2658
        %v2742 = vpop.f32.mrb[0].mxu0
        %v2743 = vadd.f32 0.0, %v2742
        %v2744 = vpop.f32.mrb[0].mxu0
        %2745 = vdwg.mxu0
        %v2746 = vld [vmem:[%s3 + $0xd] sm:$0x1]
        %v2747 = vlaneseq
        %v2748 = vshrl.u32 %v2747, 7
        %v2749 = vsub.s32 0, %v2748
        %v2750 = vrot.slane %v2746, %v2749
        %v2751 = vmul.f32 %v2743, %v2750
        %v2752 = vld [vmem:[%s3 + $0xe] sm:$0x1]
        %v2753 = vlaneseq
        %v2754 = vshrl.u32 %v2753, 7
        %v2755 = vsub.s32 0, %v2754
        %v2756 = vrot.slane %v2752, %v2755
        %v2757 = vadd.f32 %v2751, %v2756
        %v2758 = vld [vmem:[%s3 + $0xf] sm:$0x1]
        %vm2759 = vcmp.ge.f32.partialorder %v2757, 0.0
        %v2760 = vlaneseq
        %v2761 = vshrl.u32 %v2760, 7
        %v2762 = vsub.s32 0, %v2761
        %v2763 = vrot.slane %v2758, %v2762
        %v2764 = vmul.f32 %v2763, %v2757
        %v2765 = vsel %vm2759, %v2757, %v2764
        %s2766 = scalar_lea.vmem [#allocation2], 768
        %v2767 = vld [vmem:[%s2766] sm:$0xff]
        %v2768 = vld [vmem:[%s2766 + $0x8] sm:$0xff]
        %v2769 = vld [vmem:[%s2766 + $0x10] sm:$0xff]
        %v2770 = vld [vmem:[%s2766 + $0x18] sm:$0xff]
        %v2771 = vld [vmem:[%s2766 + $0x20] sm:$0xff]
        %v2772 = vld [vmem:[%s2766 + $0x28] sm:$0xff]
        %v2773 = vld [vmem:[%s2766 + $0x30] sm:$0xff]
        %v2774 = vld [vmem:[%s2766 + $0x38] sm:$0xff]
        %v2775 = vld [vmem:[%s2766 + $0x40] sm:$0xff]
        %v2776 = vld [vmem:[%s2766 + $0x48] sm:$0xff]
        %v2777 = vld [vmem:[%s2766 + $0x50] sm:$0xff]
        %v2778 = vld [vmem:[%s2766 + $0x58] sm:$0xff]
        %v2779 = vld [vmem:[%s2766 + $0x60] sm:$0xff]
        %v2780 = vld [vmem:[%s2766 + $0x68] sm:$0xff]
        %v2781 = vld [vmem:[%s2766 + $0x70] sm:$0xff]
        %v2782 = vld [vmem:[%s2766 + $0x78] sm:$0xff]
        %2783 = vmatprep.subr.mxu0 0.0
        %2784 = vmatpush1.msra.mxu0 %v2767
        %2785 = vmatprep.subr.mxu0 0.0
        %2786 = vmatpush1.msra.mxu0 %v2768
        %2787 = vmatprep.subr.mxu0 0.0
        %2788 = vmatpush1.msra.mxu0 %v2769
        %2789 = vmatprep.subr.mxu0 0.0
        %2790 = vmatpush1.msra.mxu0 %v2770
        %2791 = vmatprep.subr.mxu0 0.0
        %2792 = vmatpush1.msra.mxu0 %v2771
        %2793 = vmatprep.subr.mxu0 0.0
        %2794 = vmatpush1.msra.mxu0 %v2772
        %2795 = vmatprep.subr.mxu0 0.0
        %2796 = vmatpush1.msra.mxu0 %v2773
        %2797 = vmatprep.subr.mxu0 0.0
        %2798 = vmatpush1.msra.mxu0 %v2774
        %2799 = vmatprep.subr.mxu0 0.0
        %2800 = vmatpush1.msra.mxu0 %v2775
        %2801 = vmatprep.subr.mxu0 0.0
        %2802 = vmatpush1.msra.mxu0 %v2776
        %2803 = vmatprep.subr.mxu0 0.0
        %2804 = vmatpush1.msra.mxu0 %v2777
        %2805 = vmatprep.subr.mxu0 0.0
        %2806 = vmatpush1.msra.mxu0 %v2778
        %2807 = vmatprep.subr.mxu0 0.0
        %2808 = vmatpush1.msra.mxu0 %v2779
        %2809 = vmatprep.subr.mxu0 0.0
        %2810 = vmatpush1.msra.mxu0 %v2780
        %2811 = vmatprep.subr.mxu0 0.0
        %2812 = vmatpush1.msra.mxu0 %v2781
        %2813 = vmatprep.subr.mxu0 0.0
        %2814 = vmatpush1.msra.mxu0 %v2782
        %2815 = vmatprep.subr.mxu0 0.0
        %2816 = vmatpush1.msra.mxu0 0.0
        %2817 = vmatprep.subr.mxu0 0.0
        %2818 = vmatpush1.msra.mxu0 0.0
        %2819 = vmatprep.subr.mxu0 0.0
        %2820 = vmatpush1.msra.mxu0 0.0
        %2821 = vmatprep.subr.mxu0 0.0
        %2822 = vmatpush1.msra.mxu0 0.0
        %2823 = vmatprep.subr.mxu0 0.0
        %2824 = vmatpush1.msra.mxu0 0.0
        %2825 = vmatprep.subr.mxu0 0.0
        %2826 = vmatpush1.msra.mxu0 0.0
        %2827 = vmatprep.subr.mxu0 0.0
        %2828 = vmatpush1.msra.mxu0 0.0
        %2829 = vmatprep.subr.mxu0 0.0
        %2830 = vmatpush1.msra.mxu0 0.0
        %2831 = vmatprep.subr.mxu0 0.0
        %2832 = vmatpush1.msra.mxu0 0.0
        %2833 = vmatprep.subr.mxu0 0.0
        %2834 = vmatpush1.msra.mxu0 0.0
        %2835 = vmatprep.subr.mxu0 0.0
        %2836 = vmatpush1.msra.mxu0 0.0
        %2837 = vmatprep.subr.mxu0 0.0
        %2838 = vmatpush1.msra.mxu0 0.0
        %2839 = vmatprep.subr.mxu0 0.0
        %2840 = vmatpush1.msra.mxu0 0.0
        %2841 = vmatprep.subr.mxu0 0.0
        %2842 = vmatpush1.msra.mxu0 0.0
        %2843 = vmatprep.subr.mxu0 0.0
        %2844 = vmatpush1.msra.mxu0 0.0
        %2845 = vmatprep.subr.mxu0 0.0
        %2846 = vmatpush1.msra.mxu0 0.0
        %2847 = vmatprep.mubr.f32.mxu0 0.0
        %2848 = vmatmul.mubr.f32.gmra.mrb[0].mxu0 %v2765
        %v2849 = vpop.f32.mrb[0].mxu0
        %v2850 = vadd.f32 0.0, %v2849
        %v2851 = vpop.f32.mrb[0].mxu0
        %2852 = vdwg.mxu0
        %v2853 = vld [vmem:[%s3 + $0x10] sm:$0x1]
        %v2854 = vlaneseq
        %v2855 = vshrl.u32 %v2854, 7
        %v2856 = vsub.s32 0, %v2855
        %v2857 = vrot.slane %v2853, %v2856
        %v2858 = vmul.f32 %v2850, %v2857
        %v2859 = vld [vmem:[%s3 + $0x11] sm:$0x1]
        %v2860 = vlaneseq
        %v2861 = vshrl.u32 %v2860, 7
        %v2862 = vsub.s32 0, %v2861
        %v2863 = vrot.slane %v2859, %v2862
        %v2864 = vadd.f32 %v2858, %v2863
        %v2865 = vld [vmem:[%s3 + $0x12] sm:$0x1]
        %vm2866 = vcmp.ge.f32.partialorder %v2864, 0.0
        %v2867 = vlaneseq
        %v2868 = vshrl.u32 %v2867, 7
        %v2869 = vsub.s32 0, %v2868
        %v2870 = vrot.slane %v2865, %v2869
        %v2871 = vmul.f32 %v2870, %v2864
        %v2872 = vsel %vm2866, %v2864, %v2871
        %s2873 = scalar_lea.vmem [#allocation2], 896
        %v2874 = vld [vmem:[%s2873] sm:$0xff]
        %v2875 = vld [vmem:[%s2873 + $0x8] sm:$0xff]
        %v2876 = vld [vmem:[%s2873 + $0x10] sm:$0xff]
        %v2877 = vld [vmem:[%s2873 + $0x18] sm:$0xff]
        %v2878 = vld [vmem:[%s2873 + $0x20] sm:$0xff]
        %v2879 = vld [vmem:[%s2873 + $0x28] sm:$0xff]
        %v2880 = vld [vmem:[%s2873 + $0x30] sm:$0xff]
        %v2881 = vld [vmem:[%s2873 + $0x38] sm:$0xff]
        %v2882 = vld [vmem:[%s2873 + $0x40] sm:$0xff]
        %v2883 = vld [vmem:[%s2873 + $0x48] sm:$0xff]
        %v2884 = vld [vmem:[%s2873 + $0x50] sm:$0xff]
        %v2885 = vld [vmem:[%s2873 + $0x58] sm:$0xff]
        %v2886 = vld [vmem:[%s2873 + $0x60] sm:$0xff]
        %v2887 = vld [vmem:[%s2873 + $0x68] sm:$0xff]
        %v2888 = vld [vmem:[%s2873 + $0x70] sm:$0xff]
        %v2889 = vld [vmem:[%s2873 + $0x78] sm:$0xff]
        %v2890 = vld [vmem:[%s3 + $0x13] sm:$0x1]
        %v2891 = vlaneseq
        %v2892 = vshrl.u32 %v2891, 7
        %v2893 = vsub.s32 0, %v2892
        %v2894 = vrot.slane %v2890, %v2893
        %2895 = vmatprep.subr.mxu0 0.0
        %2896 = vmatpush1.msra.mxu0 %v2874
        %2897 = vmatprep.subr.mxu0 0.0
        %2898 = vmatpush1.msra.mxu0 %v2875
        %2899 = vmatprep.subr.mxu0 0.0
        %2900 = vmatpush1.msra.mxu0 %v2876
        %2901 = vmatprep.subr.mxu0 0.0
        %2902 = vmatpush1.msra.mxu0 %v2877
        %2903 = vmatprep.subr.mxu0 0.0
        %2904 = vmatpush1.msra.mxu0 %v2878
        %2905 = vmatprep.subr.mxu0 0.0
        %2906 = vmatpush1.msra.mxu0 %v2879
        %2907 = vmatprep.subr.mxu0 0.0
        %2908 = vmatpush1.msra.mxu0 %v2880
        %2909 = vmatprep.subr.mxu0 0.0
        %2910 = vmatpush1.msra.mxu0 %v2881
        %2911 = vmatprep.subr.mxu0 0.0
        %2912 = vmatpush1.msra.mxu0 %v2882
        %2913 = vmatprep.subr.mxu0 0.0
        %2914 = vmatpush1.msra.mxu0 %v2883
        %2915 = vmatprep.subr.mxu0 0.0
        %2916 = vmatpush1.msra.mxu0 %v2884
        %2917 = vmatprep.subr.mxu0 0.0
        %2918 = vmatpush1.msra.mxu0 %v2885
        %2919 = vmatprep.subr.mxu0 0.0
        %2920 = vmatpush1.msra.mxu0 %v2886
        %2921 = vmatprep.subr.mxu0 0.0
        %2922 = vmatpush1.msra.mxu0 %v2887
        %2923 = vmatprep.subr.mxu0 0.0
        %2924 = vmatpush1.msra.mxu0 %v2888
        %2925 = vmatprep.subr.mxu0 0.0
        %2926 = vmatpush1.msra.mxu0 %v2889
        %2927 = vmatprep.subr.mxu0 0.0
        %2928 = vmatpush1.msra.mxu0 0.0
        %2929 = vmatprep.subr.mxu0 0.0
        %2930 = vmatpush1.msra.mxu0 0.0
        %2931 = vmatprep.subr.mxu0 0.0
        %2932 = vmatpush1.msra.mxu0 0.0
        %2933 = vmatprep.subr.mxu0 0.0
        %2934 = vmatpush1.msra.mxu0 0.0
        %2935 = vmatprep.subr.mxu0 0.0
        %2936 = vmatpush1.msra.mxu0 0.0
        %2937 = vmatprep.subr.mxu0 0.0
        %2938 = vmatpush1.msra.mxu0 0.0
        %2939 = vmatprep.subr.mxu0 0.0
        %2940 = vmatpush1.msra.mxu0 0.0
        %2941 = vmatprep.subr.mxu0 0.0
        %2942 = vmatpush1.msra.mxu0 0.0
        %2943 = vmatprep.subr.mxu0 0.0
        %2944 = vmatpush1.msra.mxu0 0.0
        %2945 = vmatprep.subr.mxu0 0.0
        %2946 = vmatpush1.msra.mxu0 0.0
        %2947 = vmatprep.subr.mxu0 0.0
        %2948 = vmatpush1.msra.mxu0 0.0
        %2949 = vmatprep.subr.mxu0 0.0
        %2950 = vmatpush1.msra.mxu0 0.0
        %2951 = vmatprep.subr.mxu0 0.0
        %2952 = vmatpush1.msra.mxu0 0.0
        %2953 = vmatprep.subr.mxu0 0.0
        %2954 = vmatpush1.msra.mxu0 0.0
        %2955 = vmatprep.subr.mxu0 0.0
        %2956 = vmatpush1.msra.mxu0 0.0
        %2957 = vmatprep.subr.mxu0 0.0
        %2958 = vmatpush1.msra.mxu0 0.0
        %2959 = vmatprep.mubr.f32.mxu0 0.0
        %2960 = vmatmul.mubr.f32.gmra.mrb[0].mxu0 %v2872
        %v2961 = vpop.f32.mrb[0].mxu0
        %v2962 = vadd.f32 %v2894, %v2961
        %v2963 = vpop.f32.mrb[0].mxu0
        %2964 = vdwg.mxu0
        %2965 = vst [vmem:[%s219] sm:$0xff] %v2962
        %s2966 = sand.u32 %s121, 1
        %s2967 = scalar_lea.sflag [#allocation4], %s2966
        %s2968 = sand.u32 %s121, 1
        %s2969 = smul.addr %s2968, 8
        %s2970 = scalar_lea.vmem [#allocation5], %s2969
        // Predicated region
        $region41: #{tpu_custom_call.1} parent=35 // pred_check
          %p2971 = pneg %p131
        $region42: #{tpu_custom_call.1} parent=35 // pred_check_branch
          %2973 = sbr.rel (%p2971) target = $region44
        $region43: #{tpu_custom_call.1} parent=35 // pred_region
          %s2975 = ssub.s32 128, 128
          %2976 = vsyncadd %s2967, %s2975
          %s2977 = smul.addr %s19, 128
          %s2978 = scalar_lea.hbm %s4, %s2977
          %s2980 = sshll.u32 %s2970, 4
          %s2981 = int_to_ptr.vmem [resolvable:$true] %s2980
          %2983 = dma.vmem_to_hbm [thread:$0]  %s2981, 128, %s2978, %s2967
        $region44: #{tpu_custom_call.1} parent=35 // pred_fallthru
          _
      $region36: #{tpu_custom_call.1} parent=5 // pred_fallthru
        _
      %p2984 = scmp.le.s32.totalorder 2, %s14
      // Predicated region
      $region45: #{tpu_custom_call.1} parent=5 // pred_check
        %p2985 = pneg %p2984
      $region46: #{tpu_custom_call.1} parent=5 // pred_check_branch
        %2987 = sbr.rel (%p2985) target = $region48
      $region47: #{tpu_custom_call.1} parent=5 // pred_region
        %s2988 = ssub.s32 %s14, 2
        // Predicated region
        $region49: #{tpu_custom_call.1} parent=47 // pred_check
          %p2989 = pneg %p137
        $region50: #{tpu_custom_call.1} parent=47 // pred_check_branch
          %2991 = sbr.rel (%p2989) target = $region52
        $region51: #{tpu_custom_call.1} parent=47 // pred_region
          %s2992 = sand.u32 %s122, 1
          %s2993 = scalar_lea.sflag [#allocation4], %s2992
          %s2994 = sand.u32 %s122, 1
          %s2995 = smul.addr %s2994, 8
          %s2996 = scalar_lea.vmem [#allocation5], %s2995
          %2997 = dma.done %s2993, 128
        $region52: #{tpu_custom_call.1} parent=47 // pred_fallthru
          _
      $region48: #{tpu_custom_call.1} parent=5 // pred_fallthru
        _
    $region6: #{tpu_custom_call.1} parent=1 // loop_footer
      %s18 = sadd.s32 1, %s14
    $region7: #{tpu_custom_call.1} parent=1 // loop_footer_branch
      %13 = sbr.rel target = $region3
    $region8: #{tpu_custom_call.1} parent=1 // loop_exit
      _
    %2998 = vsyncpa [#allocation3], 1
    %s2999 = scalar_lea.sflag [#allocation3], 1
    %3000 = vsyncpa %s2999, 1
    %3001 = vsyncpa [#allocation4], 1
    %s3002 = scalar_lea.sflag [#allocation4], 1
    %3003 = vsyncpa %s3002, 1

</llo_original>
